<compile_context>
chip_gen: v5e
topology: v5e:2x2
jax: 0.10.0
libtpu: 0.0.40
codegen_flags: <defaults>
</compile_context>

<pallas_src>
import functools

import numpy as np

import jax
import jax.numpy as jnp
from jax import lax
from jax.experimental import pallas as pl
from jax.experimental.pallas import tpu as pltpu


# ----------------------------------------------------------------------------
# Pallas kernels
# ----------------------------------------------------------------------------
def _in_relu_kernel(x_ref, o_ref):
    """InstanceNorm2d (affine=False, eps=1e-5) + ReLU, one image per grid step.

    x_ref: (1, C, HW) f32;  o_ref: (1, C, HW).
    """
    y = x_ref[0].astype(jnp.float32)
    mean = jnp.mean(y, axis=-1, keepdims=True)
    var = jnp.mean(y * y, axis=-1, keepdims=True) - mean * mean
    o_ref[0] = jnp.maximum((y - mean) * lax.rsqrt(var + 1e-5),
                           0.0).astype(o_ref.dtype)


def _convT_in_relu_kernel(*refs, cout, phases, inv_count, masked):
    """Phase-decomposed ConvTranspose2d + InstanceNorm2d + ReLU (one image/step).

    refs (masked=False): pt_ref (1, K, HWp) bf16, bt_ref (P*Cout, K) bf16,
                         o_ref (1, P*Cout, HWp)
    refs (masked=True) : ... plus m_ref (P*Cout, HWp) f32 validity mask before
                         o_ref (used when phases have unequal valid columns).

    Rows of the matmul result are phase-major (row = phase*Cout + co), so the
    per-channel InstanceNorm statistics are lane sums followed by a sum over
    the `phases` contiguous sublane groups.  Variance is the single-pass
    E[y^2] - mean^2 form, all in f32.
    """
    if masked:
        pt_ref, bt_ref, m_ref, o_ref = refs
    else:
        pt_ref, bt_ref, o_ref = refs
    y = jnp.dot(bt_ref[...], pt_ref[0], preferred_element_type=jnp.float32)
    ym = y * m_ref[...] if masked else y
    s1 = jnp.sum(ym, axis=-1, keepdims=True)        # (P*Cout, 1)
    s2 = jnp.sum(ym * ym, axis=-1, keepdims=True)   # (P*Cout, 1)
    cs1 = s1[0:cout]
    cs2 = s2[0:cout]
    for r in range(1, phases):
        cs1 = cs1 + s1[r * cout:(r + 1) * cout]
        cs2 = cs2 + s2[r * cout:(r + 1) * cout]
    mean = cs1 * inv_count
    var = cs2 * inv_count - mean * mean
    rstd = lax.rsqrt(var + 1e-5)
    if phases > 1:
        mean = jnp.concatenate([mean] * phases, axis=0)
        rstd = jnp.concatenate([rstd] * phases, axis=0)
    o_ref[0] = jnp.maximum((y - mean) * rstd, 0.0).astype(o_ref.dtype)


def _convT_tanh_kernel(pt_ref, bt_ref, o_ref):
    """Phase-decomposed final ConvTranspose2d + Tanh (one image per grid step)."""
    y = jnp.dot(bt_ref[...], pt_ref[0], preferred_element_type=jnp.float32)
    o_ref[0] = jnp.tanh(y).astype(o_ref.dtype)


# ----------------------------------------------------------------------------
# Stride-phase (sub-pixel) decomposition glue
# ----------------------------------------------------------------------------
def _phase_axis(size_in, ksize, stride, pad):
    """Per-axis stride-phase decomposition of a transposed convolution.

    Output position o = stride*m + r (residue r) receives
        y[o] = sum_j x[q0_r + m - j] * w[phi_r + stride*j].
    Over the common relative offset delta = q0_r - j every phase becomes a
    stride-1 correlation with effective kernel size (d_hi - d_lo + 1) and no
    dilation zeros.
    """
    size_out = (size_in - 1) * stride - 2 * pad + ksize
    info = []
    for r in range(stride):
        phi = (r + pad) % stride
        q0 = (r + pad) // stride
        n_taps = len(range(phi, ksize, stride))
        n_out = len(range(r, size_out, stride))
        info.append((phi, q0, n_taps, n_out))
    d_lo = min(q0 - (t - 1) for (_, q0, t, _) in info if t > 0)
    d_hi = max(q0 for (_, q0, t, _) in info if t > 0)
    n_max = max(n for (_, _, _, n) in info)
    pad_lo = max(0, -d_lo)
    pad_hi = max(0, (n_max - 1) + d_hi - (size_in - 1))
    return size_out, info, d_lo, d_hi, n_max, pad_lo, pad_hi


def conv_transpose_phase(x, w, stride, pad, *, norm_relu,
                         compute_dtype=jnp.bfloat16):
    """ConvTranspose2d(bias=False) (+ InstanceNorm2d + ReLU | + Tanh), NCHW.

    x: (N, Cin, Hi, Wi);  w: (Cin, Cout, KH, KW) (PyTorch layout).
    One per-image MXU matmul over the stride-phase decomposition: output rows
    are (phase, Cout), the contraction is (delta_h, delta_w, Cin) with no
    dilation zeros, and lanes are the per-phase spatial positions.
    """
    N, Cin, Hi, Wi = x.shape
    _, Cout, KH, KW = w.shape
    s = stride
    P = s * s

    Ho, info_h, dlo_h, dhi_h, nh, plo_h, phi_h = _phase_axis(Hi, KH, s, pad)
    Wo, info_w, dlo_w, dhi_w, nw, plo_w, phi_w = _phase_axis(Wi, KW, s, pad)
    ke_h = dhi_h - dlo_h + 1
    ke_w = dhi_w - dlo_w + 1
    K = ke_h * ke_w * Cin
    PC = P * Cout
    HWp = nh * nw

    # --- patch matrix (N, K, HWp): (delta_h, delta_w) major / Cin minor -------
    xz = jnp.pad(x.astype(compute_dtype),
                 ((0, 0), (0, 0), (plo_h, phi_h), (plo_w, phi_w)))
    cols = []
    for dh in range(dlo_h, dhi_h + 1):
        for dw in range(dlo_w, dhi_w + 1):
            cols.append(xz[:, :, dh + plo_h: dh + plo_h + nh,
                           dw + plo_w: dw + plo_w + nw])
    pt = jnp.stack(cols, axis=1).reshape(N, K, HWp)

    # --- phase-expanded weights (P*Cout, K), rows (r_h, r_w) major ------------
    # TODO(synk): recomputed every forward; hoist out of the step function.
    wc = w.astype(compute_dtype)
    zero_blk = jnp.zeros((Cout, Cin), compute_dtype)
    row_blocks = []
    for rh in range(s):
        phi_rh, q0_rh, _, _ = info_h[rh]
        for rw in range(s):
            phi_rw, q0_rw, _, _ = info_w[rw]
            col_blocks = []
            for dh in range(dlo_h, dhi_h + 1):
                kh = phi_rh + s * (q0_rh - dh)
                for dw in range(dlo_w, dhi_w + 1):
                    kw = phi_rw + s * (q0_rw - dw)
                    if 0 <= kh < KH and 0 <= kw < KW:
                        col_blocks.append(wc[:, :, kh, kw].T)
                    else:
                        col_blocks.append(zero_blk)
            row_blocks.append(jnp.concatenate(col_blocks, axis=1))
    bm = jnp.concatenate(row_blocks, axis=0)                      # (P*Cout, K)

    # --- validity mask (only when phases have unequal spatial counts) ---------
    n_h = [info_h[r][3] for r in range(s)]
    n_w = [info_w[r][3] for r in range(s)]
    needs_mask = norm_relu and (any(n < nh for n in n_h) or
                                any(n < nw for n in n_w))
    mask = None
    if needs_mask:
        rows = []
        for rh in range(s):
            mh = np.arange(nh) < n_h[rh]
            for rw in range(s):
                mw = np.arange(nw) < n_w[rw]
                m2 = (mh[:, None] & mw[None, :]).reshape(1, HWp)
                rows.append(np.broadcast_to(m2, (Cout, HWp)))
        mask = jnp.asarray(np.concatenate(rows, axis=0).astype(np.float32))

    # --- fused Pallas kernel ---------------------------------------------------
    if norm_relu:
        kernel = functools.partial(
            _convT_in_relu_kernel, cout=Cout, phases=P,
            inv_count=1.0 / float(Ho * Wo), masked=needs_mask)
        out_dtype = jnp.bfloat16
    else:
        kernel = _convT_tanh_kernel
        out_dtype = jnp.float32

    in_specs = [pl.BlockSpec((1, K, HWp), lambda n: (n, 0, 0)),
                pl.BlockSpec((PC, K), lambda n: (0, 0))]
    operands = [pt, bm]
    if needs_mask:
        in_specs.append(pl.BlockSpec((PC, HWp), lambda n: (0, 0)))
        operands.append(mask)

    yp = pl.pallas_call(
        kernel,
        out_shape=jax.ShapeDtypeStruct((N, PC, HWp), out_dtype),
        grid_spec=pltpu.PrefetchScalarGridSpec(
            num_scalar_prefetch=0,
            grid=(N,),
            in_specs=in_specs,
            out_specs=pl.BlockSpec((1, PC, HWp), lambda n: (n, 0, 0)),
        ),
        compiler_params=pltpu.CompilerParams(
            dimension_semantics=("parallel",)),
    )(*operands)

    # --- pixel shuffle: (phase r, position m) -> output position o = s*m + r --
    yp = yp.reshape(N, s, s, Cout, nh, nw)
    yp = yp.transpose(0, 3, 4, 1, 5, 2).reshape(N, Cout, s * nh, s * nw)
    return yp[:, :, :Ho, :Wo]


def first_layer_in_relu(x, w):
    """Layer 1: ConvTranspose2d(K, stride=1, pad=0) on a 1x1 input + IN + ReLU.

    For a 1x1 input this is exactly a matmul over Cin (no patch matrix, no
    zero taps): y[n, co, kh, kw] = sum_ci x[n, ci] * w[ci, co, kh, kw].  The
    tiny matmul is left to XLA; InstanceNorm + ReLU run fused in Pallas.
    """
    N, Cin, Hi, Wi = x.shape
    _, Cout, KH, KW = w.shape
    assert Hi == 1 and Wi == 1, "first layer expects a 1x1 spatial input"
    y = jnp.einsum("nc,cokl->nokl", x[:, :, 0, 0].astype(jnp.float32),
                   w.astype(jnp.float32)).reshape(N, Cout, KH * KW)
    out = pl.pallas_call(
        _in_relu_kernel,
        out_shape=jax.ShapeDtypeStruct((N, Cout, KH * KW), jnp.bfloat16),
        grid_spec=pltpu.PrefetchScalarGridSpec(
            num_scalar_prefetch=0,
            grid=(N,),
            in_specs=[pl.BlockSpec((1, Cout, KH * KW), lambda n: (n, 0, 0))],
            out_specs=pl.BlockSpec((1, Cout, KH * KW), lambda n: (n, 0, 0)),
        ),
        compiler_params=pltpu.CompilerParams(
            dimension_semantics=("parallel",)),
    )(y)
    return out.reshape(N, Cout, KH, KW)


# ----------------------------------------------------------------------------
# netG forward (matches the PyTorch module; all ConvTranspose2d have bias=False)
# ----------------------------------------------------------------------------
def netg_forward(x, params):
    """x: (N, noisy_dim, 1, 1) NCHW -> (N, 3, 150, 150) NCHW (f32)."""
    w1, w2, w3, w4, w5 = params
    h = first_layer_in_relu(x, w1)                                    # 1 -> 4
    h = conv_transpose_phase(h, w2, stride=2, pad=0, norm_relu=True)  # 4 -> 12
    h = conv_transpose_phase(h, w3, stride=2, pad=1, norm_relu=True)  # 12 -> 25
    h = conv_transpose_phase(h, w4, stride=2, pad=1, norm_relu=True)  # 25 -> 50
    return conv_transpose_phase(h, w5, stride=3, pad=1, norm_relu=False)  # -> 150


def init_params(key, noisy_dim, ngf):
    ks = jax.random.split(key, 5)
    scale = 0.05
    shapes = [
        (noisy_dim, ngf * 8, 4, 4),
        (ngf * 8, ngf * 4, 6, 6),
        (ngf * 4, ngf * 2, 5, 5),
        (ngf * 2, ngf, 4, 4),
        (ngf, 3, 5, 5),
    ]
    return tuple(
        jax.random.normal(k, s, dtype=jnp.float32) * scale
        for k, s in zip(ks, shapes)
    )


# ----------------------------------------------------------------------------
# Pure-JAX (XLA) reference of the PyTorch module, for a numerical check.
# ----------------------------------------------------------------------------
def _reference_conv_transpose(x, w, stride, pad):
    kh, kw = w.shape[2], w.shape[3]
    rhs = jnp.flip(w, (2, 3)).transpose(1, 0, 2, 3)        # (Cout, Cin, KH, KW)
    return lax.conv_general_dilated(
        x, rhs, window_strides=(1, 1),
        padding=((kh - 1 - pad, kh - 1 - pad), (kw - 1 - pad, kw - 1 - pad)),
        lhs_dilation=(stride, stride),
        dimension_numbers=("NCHW", "OIHW", "NCHW"))


def _reference_forward(x, params):
    def in_relu(h):
        m = jnp.mean(h, axis=(2, 3), keepdims=True)
        v = jnp.mean(jnp.square(h - m), axis=(2, 3), keepdims=True)
        return jnp.maximum((h - m) * lax.rsqrt(v + 1e-5), 0.0)
    w1, w2, w3, w4, w5 = params
    h = in_relu(_reference_conv_transpose(x, w1, 1, 0))
    h = in_relu(_reference_conv_transpose(h, w2, 2, 0))
    h = in_relu(_reference_conv_transpose(h, w3, 2, 1))
    h = in_relu(_reference_conv_transpose(h, w4, 2, 1))
    return jnp.tanh(_reference_conv_transpose(h, w5, 3, 1))


if __name__ == "__main__":
    batch = 2
    noisy_dim = 8
    ngf = 8

    key = jax.random.PRNGKey(0)
    k_x, k_w = jax.random.split(key)

    params = init_params(k_w, noisy_dim, ngf)
    # Standard DCGAN-style generator input: (N, noisy_dim, 1, 1)
    x = jax.random.normal(k_x, (batch, noisy_dim, 1, 1), dtype=jnp.float32)

    fwd = jax.jit(netg_forward)
    y = fwd(x, params)
    jax.block_until_ready(y)

    # Expected spatial chain: 1 -> 4 -> 12 -> 25 -> 50 -> 150
    assert y.shape == (batch, 3, 150, 150), y.shape
    assert y.dtype == jnp.float32

    # Numerical check against the f32 XLA reference (bf16 intermediates drift).
    ref = _reference_forward(x, params)
    err_max = float(jnp.max(jnp.abs(y - ref)))
    err_mean = float(jnp.mean(jnp.abs(y - ref)))
    assert err_max < 0.2 and err_mean < 0.03, (err_max, err_mean)

    print("KERNEL_OK")
</pallas_src>

<mosaic_0001>
module attributes {stable_mosaic.version = 11 : i64} {
  func.func @_in_relu_kernel(%arg0: i32, %arg1: memref<1x64x16xf32, #tpu.memory_space<vmem>>, %arg2: memref<1x64x16xbf16, #tpu.memory_space<vmem>>) attributes {dimension_semantics = [#tpu.dimension_semantics<parallel>], iteration_bounds = array<i64: 2>, scalar_prefetch = 0 : i64, scratch_operands = 0 : i64, tpu.core_type = #tpu.core_type<tc>, window_params = [{transform_indices = @transform_0, window_bounds = array<i64: 1, 64, 16>}, {transform_indices = @transform_1, window_bounds = array<i64: 1, 64, 16>}]} {
    %c0 = arith.constant 0 : index
    %c0_0 = arith.constant 0 : index
    %c0_1 = arith.constant 0 : index
    %0 = vector.load %arg1[%c0, %c0_0, %c0_1] : memref<1x64x16xf32, #tpu.memory_space<vmem>>, vector<1x64x16xf32>
    %1 = vector.shape_cast %0 : vector<1x64x16xf32> to vector<64x16xf32>
    %cst = arith.constant dense<0.000000e+00> : vector<64xf32>
    %2 = vector.multi_reduction <add>, %1, %cst [1] : vector<64x16xf32> to vector<64xf32>
    %3 = vector.shape_cast %2 : vector<64xf32> to vector<64x1xf32>
    %cst_2 = arith.constant 1.600000e+01 : f32
    %4 = vector.broadcast %cst_2 : f32 to vector<64x1xf32>
    %5 = arith.divf %3, %4 : vector<64x1xf32>
    %6 = arith.mulf %1, %1 : vector<64x16xf32>
    %cst_3 = arith.constant dense<0.000000e+00> : vector<64xf32>
    %7 = vector.multi_reduction <add>, %6, %cst_3 [1] : vector<64x16xf32> to vector<64xf32>
    %8 = vector.shape_cast %7 : vector<64xf32> to vector<64x1xf32>
    %cst_4 = arith.constant 1.600000e+01 : f32
    %9 = vector.broadcast %cst_4 : f32 to vector<64x1xf32>
    %10 = arith.divf %8, %9 : vector<64x1xf32>
    %11 = arith.mulf %5, %5 : vector<64x1xf32>
    %12 = arith.subf %10, %11 : vector<64x1xf32>
    %13 = vector.broadcast %5 : vector<64x1xf32> to vector<64x16xf32>
    %14 = arith.subf %1, %13 : vector<64x16xf32>
    %cst_5 = arith.constant 9.99999974E-6 : f32
    %15 = vector.broadcast %cst_5 : f32 to vector<64x1xf32>
    %16 = arith.addf %12, %15 : vector<64x1xf32>
    %17 = math.rsqrt %16 : vector<64x1xf32>
    %18 = vector.broadcast %17 : vector<64x1xf32> to vector<64x16xf32>
    %19 = arith.mulf %14, %18 : vector<64x16xf32>
    %cst_6 = arith.constant 0.000000e+00 : f32
    %20 = vector.broadcast %cst_6 : f32 to vector<64x16xf32>
    %21 = arith.maximumf %19, %20 : vector<64x16xf32>
    %22 = arith.truncf %21 : vector<64x16xf32> to vector<64x16xbf16>
    %c0_7 = arith.constant 0 : index
    %c0_8 = arith.constant 0 : index
    %c0_9 = arith.constant 0 : index
    %23 = vector.load %arg2[%c0_7, %c0_8, %c0_9] : memref<1x64x16xbf16, #tpu.memory_space<vmem>>, vector<1x64x16xbf16>
    %24 = vector.shape_cast %23 : vector<1x64x16xbf16> to vector<64x16xbf16>
    %25 = vector.shape_cast %22 : vector<64x16xbf16> to vector<1x64x16xbf16>
    tpu.vector_store %arg2[%c0_7, %c0_8, %c0_9], %25 {strides = array<i32>} : memref<1x64x16xbf16, #tpu.memory_space<vmem>>, vector<1x64x16xbf16>,
    return
  }
  func.func @transform_0(%arg0: i32) -> (i32, i32, i32) {
    %c0_i32 = arith.constant 0 : i32
    %c0_i32_0 = arith.constant 0 : i32
    %c0_i32_1 = arith.constant 0 : i32
    return %arg0, %c0_i32, %c0_i32_0 : i32, i32, i32
  }
  func.func @transform_1(%arg0: i32) -> (i32, i32, i32) {
    %c0_i32 = arith.constant 0 : i32
    %c0_i32_0 = arith.constant 0 : i32
    %c0_i32_1 = arith.constant 0 : i32
    return %arg0, %c0_i32, %c0_i32_0 : i32, i32, i32
  }
}

module attributes {stable_mosaic.version = 11 : i64} {
  func.func @_convT_in_relu_kernel(%arg0: i32, %arg1: memref<1x576x36xbf16, #tpu.memory_space<vmem>>, %arg2: memref<128x576xbf16, #tpu.memory_space<vmem>>, %arg3: memref<1x128x36xbf16, #tpu.memory_space<vmem>>) attributes {dimension_semantics = [#tpu.dimension_semantics<parallel>], iteration_bounds = array<i64: 2>, scalar_prefetch = 0 : i64, scratch_operands = 0 : i64, tpu.core_type = #tpu.core_type<tc>, window_params = [{transform_indices = @transform_0, window_bounds = array<i64: 1, 576, 36>}, {pipeline_mode = #tpu.pipeline_mode<synchronous>, transform_indices = @transform_1, window_bounds = array<i64: 128, 576>}, {transform_indices = @transform_2, window_bounds = array<i64: 1, 128, 36>}]} {
    %c0 = arith.constant 0 : index
    %c0_0 = arith.constant 0 : index
    %0 = vector.load %arg2[%c0, %c0_0] : memref<128x576xbf16, #tpu.memory_space<vmem>>, vector<128x576xbf16>
    %c0_1 = arith.constant 0 : index
    %c0_2 = arith.constant 0 : index
    %c0_3 = arith.constant 0 : index
    %1 = vector.load %arg1[%c0_1, %c0_2, %c0_3] : memref<1x576x36xbf16, #tpu.memory_space<vmem>>, vector<1x576x36xbf16>
    %2 = vector.shape_cast %1 : vector<1x576x36xbf16> to vector<576x36xbf16>
    %cst = arith.constant dense<0.000000e+00> : vector<128x36xf32>
    %3 = tpu.matmul %0, %2, %cst {dimension_numbers = #tpu.dot_dimension_numbers<[1], [0], [0], [1], [0, 0, 1, 1], [], []>} : vector<128x576xbf16>, vector<576x36xbf16>, vector<128x36xf32> -> vector<128x36xf32>
    %cst_4 = arith.constant dense<0.000000e+00> : vector<128xf32>
    %4 = vector.multi_reduction <add>, %3, %cst_4 [1] : vector<128x36xf32> to vector<128xf32>
    %5 = vector.shape_cast %4 : vector<128xf32> to vector<128x1xf32>
    %6 = arith.mulf %3, %3 : vector<128x36xf32>
    %cst_5 = arith.constant dense<0.000000e+00> : vector<128xf32>
    %7 = vector.multi_reduction <add>, %6, %cst_5 [1] : vector<128x36xf32> to vector<128xf32>
    %8 = vector.shape_cast %7 : vector<128xf32> to vector<128x1xf32>
    %9 = vector.extract_strided_slice %5 {offsets = [0, 0], sizes = [32, 1], strides = [1, 1]} : vector<128x1xf32> to vector<32x1xf32>
    %10 = vector.extract_strided_slice %8 {offsets = [0, 0], sizes = [32, 1], strides = [1, 1]} : vector<128x1xf32> to vector<32x1xf32>
    %11 = vector.extract_strided_slice %5 {offsets = [32, 0], sizes = [32, 1], strides = [1, 1]} : vector<128x1xf32> to vector<32x1xf32>
    %12 = arith.addf %9, %11 : vector<32x1xf32>
    %13 = vector.extract_strided_slice %8 {offsets = [32, 0], sizes = [32, 1], strides = [1, 1]} : vector<128x1xf32> to vector<32x1xf32>
    %14 = arith.addf %10, %13 : vector<32x1xf32>
    %15 = vector.extract_strided_slice %5 {offsets = [64, 0], sizes = [32, 1], strides = [1, 1]} : vector<128x1xf32> to vector<32x1xf32>
    %16 = arith.addf %12, %15 : vector<32x1xf32>
    %17 = vector.extract_strided_slice %8 {offsets = [64, 0], sizes = [32, 1], strides = [1, 1]} : vector<128x1xf32> to vector<32x1xf32>
    %18 = arith.addf %14, %17 : vector<32x1xf32>
    %19 = vector.extract_strided_slice %5 {offsets = [96, 0], sizes = [32, 1], strides = [1, 1]} : vector<128x1xf32> to vector<32x1xf32>
    %20 = arith.addf %16, %19 : vector<32x1xf32>
    %21 = vector.extract_strided_slice %8 {offsets = [96, 0], sizes = [32, 1], strides = [1, 1]} : vector<128x1xf32> to vector<32x1xf32>
    %22 = arith.addf %18, %21 : vector<32x1xf32>
    %cst_6 = arith.constant 0.0069444445 : f32
    %23 = vector.broadcast %cst_6 : f32 to vector<32x1xf32>
    %24 = arith.mulf %20, %23 : vector<32x1xf32>
    %cst_7 = arith.constant 0.0069444445 : f32
    %25 = vector.broadcast %cst_7 : f32 to vector<32x1xf32>
    %26 = arith.mulf %22, %25 : vector<32x1xf32>
    %27 = arith.mulf %24, %24 : vector<32x1xf32>
    %28 = arith.subf %26, %27 : vector<32x1xf32>
    %cst_8 = arith.constant 9.99999974E-6 : f32
    %29 = vector.broadcast %cst_8 : f32 to vector<32x1xf32>
    %30 = arith.addf %28, %29 : vector<32x1xf32>
    %31 = math.rsqrt %30 : vector<32x1xf32>
    %32 = tpu.concatenate %24, %24, %24, %24 in 0 : vector<32x1xf32>, vector<32x1xf32>, vector<32x1xf32>, vector<32x1xf32> -> vector<128x1xf32>
    %33 = tpu.concatenate %31, %31, %31, %31 in 0 : vector<32x1xf32>, vector<32x1xf32>, vector<32x1xf32>, vector<32x1xf32> -> vector<128x1xf32>
    %34 = vector.broadcast %32 : vector<128x1xf32> to vector<128x36xf32>
    %35 = arith.subf %3, %34 : vector<128x36xf32>
    %36 = vector.broadcast %33 : vector<128x1xf32> to vector<128x36xf32>
    %37 = arith.mulf %35, %36 : vector<128x36xf32>
    %cst_9 = arith.constant 0.000000e+00 : f32
    %38 = vector.broadcast %cst_9 : f32 to vector<128x36xf32>
    %39 = arith.maximumf %37, %38 : vector<128x36xf32>
    %40 = arith.truncf %39 : vector<128x36xf32> to vector<128x36xbf16>
    %c0_10 = arith.constant 0 : index
    %c0_11 = arith.constant 0 : index
    %c0_12 = arith.constant 0 : index
    %41 = vector.load %arg3[%c0_10, %c0_11, %c0_12] : memref<1x128x36xbf16, #tpu.memory_space<vmem>>, vector<1x128x36xbf16>
    %42 = vector.shape_cast %41 : vector<1x128x36xbf16> to vector<128x36xbf16>
    %43 = vector.shape_cast %40 : vector<128x36xbf16> to vector<1x128x36xbf16>
    tpu.vector_store %arg3[%c0_10, %c0_11, %c0_12], %43 {strides = array<i32>} : memref<1x128x36xbf16, #tpu.memory_space<vmem>>, vector<1x128x36xbf16>,
    return
  }
  func.func @transform_0(%arg0: i32) -> (i32, i32, i32) {
    %c0_i32 = arith.constant 0 : i32
    %c0_i32_0 = arith.constant 0 : i32
    %c0_i32_1 = arith.constant 0 : i32
    return %arg0, %c0_i32, %c0_i32_0 : i32, i32, i32
  }
  func.func @transform_1(%arg0: i32) -> (i32, i32) {
    %c0_i32 = arith.constant 0 : i32
    %c0_i32_0 = arith.constant 0 : i32
    %c0_i32_1 = arith.constant 0 : i32
    return %c0_i32, %c0_i32_0 : i32, i32
  }
  func.func @transform_2(%arg0: i32) -> (i32, i32, i32) {
    %c0_i32 = arith.constant 0 : i32
    %c0_i32_0 = arith.constant 0 : i32
    %c0_i32_1 = arith.constant 0 : i32
    return %arg0, %c0_i32, %c0_i32_0 : i32, i32, i32
  }
}

module attributes {stable_mosaic.version = 11 : i64} {
  func.func @_convT_in_relu_kernel(%arg0: i32, %arg1: memref<1x288x169xbf16, #tpu.memory_space<vmem>>, %arg2: memref<64x288xbf16, #tpu.memory_space<vmem>>, %arg3: memref<64x169xf32, #tpu.memory_space<vmem>>, %arg4: memref<1x64x169xbf16, #tpu.memory_space<vmem>>) attributes {dimension_semantics = [#tpu.dimension_semantics<parallel>], iteration_bounds = array<i64: 2>, scalar_prefetch = 0 : i64, scratch_operands = 0 : i64, tpu.core_type = #tpu.core_type<tc>, window_params = [{transform_indices = @transform_0, window_bounds = array<i64: 1, 288, 169>}, {pipeline_mode = #tpu.pipeline_mode<synchronous>, transform_indices = @transform_1, window_bounds = array<i64: 64, 288>}, {pipeline_mode = #tpu.pipeline_mode<synchronous>, transform_indices = @transform_2, window_bounds = array<i64: 64, 169>}, {transform_indices = @transform_3, window_bounds = array<i64: 1, 64, 169>}]} {
    %c0 = arith.constant 0 : index
    %c0_0 = arith.constant 0 : index
    %0 = vector.load %arg2[%c0, %c0_0] : memref<64x288xbf16, #tpu.memory_space<vmem>>, vector<64x288xbf16>
    %c0_1 = arith.constant 0 : index
    %c0_2 = arith.constant 0 : index
    %c0_3 = arith.constant 0 : index
    %1 = vector.load %arg1[%c0_1, %c0_2, %c0_3] : memref<1x288x169xbf16, #tpu.memory_space<vmem>>, vector<1x288x169xbf16>
    %2 = vector.shape_cast %1 : vector<1x288x169xbf16> to vector<288x169xbf16>
    %cst = arith.constant dense<0.000000e+00> : vector<64x169xf32>
    %3 = tpu.matmul %0, %2, %cst {dimension_numbers = #tpu.dot_dimension_numbers<[1], [0], [0], [1], [0, 0, 1, 1], [], []>} : vector<64x288xbf16>, vector<288x169xbf16>, vector<64x169xf32> -> vector<64x169xf32>
    %c0_4 = arith.constant 0 : index
    %c0_5 = arith.constant 0 : index
    %4 = vector.load %arg3[%c0_4, %c0_5] : memref<64x169xf32, #tpu.memory_space<vmem>>, vector<64x169xf32>
    %5 = arith.mulf %3, %4 : vector<64x169xf32>
    %cst_6 = arith.constant dense<0.000000e+00> : vector<64xf32>
    %6 = vector.multi_reduction <add>, %5, %cst_6 [1] : vector<64x169xf32> to vector<64xf32>
    %7 = vector.shape_cast %6 : vector<64xf32> to vector<64x1xf32>
    %8 = arith.mulf %5, %5 : vector<64x169xf32>
    %cst_7 = arith.constant dense<0.000000e+00> : vector<64xf32>
    %9 = vector.multi_reduction <add>, %8, %cst_7 [1] : vector<64x169xf32> to vector<64xf32>
    %10 = vector.shape_cast %9 : vector<64xf32> to vector<64x1xf32>
    %11 = vector.extract_strided_slice %7 {offsets = [0, 0], sizes = [16, 1], strides = [1, 1]} : vector<64x1xf32> to vector<16x1xf32>
    %12 = vector.extract_strided_slice %10 {offsets = [0, 0], sizes = [16, 1], strides = [1, 1]} : vector<64x1xf32> to vector<16x1xf32>
    %13 = vector.extract_strided_slice %7 {offsets = [16, 0], sizes = [16, 1], strides = [1, 1]} : vector<64x1xf32> to vector<16x1xf32>
    %14 = arith.addf %11, %13 : vector<16x1xf32>
    %15 = vector.extract_strided_slice %10 {offsets = [16, 0], sizes = [16, 1], strides = [1, 1]} : vector<64x1xf32> to vector<16x1xf32>
    %16 = arith.addf %12, %15 : vector<16x1xf32>
    %17 = vector.extract_strided_slice %7 {offsets = [32, 0], sizes = [16, 1], strides = [1, 1]} : vector<64x1xf32> to vector<16x1xf32>
    %18 = arith.addf %14, %17 : vector<16x1xf32>
    %19 = vector.extract_strided_slice %10 {offsets = [32, 0], sizes = [16, 1], strides = [1, 1]} : vector<64x1xf32> to vector<16x1xf32>
    %20 = arith.addf %16, %19 : vector<16x1xf32>
    %21 = vector.extract_strided_slice %7 {offsets = [48, 0], sizes = [16, 1], strides = [1, 1]} : vector<64x1xf32> to vector<16x1xf32>
    %22 = arith.addf %18, %21 : vector<16x1xf32>
    %23 = vector.extract_strided_slice %10 {offsets = [48, 0], sizes = [16, 1], strides = [1, 1]} : vector<64x1xf32> to vector<16x1xf32>
    %24 = arith.addf %20, %23 : vector<16x1xf32>
    %cst_8 = arith.constant 1.600000e-03 : f32
    %25 = vector.broadcast %cst_8 : f32 to vector<16x1xf32>
    %26 = arith.mulf %22, %25 : vector<16x1xf32>
    %cst_9 = arith.constant 1.600000e-03 : f32
    %27 = vector.broadcast %cst_9 : f32 to vector<16x1xf32>
    %28 = arith.mulf %24, %27 : vector<16x1xf32>
    %29 = arith.mulf %26, %26 : vector<16x1xf32>
    %30 = arith.subf %28, %29 : vector<16x1xf32>
    %cst_10 = arith.constant 9.99999974E-6 : f32
    %31 = vector.broadcast %cst_10 : f32 to vector<16x1xf32>
    %32 = arith.addf %30, %31 : vector<16x1xf32>
    %33 = math.rsqrt %32 : vector<16x1xf32>
    %34 = tpu.concatenate %26, %26, %26, %26 in 0 : vector<16x1xf32>, vector<16x1xf32>, vector<16x1xf32>, vector<16x1xf32> -> vector<64x1xf32>
    %35 = tpu.concatenate %33, %33, %33, %33 in 0 : vector<16x1xf32>, vector<16x1xf32>, vector<16x1xf32>, vector<16x1xf32> -> vector<64x1xf32>
    %36 = vector.broadcast %34 : vector<64x1xf32> to vector<64x169xf32>
    %37 = arith.subf %3, %36 : vector<64x169xf32>
    %38 = vector.broadcast %35 : vector<64x1xf32> to vector<64x169xf32>
    %39 = arith.mulf %37, %38 : vector<64x169xf32>
    %cst_11 = arith.constant 0.000000e+00 : f32
    %40 = vector.broadcast %cst_11 : f32 to vector<64x169xf32>
    %41 = arith.maximumf %39, %40 : vector<64x169xf32>
    %42 = arith.truncf %41 : vector<64x169xf32> to vector<64x169xbf16>
    %c0_12 = arith.constant 0 : index
    %c0_13 = arith.constant 0 : index
    %c0_14 = arith.constant 0 : index
    %43 = vector.load %arg4[%c0_12, %c0_13, %c0_14] : memref<1x64x169xbf16, #tpu.memory_space<vmem>>, vector<1x64x169xbf16>
    %44 = vector.shape_cast %43 : vector<1x64x169xbf16> to vector<64x169xbf16>
    %45 = vector.shape_cast %42 : vector<64x169xbf16> to vector<1x64x169xbf16>
    tpu.vector_store %arg4[%c0_12, %c0_13, %c0_14], %45 {strides = array<i32>} : memref<1x64x169xbf16, #tpu.memory_space<vmem>>, vector<1x64x169xbf16>,
    return
  }
  func.func @transform_0(%arg0: i32) -> (i32, i32, i32) {
    %c0_i32 = arith.constant 0 : i32
    %c0_i32_0 = arith.constant 0 : i32
    %c0_i32_1 = arith.constant 0 : i32
    return %arg0, %c0_i32, %c0_i32_0 : i32, i32, i32
  }
  func.func @transform_1(%arg0: i32) -> (i32, i32) {
    %c0_i32 = arith.constant 0 : i32
    %c0_i32_0 = arith.constant 0 : i32
    %c0_i32_1 = arith.constant 0 : i32
    return %c0_i32, %c0_i32_0 : i32, i32
  }
  func.func @transform_2(%arg0: i32) -> (i32, i32) {
    %c0_i32 = arith.constant 0 : i32
    %c0_i32_0 = arith.constant 0 : i32
    %c0_i32_1 = arith.constant 0 : i32
    return %c0_i32, %c0_i32_0 : i32, i32
  }
  func.func @transform_3(%arg0: i32) -> (i32, i32, i32) {
    %c0_i32 = arith.constant 0 : i32
    %c0_i32_0 = arith.constant 0 : i32
    %c0_i32_1 = arith.constant 0 : i32
    return %arg0, %c0_i32, %c0_i32_0 : i32, i32, i32
  }
}

module attributes {stable_mosaic.version = 11 : i64} {
  func.func @_convT_in_relu_kernel(%arg0: i32, %arg1: memref<1x144x625xbf16, #tpu.memory_space<vmem>>, %arg2: memref<32x144xbf16, #tpu.memory_space<vmem>>, %arg3: memref<1x32x625xbf16, #tpu.memory_space<vmem>>) attributes {dimension_semantics = [#tpu.dimension_semantics<parallel>], iteration_bounds = array<i64: 2>, scalar_prefetch = 0 : i64, scratch_operands = 0 : i64, tpu.core_type = #tpu.core_type<tc>, window_params = [{transform_indices = @transform_0, window_bounds = array<i64: 1, 144, 625>}, {pipeline_mode = #tpu.pipeline_mode<synchronous>, transform_indices = @transform_1, window_bounds = array<i64: 32, 144>}, {transform_indices = @transform_2, window_bounds = array<i64: 1, 32, 625>}]} {
    %c0 = arith.constant 0 : index
    %c0_0 = arith.constant 0 : index
    %0 = vector.load %arg2[%c0, %c0_0] : memref<32x144xbf16, #tpu.memory_space<vmem>>, vector<32x144xbf16>
    %c0_1 = arith.constant 0 : index
    %c0_2 = arith.constant 0 : index
    %c0_3 = arith.constant 0 : index
    %1 = vector.load %arg1[%c0_1, %c0_2, %c0_3] : memref<1x144x625xbf16, #tpu.memory_space<vmem>>, vector<1x144x625xbf16>
    %2 = vector.shape_cast %1 : vector<1x144x625xbf16> to vector<144x625xbf16>
    %cst = arith.constant dense<0.000000e+00> : vector<32x625xf32>
    %3 = tpu.matmul %0, %2, %cst {dimension_numbers = #tpu.dot_dimension_numbers<[1], [0], [0], [1], [0, 0, 1, 1], [], []>} : vector<32x144xbf16>, vector<144x625xbf16>, vector<32x625xf32> -> vector<32x625xf32>
    %cst_4 = arith.constant dense<0.000000e+00> : vector<32xf32>
    %4 = vector.multi_reduction <add>, %3, %cst_4 [1] : vector<32x625xf32> to vector<32xf32>
    %5 = vector.shape_cast %4 : vector<32xf32> to vector<32x1xf32>
    %6 = arith.mulf %3, %3 : vector<32x625xf32>
    %cst_5 = arith.constant dense<0.000000e+00> : vector<32xf32>
    %7 = vector.multi_reduction <add>, %6, %cst_5 [1] : vector<32x625xf32> to vector<32xf32>
    %8 = vector.shape_cast %7 : vector<32xf32> to vector<32x1xf32>
    %9 = vector.extract_strided_slice %5 {offsets = [0, 0], sizes = [8, 1], strides = [1, 1]} : vector<32x1xf32> to vector<8x1xf32>
    %10 = vector.extract_strided_slice %8 {offsets = [0, 0], sizes = [8, 1], strides = [1, 1]} : vector<32x1xf32> to vector<8x1xf32>
    %11 = vector.extract_strided_slice %5 {offsets = [8, 0], sizes = [8, 1], strides = [1, 1]} : vector<32x1xf32> to vector<8x1xf32>
    %12 = arith.addf %9, %11 : vector<8x1xf32>
    %13 = vector.extract_strided_slice %8 {offsets = [8, 0], sizes = [8, 1], strides = [1, 1]} : vector<32x1xf32> to vector<8x1xf32>
    %14 = arith.addf %10, %13 : vector<8x1xf32>
    %15 = vector.extract_strided_slice %5 {offsets = [16, 0], sizes = [8, 1], strides = [1, 1]} : vector<32x1xf32> to vector<8x1xf32>
    %16 = arith.addf %12, %15 : vector<8x1xf32>
    %17 = vector.extract_strided_slice %8 {offsets = [16, 0], sizes = [8, 1], strides = [1, 1]} : vector<32x1xf32> to vector<8x1xf32>
    %18 = arith.addf %14, %17 : vector<8x1xf32>
    %19 = vector.extract_strided_slice %5 {offsets = [24, 0], sizes = [8, 1], strides = [1, 1]} : vector<32x1xf32> to vector<8x1xf32>
    %20 = arith.addf %16, %19 : vector<8x1xf32>
    %21 = vector.extract_strided_slice %8 {offsets = [24, 0], sizes = [8, 1], strides = [1, 1]} : vector<32x1xf32> to vector<8x1xf32>
    %22 = arith.addf %18, %21 : vector<8x1xf32>
    %cst_6 = arith.constant 4.000000e-04 : f32
    %23 = vector.broadcast %cst_6 : f32 to vector<8x1xf32>
    %24 = arith.mulf %20, %23 : vector<8x1xf32>
    %cst_7 = arith.constant 4.000000e-04 : f32
    %25 = vector.broadcast %cst_7 : f32 to vector<8x1xf32>
    %26 = arith.mulf %22, %25 : vector<8x1xf32>
    %27 = arith.mulf %24, %24 : vector<8x1xf32>
    %28 = arith.subf %26, %27 : vector<8x1xf32>
    %cst_8 = arith.constant 9.99999974E-6 : f32
    %29 = vector.broadcast %cst_8 : f32 to vector<8x1xf32>
    %30 = arith.addf %28, %29 : vector<8x1xf32>
    %31 = math.rsqrt %30 : vector<8x1xf32>
    %32 = tpu.concatenate %24, %24, %24, %24 in 0 : vector<8x1xf32>, vector<8x1xf32>, vector<8x1xf32>, vector<8x1xf32> -> vector<32x1xf32>
    %33 = tpu.concatenate %31, %31, %31, %31 in 0 : vector<8x1xf32>, vector<8x1xf32>, vector<8x1xf32>, vector<8x1xf32> -> vector<32x1xf32>
    %34 = vector.broadcast %32 : vector<32x1xf32> to vector<32x625xf32>
    %35 = arith.subf %3, %34 : vector<32x625xf32>
    %36 = vector.broadcast %33 : vector<32x1xf32> to vector<32x625xf32>
    %37 = arith.mulf %35, %36 : vector<32x625xf32>
    %cst_9 = arith.constant 0.000000e+00 : f32
    %38 = vector.broadcast %cst_9 : f32 to vector<32x625xf32>
    %39 = arith.maximumf %37, %38 : vector<32x625xf32>
    %40 = arith.truncf %39 : vector<32x625xf32> to vector<32x625xbf16>
    %c0_10 = arith.constant 0 : index
    %c0_11 = arith.constant 0 : index
    %c0_12 = arith.constant 0 : index
    %41 = vector.load %arg3[%c0_10, %c0_11, %c0_12] : memref<1x32x625xbf16, #tpu.memory_space<vmem>>, vector<1x32x625xbf16>
    %42 = vector.shape_cast %41 : vector<1x32x625xbf16> to vector<32x625xbf16>
    %43 = vector.shape_cast %40 : vector<32x625xbf16> to vector<1x32x625xbf16>
    tpu.vector_store %arg3[%c0_10, %c0_11, %c0_12], %43 {strides = array<i32>} : memref<1x32x625xbf16, #tpu.memory_space<vmem>>, vector<1x32x625xbf16>,
    return
  }
  func.func @transform_0(%arg0: i32) -> (i32, i32, i32) {
    %c0_i32 = arith.constant 0 : i32
    %c0_i32_0 = arith.constant 0 : i32
    %c0_i32_1 = arith.constant 0 : i32
    return %arg0, %c0_i32, %c0_i32_0 : i32, i32, i32
  }
  func.func @transform_1(%arg0: i32) -> (i32, i32) {
    %c0_i32 = arith.constant 0 : i32
    %c0_i32_0 = arith.constant 0 : i32
    %c0_i32_1 = arith.constant 0 : i32
    return %c0_i32, %c0_i32_0 : i32, i32
  }
  func.func @transform_2(%arg0: i32) -> (i32, i32, i32) {
    %c0_i32 = arith.constant 0 : i32
    %c0_i32_0 = arith.constant 0 : i32
    %c0_i32_1 = arith.constant 0 : i32
    return %arg0, %c0_i32, %c0_i32_0 : i32, i32, i32
  }
}

module attributes {stable_mosaic.version = 11 : i64} {
  func.func @_convT_tanh_kernel(%arg0: i32, %arg1: memref<1x72x2500xbf16, #tpu.memory_space<vmem>>, %arg2: memref<27x72xbf16, #tpu.memory_space<vmem>>, %arg3: memref<1x27x2500xf32, #tpu.memory_space<vmem>>) attributes {dimension_semantics = [#tpu.dimension_semantics<parallel>], iteration_bounds = array<i64: 2>, scalar_prefetch = 0 : i64, scratch_operands = 0 : i64, tpu.core_type = #tpu.core_type<tc>, window_params = [{transform_indices = @transform_0, window_bounds = array<i64: 1, 72, 2500>}, {pipeline_mode = #tpu.pipeline_mode<synchronous>, transform_indices = @transform_1, window_bounds = array<i64: 27, 72>}, {transform_indices = @transform_2, window_bounds = array<i64: 1, 27, 2500>}]} {
    %c0 = arith.constant 0 : index
    %c0_0 = arith.constant 0 : index
    %0 = vector.load %arg2[%c0, %c0_0] : memref<27x72xbf16, #tpu.memory_space<vmem>>, vector<27x72xbf16>
    %c0_1 = arith.constant 0 : index
    %c0_2 = arith.constant 0 : index
    %c0_3 = arith.constant 0 : index
    %1 = vector.load %arg1[%c0_1, %c0_2, %c0_3] : memref<1x72x2500xbf16, #tpu.memory_space<vmem>>, vector<1x72x2500xbf16>
    %2 = vector.shape_cast %1 : vector<1x72x2500xbf16> to vector<72x2500xbf16>
    %cst = arith.constant dense<0.000000e+00> : vector<27x2500xf32>
    %3 = tpu.matmul %0, %2, %cst {dimension_numbers = #tpu.dot_dimension_numbers<[1], [0], [0], [1], [0, 0, 1, 1], [], []>} : vector<27x72xbf16>, vector<72x2500xbf16>, vector<27x2500xf32> -> vector<27x2500xf32>
    %4 = math.tanh %3 : vector<27x2500xf32>
    %c0_4 = arith.constant 0 : index
    %c0_5 = arith.constant 0 : index
    %c0_6 = arith.constant 0 : index
    %5 = vector.load %arg3[%c0_4, %c0_5, %c0_6] : memref<1x27x2500xf32, #tpu.memory_space<vmem>>, vector<1x27x2500xf32>
    %6 = vector.shape_cast %5 : vector<1x27x2500xf32> to vector<27x2500xf32>
    %7 = vector.shape_cast %4 : vector<27x2500xf32> to vector<1x27x2500xf32>
    tpu.vector_store %arg3[%c0_4, %c0_5, %c0_6], %7 {strides = array<i32>} : memref<1x27x2500xf32, #tpu.memory_space<vmem>>, vector<1x27x2500xf32>,
    return
  }
  func.func @transform_0(%arg0: i32) -> (i32, i32, i32) {
    %c0_i32 = arith.constant 0 : i32
    %c0_i32_0 = arith.constant 0 : i32
    %c0_i32_1 = arith.constant 0 : i32
    return %arg0, %c0_i32, %c0_i32_0 : i32, i32, i32
  }
  func.func @transform_1(%arg0: i32) -> (i32, i32) {
    %c0_i32 = arith.constant 0 : i32
    %c0_i32_0 = arith.constant 0 : i32
    %c0_i32_1 = arith.constant 0 : i32
    return %c0_i32, %c0_i32_0 : i32, i32
  }
  func.func @transform_2(%arg0: i32) -> (i32, i32, i32) {
    %c0_i32 = arith.constant 0 : i32
    %c0_i32_0 = arith.constant 0 : i32
    %c0_i32_1 = arith.constant 0 : i32
    return %arg0, %c0_i32, %c0_i32_0 : i32, i32, i32
  }
}

</mosaic_0001>

<llo_original>
// kernel: netg_forward.5
$region0: #{netg_forward.5}
  #allocation0 [shape = 'u32[]', space=smem, size = 0x4, offset = 0x4, fixed_abs, tag = 'smem constant byte address 0x4 - core index']
  #allocation1 [shape = 'u32[72,128]{1,0:T(1,128)}', space=vmem, size = 0x9000, scoped, tag = 'internal scratch']
  %s0 = inlined_call_operand.vmem [shape: f32[2,64,16], index: 0, kind: input, shape index: {}]
  %s1 = inlined_call_operand.vmem [shape: bf16[2,64,16], index: 1, kind: output, shape index: {}]
  %s2 = sld [smem:[#allocation0]]
  $region37: #{netg_forward.5} parent=0
    _
  %s4 = ssub.s32 1, %s2
  %s5 = scalar_select 0, %s4, %s2
  loop: start=0, step=1, limit=4
  $region2: #{netg_forward.5} parent=0 // loop_pre_header
    _
  $region3: #{netg_forward.5} parent=0 // loop_header
    %s7 = sphi 0, %s11
    %p8 = scmp.ge.s32.totalorder %s7, 4
    %s17 = sphi 0, %s19
    %s20 = sphi 0, %s17
    %s21 = sphi 0, %s20
    %s37 = sphi 0, %s21
    %s43 = sphi 0, %s45
    %s46 = sphi 0, %s43
    %s47 = sphi 0, %s46
    %s63 = sphi 0, %s47
  $region4: #{netg_forward.5} parent=0 // loop_header_branch
    %10 = sbr.rel (%p8) target = $region8
  $region5: #{netg_forward.5} parent=0 // loop_body
    %s12 = ssub.s32 %s7, 1
    %s13 = ssub.s32 %s7, 2
    %s14 = sadd.s32 %s7, 1
    %s15 = ssub.s32 %s7, %s14
    %p16 = scmp.eq.s32.totalorder %s15, 0
    %s18 = sadd.s32 %s17, 1
    %s19 = scalar_select %p16, %s17, %s18
    %p22 = pneg %p16
    %p23 = scmp.eq.s32.totalorder %s7, 1
    %p24 = por %p22, %p23
    %p25 = scmp.ne.s32.totalorder %s17, %s20
    %p26 = scmp.eq.s32.totalorder %s7, 0
    %p27 = por %p25, %p26
    %p28 = scmp.ne.s32.totalorder %s17, %s20
    %p29 = scmp.eq.s32.totalorder %s12, 1
    %p30 = por %p28, %p29
    %p31 = scmp.ne.s32.totalorder %s20, %s21
    %p32 = scmp.eq.s32.totalorder %s12, 0
    %p33 = por %p31, %p32
    %p34 = scmp.ne.s32.totalorder %s20, %s21
    %p35 = scmp.eq.s32.totalorder %s13, 1
    %p36 = por %p34, %p35
    %p38 = scmp.ne.s32.totalorder %s21, %s37
    %p39 = scmp.eq.s32.totalorder %s13, 0
    %p40 = por %p38, %p39
    %s41 = ssub.s32 %s7, %s14
    %p42 = scmp.eq.s32.totalorder %s41, 0
    %s44 = sadd.s32 %s43, 1
    %s45 = scalar_select %p42, %s43, %s44
    %p48 = pneg %p42
    %p49 = scmp.eq.s32.totalorder %s7, 1
    %p50 = por %p48, %p49
    %p51 = scmp.ne.s32.totalorder %s43, %s46
    %p52 = scmp.eq.s32.totalorder %s7, 0
    %p53 = por %p51, %p52
    %p54 = scmp.ne.s32.totalorder %s43, %s46
    %p55 = scmp.eq.s32.totalorder %s12, 1
    %p56 = por %p54, %p55
    %p57 = scmp.ne.s32.totalorder %s46, %s47
    %p58 = scmp.eq.s32.totalorder %s12, 0
    %p59 = por %p57, %p58
    %p60 = scmp.ne.s32.totalorder %s46, %s47
    %p61 = scmp.eq.s32.totalorder %s13, 1
    %p62 = por %p60, %p61
    %p64 = scmp.ne.s32.totalorder %s47, %s63
    %p65 = scmp.eq.s32.totalorder %s13, 0
    %p66 = por %p64, %p65
    %p67 = scmp.le.s32.totalorder 1, %s7
    %p68 = scmp.lt.s32.totalorder %s7, 3
    %p69 = pnand %p67, %p68
    %p70 = pneg %p69
    // Predicated region
    $region9: #{netg_forward.5} parent=5 // pred_check
      _
    $region10: #{netg_forward.5} parent=5 // pred_check_branch
      %72 = sbr.rel (%p69) target = $region12
    $region11: #{netg_forward.5} parent=5 // pred_region
      %s73 = ssub.s32 %s7, 1
    $region12: #{netg_forward.5} parent=5 // pred_fallthru
      _
    %p74 = scmp.lt.s32.totalorder %s7, 2
    // Predicated region
    $region13: #{netg_forward.5} parent=5 // pred_check
      %p75 = pneg %p74
    $region14: #{netg_forward.5} parent=5 // pred_check_branch
      %77 = sbr.rel (%p75) target = $region16
    $region15: #{netg_forward.5} parent=5 // pred_region
      // Predicated region
      $region17: #{netg_forward.5} parent=15 // pred_check
        %p78 = pneg %p27
      $region18: #{netg_forward.5} parent=15 // pred_check_branch
        %80 = sbr.rel (%p78) target = $region20
      $region19: #{netg_forward.5} parent=15 // pred_region
        %p81 = scmp.lt.s32.totalorder %s7, 1
        %s82 = scalar_select %p81, %s7, 1
        %s83 = smul.addr %s82, 8
        %s84 = smul.addr %s83, 8
        %s85 = scalar_lea.vmem %s0, %s84
      $region20: #{netg_forward.5} parent=15 // pred_fallthru
        _
    $region16: #{netg_forward.5} parent=5 // pred_fallthru
      _
    %p86 = scmp.le.s32.totalorder 1, %s7
    %p87 = scmp.lt.s32.totalorder %s7, 3
    %p88 = pnand %p86, %p87
    %p89 = pneg %p88
    // Predicated region
    $region21: #{netg_forward.5} parent=5 // pred_check
      _
    $region22: #{netg_forward.5} parent=5 // pred_check_branch
      %91 = sbr.rel (%p88) target = $region24
    $region23: #{netg_forward.5} parent=5 // pred_region
      %s92 = ssub.s32 %s7, 1
      %p93 = scmp.lt.s32.totalorder %s12, 1
      %s94 = scalar_select %p93, %s12, 1
      %s95 = smul.addr %s94, 8
      %s96 = smul.addr %s95, 8
      %s97 = scalar_lea.vmem %s0, %s96
      %p98 = pneg %p33
      %p99 = pneg %p30
      %p100 = pneg %p59
      %p101 = pneg %p56
      %p102 = scmp.lt.s32.totalorder %s12, 1
      %s103 = scalar_select %p102, %s12, 1
      %s104 = smul.addr %s103, 8
      %s105 = smul.addr %s104, 4
      %s106 = scalar_lea.vmem %s1, %s105
      %p107 = scmp.lt.s32.totalorder %s12, 1
      %s108 = scalar_select %p107, %s12, 1
      %s109 = smul.addr %s108, 8
      %s110 = smul.addr %s109, 8
      %s111 = scalar_lea.vmem %s0, %s110
      %p112 = scmp.lt.s32.totalorder %s12, 1
      %s113 = scalar_select %p112, %s12, 1
      %s114 = smul.addr %s113, 8
      %s115 = smul.addr %s114, 4
      %s116 = scalar_lea.vmem %s1, %s115
      %v117 = vld [vmem:[%s111] sm:$0xff]
      %v118 = vld [vmem:[%s111 + $0x8] sm:$0xff]
      %v119 = vld [vmem:[%s111 + $0x10] sm:$0xff]
      %v120 = vld [vmem:[%s111 + $0x18] sm:$0xff]
      %v121 = vld [vmem:[%s111 + $0x20] sm:$0xff]
      %v122 = vld [vmem:[%s111 + $0x28] sm:$0xff]
      %v123 = vld [vmem:[%s111 + $0x30] sm:$0xff]
      %v124 = vld [vmem:[%s111 + $0x38] sm:$0xff]
      %vm125 = vcmask 130048
      %v126 = vsel %vm125, %v117, 0.0
      %127 = vadd.xlane.f32.xlu0 %v126
      %v128 = vpop.xlane.xlu0 %127
      %v129 = vsel %vm125, %v118, 0.0
      %130 = vadd.xlane.f32.xlu0 %v129
      %v131 = vpop.xlane.xlu0 %130
      %v132 = vsel %vm125, %v119, 0.0
      %133 = vadd.xlane.f32.xlu0 %v132
      %v134 = vpop.xlane.xlu0 %133
      %v135 = vsel %vm125, %v120, 0.0
      %136 = vadd.xlane.f32.xlu0 %v135
      %v137 = vpop.xlane.xlu0 %136
      %v138 = vsel %vm125, %v121, 0.0
      %139 = vadd.xlane.f32.xlu0 %v138
      %v140 = vpop.xlane.xlu0 %139
      %v141 = vsel %vm125, %v122, 0.0
      %142 = vadd.xlane.f32.xlu0 %v141
      %v143 = vpop.xlane.xlu0 %142
      %v144 = vsel %vm125, %v123, 0.0
      %145 = vadd.xlane.f32.xlu0 %v144
      %v146 = vpop.xlane.xlu0 %145
      %v147 = vsel %vm125, %v124, 0.0
      %148 = vadd.xlane.f32.xlu0 %v147
      %v149 = vpop.xlane.xlu0 %148
      %v150 = vrcp.pop 16.0
      %v151 = vmul.f32 16.0, %v150
      %v152 = vsub.f32 1.0, %v151
      %v153 = vmul.f32 %v150, %v152
      %v154 = vadd.f32 %v150, %v153
      %vm155 = vweird.f32 %v150
      %v156 = vsel %vm155, %v150, %v154
      %v157 = vmul.f32 %v128, %v156
      %v158 = vmul.f32 %v131, %v156
      %v159 = vmul.f32 %v134, %v156
      %v160 = vmul.f32 %v137, %v156
      %v161 = vmul.f32 %v140, %v156
      %v162 = vmul.f32 %v143, %v156
      %v163 = vmul.f32 %v146, %v156
      %v164 = vmul.f32 %v149, %v156
      %v165 = vmul.f32 %v117, %v117
      %v166 = vmul.f32 %v118, %v118
      %v167 = vmul.f32 %v119, %v119
      %v168 = vmul.f32 %v120, %v120
      %v169 = vmul.f32 %v121, %v121
      %v170 = vmul.f32 %v122, %v122
      %v171 = vmul.f32 %v123, %v123
      %v172 = vmul.f32 %v124, %v124
      %v173 = vsel %vm125, %v165, 0.0
      %174 = vadd.xlane.f32.xlu0 %v173
      %v175 = vpop.xlane.xlu0 %174
      %v176 = vsel %vm125, %v166, 0.0
      %177 = vadd.xlane.f32.xlu0 %v176
      %v178 = vpop.xlane.xlu0 %177
      %v179 = vsel %vm125, %v167, 0.0
      %180 = vadd.xlane.f32.xlu0 %v179
      %v181 = vpop.xlane.xlu0 %180
      %v182 = vsel %vm125, %v168, 0.0
      %183 = vadd.xlane.f32.xlu0 %v182
      %v184 = vpop.xlane.xlu0 %183
      %v185 = vsel %vm125, %v169, 0.0
      %186 = vadd.xlane.f32.xlu0 %v185
      %v187 = vpop.xlane.xlu0 %186
      %v188 = vsel %vm125, %v170, 0.0
      %189 = vadd.xlane.f32.xlu0 %v188
      %v190 = vpop.xlane.xlu0 %189
      %v191 = vsel %vm125, %v171, 0.0
      %192 = vadd.xlane.f32.xlu0 %v191
      %v193 = vpop.xlane.xlu0 %192
      %v194 = vsel %vm125, %v172, 0.0
      %195 = vadd.xlane.f32.xlu0 %v194
      %v196 = vpop.xlane.xlu0 %195
      %v197 = vmul.f32 %v175, %v156
      %v198 = vmul.f32 %v178, %v156
      %v199 = vmul.f32 %v181, %v156
      %v200 = vmul.f32 %v184, %v156
      %v201 = vmul.f32 %v187, %v156
      %v202 = vmul.f32 %v190, %v156
      %v203 = vmul.f32 %v193, %v156
      %v204 = vmul.f32 %v196, %v156
      %v205 = vmul.f32 %v157, %v157
      %v206 = vmul.f32 %v158, %v158
      %v207 = vmul.f32 %v159, %v159
      %v208 = vmul.f32 %v160, %v160
      %v209 = vmul.f32 %v161, %v161
      %v210 = vmul.f32 %v162, %v162
      %v211 = vmul.f32 %v163, %v163
      %v212 = vmul.f32 %v164, %v164
      %v213 = vsub.f32 %v197, %v205
      %v214 = vsub.f32 %v198, %v206
      %v215 = vsub.f32 %v199, %v207
      %v216 = vsub.f32 %v200, %v208
      %v217 = vsub.f32 %v201, %v209
      %v218 = vsub.f32 %v202, %v210
      %v219 = vsub.f32 %v203, %v211
      %v220 = vsub.f32 %v204, %v212
      %v221 = vsub.f32 %v117, %v157
      %v222 = vsub.f32 %v118, %v158
      %v223 = vsub.f32 %v119, %v159
      %v224 = vsub.f32 %v120, %v160
      %v225 = vsub.f32 %v121, %v161
      %v226 = vsub.f32 %v122, %v162
      %v227 = vsub.f32 %v123, %v163
      %v228 = vsub.f32 %v124, %v164
      %v229 = vadd.f32 %v213, 1e-05
      %v230 = vadd.f32 %v214, 1e-05
      %v231 = vadd.f32 %v215, 1e-05
      %v232 = vadd.f32 %v216, 1e-05
      %v233 = vadd.f32 %v217, 1e-05
      %v234 = vadd.f32 %v218, 1e-05
      %v235 = vadd.f32 %v219, 1e-05
      %v236 = vadd.f32 %v220, 1e-05
      %v237 = vrsqrt.pop %v229
      %v238 = vmul.f32 %v237, %v229
      %v239 = vmul.f32 %v238, %v237
      %v240 = vmul.f32 0.5, %v239
      %v241 = vsub.f32 1.5, %v240
      %v242 = vmul.f32 %v237, %v241
      %vm243 = vweird.f32 %v229
      %vm244 = vweird.f32 %v237
      %vm245 = vmor %vm243, %vm244
      %v246 = vsel %vm245, %v237, %v242
      %v247 = vrsqrt.pop %v230
      %v248 = vmul.f32 %v247, %v230
      %v249 = vmul.f32 %v248, %v247
      %v250 = vmul.f32 0.5, %v249
      %v251 = vsub.f32 1.5, %v250
      %v252 = vmul.f32 %v247, %v251
      %vm253 = vweird.f32 %v230
      %vm254 = vweird.f32 %v247
      %vm255 = vmor %vm253, %vm254
      %v256 = vsel %vm255, %v247, %v252
      %v257 = vrsqrt.pop %v231
      %v258 = vmul.f32 %v257, %v231
      %v259 = vmul.f32 %v258, %v257
      %v260 = vmul.f32 0.5, %v259
      %v261 = vsub.f32 1.5, %v260
      %v262 = vmul.f32 %v257, %v261
      %vm263 = vweird.f32 %v231
      %vm264 = vweird.f32 %v257
      %vm265 = vmor %vm263, %vm264
      %v266 = vsel %vm265, %v257, %v262
      %v267 = vrsqrt.pop %v232
      %v268 = vmul.f32 %v267, %v232
      %v269 = vmul.f32 %v268, %v267
      %v270 = vmul.f32 0.5, %v269
      %v271 = vsub.f32 1.5, %v270
      %v272 = vmul.f32 %v267, %v271
      %vm273 = vweird.f32 %v232
      %vm274 = vweird.f32 %v267
      %vm275 = vmor %vm273, %vm274
      %v276 = vsel %vm275, %v267, %v272
      %v277 = vrsqrt.pop %v233
      %v278 = vmul.f32 %v277, %v233
      %v279 = vmul.f32 %v278, %v277
      %v280 = vmul.f32 0.5, %v279
      %v281 = vsub.f32 1.5, %v280
      %v282 = vmul.f32 %v277, %v281
      %vm283 = vweird.f32 %v233
      %vm284 = vweird.f32 %v277
      %vm285 = vmor %vm283, %vm284
      %v286 = vsel %vm285, %v277, %v282
      %v287 = vrsqrt.pop %v234
      %v288 = vmul.f32 %v287, %v234
      %v289 = vmul.f32 %v288, %v287
      %v290 = vmul.f32 0.5, %v289
      %v291 = vsub.f32 1.5, %v290
      %v292 = vmul.f32 %v287, %v291
      %vm293 = vweird.f32 %v234
      %vm294 = vweird.f32 %v287
      %vm295 = vmor %vm293, %vm294
      %v296 = vsel %vm295, %v287, %v292
      %v297 = vrsqrt.pop %v235
      %v298 = vmul.f32 %v297, %v235
      %v299 = vmul.f32 %v298, %v297
      %v300 = vmul.f32 0.5, %v299
      %v301 = vsub.f32 1.5, %v300
      %v302 = vmul.f32 %v297, %v301
      %vm303 = vweird.f32 %v235
      %vm304 = vweird.f32 %v297
      %vm305 = vmor %vm303, %vm304
      %v306 = vsel %vm305, %v297, %v302
      %v307 = vrsqrt.pop %v236
      %v308 = vmul.f32 %v307, %v236
      %v309 = vmul.f32 %v308, %v307
      %v310 = vmul.f32 0.5, %v309
      %v311 = vsub.f32 1.5, %v310
      %v312 = vmul.f32 %v307, %v311
      %vm313 = vweird.f32 %v236
      %vm314 = vweird.f32 %v307
      %vm315 = vmor %vm313, %vm314
      %v316 = vsel %vm315, %v307, %v312
      %v317 = vmul.f32 %v221, %v246
      %v318 = vmul.f32 %v222, %v256
      %v319 = vmul.f32 %v223, %v266
      %v320 = vmul.f32 %v224, %v276
      %v321 = vmul.f32 %v225, %v286
      %v322 = vmul.f32 %v226, %v296
      %v323 = vmul.f32 %v227, %v306
      %v324 = vmul.f32 %v228, %v316
      %v325 = vmax.f32 %v317, 0.0
      %v326 = vmax.f32 %v318, 0.0
      %v327 = vmax.f32 %v319, 0.0
      %v328 = vmax.f32 %v320, 0.0
      %v329 = vmax.f32 %v321, 0.0
      %v330 = vmax.f32 %v322, 0.0
      %v331 = vmax.f32 %v323, 0.0
      %v332 = vmax.f32 %v324, 0.0
      %v333 = vpack.c.bf16 %v325, %v325
      %v334 = vpack.c.bf16 %v326, %v326
      %v335 = vpack.c.bf16 %v327, %v327
      %v336 = vpack.c.bf16 %v328, %v328
      %v337 = vpack.c.bf16 %v329, %v329
      %v338 = vpack.c.bf16 %v330, %v330
      %v339 = vpack.c.bf16 %v331, %v331
      %v340 = vpack.c.bf16 %v332, %v332
      %vm341 = vcmask 125952
      %342 = vst.msk [vmem:[%s116] sm:$0xf] %vm341, %v333
      %343 = vst.msk [vmem:[%s116 + $0x4] sm:$0xf] %vm341, %v334
      %344 = vst.msk [vmem:[%s116 + $0x8] sm:$0xf] %vm341, %v335
      %345 = vst.msk [vmem:[%s116 + $0xc] sm:$0xf] %vm341, %v336
      %346 = vst.msk [vmem:[%s116 + $0x10] sm:$0xf] %vm341, %v337
      %347 = vst.msk [vmem:[%s116 + $0x14] sm:$0xf] %vm341, %v338
      %348 = vst.msk [vmem:[%s116 + $0x18] sm:$0xf] %vm341, %v339
      %349 = vst.msk [vmem:[%s116 + $0x1c] sm:$0xf] %vm341, %v340
      %p350 = scmp.lt.s32.totalorder %s12, 1
      %s351 = scalar_select %p350, %s12, 1
      %s352 = smul.addr %s351, 8
      %s353 = smul.addr %s352, 4
      %s354 = scalar_lea.vmem %s1, %s353
      // Predicated region
      $region25: #{netg_forward.5} parent=23 // pred_check
        %p355 = pneg %p56
      $region26: #{netg_forward.5} parent=23 // pred_check_branch
        %357 = sbr.rel (%p355) target = $region28
      $region27: #{netg_forward.5} parent=23 // pred_region
        _
      $region28: #{netg_forward.5} parent=23 // pred_fallthru
        _
    $region24: #{netg_forward.5} parent=5 // pred_fallthru
      _
    %p358 = scmp.le.s32.totalorder 2, %s7
    // Predicated region
    $region29: #{netg_forward.5} parent=5 // pred_check
      %p359 = pneg %p358
    $region30: #{netg_forward.5} parent=5 // pred_check_branch
      %361 = sbr.rel (%p359) target = $region32
    $region31: #{netg_forward.5} parent=5 // pred_region
      %s362 = ssub.s32 %s7, 2
      // Predicated region
      $region33: #{netg_forward.5} parent=31 // pred_check
        %p363 = pneg %p62
      $region34: #{netg_forward.5} parent=31 // pred_check_branch
        %365 = sbr.rel (%p363) target = $region36
      $region35: #{netg_forward.5} parent=31 // pred_region
        %p366 = scmp.lt.s32.totalorder %s13, 1
        %s367 = scalar_select %p366, %s13, 1
        %s368 = smul.addr %s367, 8
        %s369 = smul.addr %s368, 4
        %s370 = scalar_lea.vmem %s1, %s369
      $region36: #{netg_forward.5} parent=31 // pred_fallthru
        _
    $region32: #{netg_forward.5} parent=5 // pred_fallthru
      _
  $region6: #{netg_forward.5} parent=0 // loop_footer
    %s11 = sadd.s32 1, %s7
  $region7: #{netg_forward.5} parent=0 // loop_footer_branch
    %6 = sbr.rel target = $region3
  $region8: #{netg_forward.5} parent=0 // loop_exit
    _

// kernel: netg_forward.6
$region0: #{netg_forward.6}
  #allocation0 [shape = 'u32[]', space=smem, size = 0x4, offset = 0x4, fixed_abs, tag = 'smem constant byte address 0x4 - core index']
  #allocation1 [shape = 'u32[72,128]{1,0:T(1,128)}', space=vmem, size = 0x9000, scoped, tag = 'internal scratch']
  %s0 = inlined_call_operand.vmem [shape: bf16[2,576,36], index: 0, kind: input, shape index: {}]
  %s1 = inlined_call_operand.vmem [shape: bf16[128,576], index: 1, kind: input, shape index: {}]
  %s2 = inlined_call_operand.vmem [shape: bf16[2,128,36], index: 2, kind: output, shape index: {}]
  %s3 = sld [smem:[#allocation0]]
  $region41: #{netg_forward.6} parent=0
    _
  %s5 = ssub.s32 1, %s3
  %s6 = scalar_select 0, %s5, %s3
  loop: start=0, step=1, limit=4
  $region2: #{netg_forward.6} parent=0 // loop_pre_header
    _
  $region3: #{netg_forward.6} parent=0 // loop_header
    %s8 = sphi 0, %s12
    %p9 = scmp.ge.s32.totalorder %s8, 4
    %s18 = sphi 0, %s20
    %s21 = sphi 0, %s18
    %s22 = sphi 0, %s21
    %s38 = sphi 0, %s22
    %s42 = sphi 0, %s42
    %s44 = sphi 0, %s42
    %s45 = sphi 0, %s44
    %s59 = sphi 0, %s45
    %s65 = sphi 0, %s67
    %s68 = sphi 0, %s65
    %s69 = sphi 0, %s68
    %s85 = sphi 0, %s69
  $region4: #{netg_forward.6} parent=0 // loop_header_branch
    %11 = sbr.rel (%p9) target = $region8
  $region5: #{netg_forward.6} parent=0 // loop_body
    %s13 = ssub.s32 %s8, 1
    %s14 = ssub.s32 %s8, 2
    %s15 = sadd.s32 %s8, 1
    %s16 = ssub.s32 %s8, %s15
    %p17 = scmp.eq.s32.totalorder %s16, 0
    %s19 = sadd.s32 %s18, 1
    %s20 = scalar_select %p17, %s18, %s19
    %p23 = pneg %p17
    %p24 = scmp.eq.s32.totalorder %s8, 1
    %p25 = por %p23, %p24
    %p26 = scmp.ne.s32.totalorder %s18, %s21
    %p27 = scmp.eq.s32.totalorder %s8, 0
    %p28 = por %p26, %p27
    %p29 = scmp.ne.s32.totalorder %s18, %s21
    %p30 = scmp.eq.s32.totalorder %s13, 1
    %p31 = por %p29, %p30
    %p32 = scmp.ne.s32.totalorder %s21, %s22
    %p33 = scmp.eq.s32.totalorder %s13, 0
    %p34 = por %p32, %p33
    %p35 = scmp.ne.s32.totalorder %s21, %s22
    %p36 = scmp.eq.s32.totalorder %s14, 1
    %p37 = por %p35, %p36
    %p39 = scmp.ne.s32.totalorder %s22, %s38
    %p40 = scmp.eq.s32.totalorder %s14, 0
    %p41 = por %p39, %p40
    %s43 = sadd.s32 %s42, 1
    %p46 = scmp.eq.s32.totalorder %s8, 1
    %p47 = scmp.ne.s32.totalorder %s42, %s44
    %p48 = scmp.eq.s32.totalorder %s8, 0
    %p49 = por %p47, %p48
    %p50 = scmp.ne.s32.totalorder %s42, %s44
    %p51 = scmp.eq.s32.totalorder %s13, 1
    %p52 = por %p50, %p51
    %p53 = scmp.ne.s32.totalorder %s44, %s45
    %p54 = scmp.eq.s32.totalorder %s13, 0
    %p55 = por %p53, %p54
    %p56 = scmp.ne.s32.totalorder %s44, %s45
    %p57 = scmp.eq.s32.totalorder %s14, 1
    %p58 = por %p56, %p57
    %p60 = scmp.ne.s32.totalorder %s45, %s59
    %p61 = scmp.eq.s32.totalorder %s14, 0
    %p62 = por %p60, %p61
    %s63 = ssub.s32 %s8, %s15
    %p64 = scmp.eq.s32.totalorder %s63, 0
    %s66 = sadd.s32 %s65, 1
    %s67 = scalar_select %p64, %s65, %s66
    %p70 = pneg %p64
    %p71 = scmp.eq.s32.totalorder %s8, 1
    %p72 = por %p70, %p71
    %p73 = scmp.ne.s32.totalorder %s65, %s68
    %p74 = scmp.eq.s32.totalorder %s8, 0
    %p75 = por %p73, %p74
    %p76 = scmp.ne.s32.totalorder %s65, %s68
    %p77 = scmp.eq.s32.totalorder %s13, 1
    %p78 = por %p76, %p77
    %p79 = scmp.ne.s32.totalorder %s68, %s69
    %p80 = scmp.eq.s32.totalorder %s13, 0
    %p81 = por %p79, %p80
    %p82 = scmp.ne.s32.totalorder %s68, %s69
    %p83 = scmp.eq.s32.totalorder %s14, 1
    %p84 = por %p82, %p83
    %p86 = scmp.ne.s32.totalorder %s69, %s85
    %p87 = scmp.eq.s32.totalorder %s14, 0
    %p88 = por %p86, %p87
    %p89 = scmp.le.s32.totalorder 1, %s8
    %p90 = scmp.lt.s32.totalorder %s8, 3
    %p91 = pnand %p89, %p90
    %p92 = pneg %p91
    // Predicated region
    $region9: #{netg_forward.6} parent=5 // pred_check
      _
    $region10: #{netg_forward.6} parent=5 // pred_check_branch
      %94 = sbr.rel (%p91) target = $region12
    $region11: #{netg_forward.6} parent=5 // pred_region
      %s95 = ssub.s32 %s8, 1
      // Predicated region
      $region13: #{netg_forward.6} parent=11 // pred_check
        %p96 = pneg %p55
      $region14: #{netg_forward.6} parent=11 // pred_check_branch
        %98 = sbr.rel (%p96) target = $region16
      $region15: #{netg_forward.6} parent=11 // pred_region
        _
      $region16: #{netg_forward.6} parent=11 // pred_fallthru
        _
    $region12: #{netg_forward.6} parent=5 // pred_fallthru
      _
    %p99 = scmp.lt.s32.totalorder %s8, 2
    // Predicated region
    $region17: #{netg_forward.6} parent=5 // pred_check
      %p100 = pneg %p99
    $region18: #{netg_forward.6} parent=5 // pred_check_branch
      %102 = sbr.rel (%p100) target = $region20
    $region19: #{netg_forward.6} parent=5 // pred_region
      // Predicated region
      $region21: #{netg_forward.6} parent=19 // pred_check
        %p103 = pneg %p28
      $region22: #{netg_forward.6} parent=19 // pred_check_branch
        %105 = sbr.rel (%p103) target = $region24
      $region23: #{netg_forward.6} parent=19 // pred_region
        %p106 = scmp.lt.s32.totalorder %s8, 1
        %s107 = scalar_select %p106, %s8, 1
        %s108 = smul.addr %s107, 72
        %s109 = smul.addr %s108, 4
        %s110 = scalar_lea.vmem %s0, %s109
      $region24: #{netg_forward.6} parent=19 // pred_fallthru
        _
    $region20: #{netg_forward.6} parent=5 // pred_fallthru
      _
    %p111 = scmp.le.s32.totalorder 1, %s8
    %p112 = scmp.lt.s32.totalorder %s8, 3
    %p113 = pnand %p111, %p112
    %p114 = pneg %p113
    // Predicated region
    $region25: #{netg_forward.6} parent=5 // pred_check
      _
    $region26: #{netg_forward.6} parent=5 // pred_check_branch
      %116 = sbr.rel (%p113) target = $region28
    $region27: #{netg_forward.6} parent=5 // pred_region
      %s117 = ssub.s32 %s8, 1
      %p118 = scmp.lt.s32.totalorder %s13, 1
      %s119 = scalar_select %p118, %s13, 1
      %s120 = smul.addr %s119, 72
      %s121 = smul.addr %s120, 4
      %s122 = scalar_lea.vmem %s0, %s121
      %p123 = pneg %p34
      %p124 = pneg %p31
      %p125 = pneg %p55
      %p126 = pneg %p52
      %p127 = pneg %p81
      %p128 = pneg %p78
      %p129 = scmp.lt.s32.totalorder %s13, 1
      %s130 = scalar_select %p129, %s13, 1
      %s131 = smul.addr %s130, 16
      %s132 = smul.addr %s131, 4
      %s133 = scalar_lea.vmem %s2, %s132
      %p134 = scmp.lt.s32.totalorder %s13, 1
      %s135 = scalar_select %p134, %s13, 1
      %s136 = smul.addr %s135, 72
      %s137 = smul.addr %s136, 4
      %s138 = scalar_lea.vmem %s0, %s137
      %p139 = scmp.lt.s32.totalorder %s13, 1
      %s140 = scalar_select %p139, %s13, 1
      %s141 = smul.addr %s140, 16
      %s142 = smul.addr %s141, 4
      %s143 = scalar_lea.vmem %s2, %s142
      %v145 = vld [vmem:[%s1] sm:$0xff]
      %v146 = vld [vmem:[%s1 + $0x8] sm:$0xff]
      %v147 = vld [vmem:[%s1 + $0x10] sm:$0xf]
      %v148 = vld [vmem:[%s1 + $0x14] sm:$0xff]
      %v149 = vld [vmem:[%s1 + $0x1c] sm:$0xff]
      %v150 = vld [vmem:[%s1 + $0x24] sm:$0xf]
      %v151 = vld [vmem:[%s1 + $0x28] sm:$0xff]
      %v152 = vld [vmem:[%s1 + $0x30] sm:$0xff]
      %v153 = vld [vmem:[%s1 + $0x38] sm:$0xf]
      %v154 = vld [vmem:[%s1 + $0x3c] sm:$0xff]
      %v155 = vld [vmem:[%s1 + $0x44] sm:$0xff]
      %v156 = vld [vmem:[%s1 + $0x4c] sm:$0xf]
      %v157 = vld [vmem:[%s1 + $0x50] sm:$0xff]
      %v158 = vld [vmem:[%s1 + $0x58] sm:$0xff]
      %v159 = vld [vmem:[%s1 + $0x60] sm:$0xf]
      %v160 = vld [vmem:[%s1 + $0x64] sm:$0xff]
      %v161 = vld [vmem:[%s1 + $0x6c] sm:$0xff]
      %v162 = vld [vmem:[%s1 + $0x74] sm:$0xf]
      %v163 = vld [vmem:[%s1 + $0x78] sm:$0xff]
      %v164 = vld [vmem:[%s1 + $0x80] sm:$0xff]
      %v165 = vld [vmem:[%s1 + $0x88] sm:$0xf]
      %v166 = vld [vmem:[%s1 + $0x8c] sm:$0xff]
      %v167 = vld [vmem:[%s1 + $0x94] sm:$0xff]
      %v168 = vld [vmem:[%s1 + $0x9c] sm:$0xf]
      %v169 = vld [vmem:[%s1 + $0xa0] sm:$0xff]
      %v170 = vld [vmem:[%s1 + $0xa8] sm:$0xff]
      %v171 = vld [vmem:[%s1 + $0xb0] sm:$0xf]
      %v172 = vld [vmem:[%s1 + $0xb4] sm:$0xff]
      %v173 = vld [vmem:[%s1 + $0xbc] sm:$0xff]
      %v174 = vld [vmem:[%s1 + $0xc4] sm:$0xf]
      %v175 = vld [vmem:[%s1 + $0xc8] sm:$0xff]
      %v176 = vld [vmem:[%s1 + $0xd0] sm:$0xff]
      %v177 = vld [vmem:[%s1 + $0xd8] sm:$0xf]
      %v178 = vld [vmem:[%s1 + $0xdc] sm:$0xff]
      %v179 = vld [vmem:[%s1 + $0xe4] sm:$0xff]
      %v180 = vld [vmem:[%s1 + $0xec] sm:$0xf]
      %v181 = vld [vmem:[%s1 + $0xf0] sm:$0xff]
      %v182 = vld [vmem:[%s1 + $0xf8] sm:$0xff]
      %v183 = vld [vmem:[%s1 + $0x100] sm:$0xf]
      %v184 = vld [vmem:[%s1 + $0x104] sm:$0xff]
      %v185 = vld [vmem:[%s1 + $0x10c] sm:$0xff]
      %v186 = vld [vmem:[%s1 + $0x114] sm:$0xf]
      %v187 = vld [vmem:[%s1 + $0x118] sm:$0xff]
      %v188 = vld [vmem:[%s1 + $0x120] sm:$0xff]
      %v189 = vld [vmem:[%s1 + $0x128] sm:$0xf]
      %v190 = vld [vmem:[%s1 + $0x12c] sm:$0xff]
      %v191 = vld [vmem:[%s1 + $0x134] sm:$0xff]
      %v192 = vld [vmem:[%s1 + $0x13c] sm:$0xf]
      %v193 = vld [vmem:[%s138] sm:$0xf]
      %v194 = vld [vmem:[%s138 + $0x4] sm:$0xf]
      %v195 = vld [vmem:[%s138 + $0x8] sm:$0xf]
      %v196 = vld [vmem:[%s138 + $0xc] sm:$0xf]
      %v197 = vld [vmem:[%s138 + $0x10] sm:$0xf]
      %v198 = vld [vmem:[%s138 + $0x14] sm:$0xf]
      %v199 = vld [vmem:[%s138 + $0x18] sm:$0xf]
      %v200 = vld [vmem:[%s138 + $0x1c] sm:$0xf]
      %v201 = vld [vmem:[%s138 + $0x20] sm:$0xf]
      %v202 = vld [vmem:[%s138 + $0x24] sm:$0xf]
      %v203 = vld [vmem:[%s138 + $0x28] sm:$0xf]
      %v204 = vld [vmem:[%s138 + $0x2c] sm:$0xf]
      %v205 = vld [vmem:[%s138 + $0x30] sm:$0xf]
      %v206 = vld [vmem:[%s138 + $0x34] sm:$0xf]
      %v207 = vld [vmem:[%s138 + $0x38] sm:$0xf]
      %v208 = vld [vmem:[%s138 + $0x3c] sm:$0xf]
      %v209 = vld [vmem:[%s138 + $0x40] sm:$0xf]
      %v210 = vld [vmem:[%s138 + $0x44] sm:$0xf]
      %v211 = vld [vmem:[%s138 + $0x48] sm:$0xf]
      %v212 = vld [vmem:[%s138 + $0x4c] sm:$0xf]
      %v213 = vld [vmem:[%s138 + $0x50] sm:$0xf]
      %v214 = vld [vmem:[%s138 + $0x54] sm:$0xf]
      %v215 = vld [vmem:[%s138 + $0x58] sm:$0xf]
      %v216 = vld [vmem:[%s138 + $0x5c] sm:$0xf]
      %v217 = vld [vmem:[%s138 + $0x60] sm:$0xf]
      %v218 = vld [vmem:[%s138 + $0x64] sm:$0xf]
      %v219 = vld [vmem:[%s138 + $0x68] sm:$0xf]
      %v220 = vld [vmem:[%s138 + $0x6c] sm:$0xf]
      %v221 = vld [vmem:[%s138 + $0x70] sm:$0xf]
      %v222 = vld [vmem:[%s138 + $0x74] sm:$0xf]
      %v223 = vld [vmem:[%s138 + $0x78] sm:$0xf]
      %v224 = vld [vmem:[%s138 + $0x7c] sm:$0xf]
      %v225 = vld [vmem:[%s138 + $0x80] sm:$0xf]
      %v226 = vld [vmem:[%s138 + $0x84] sm:$0xf]
      %v227 = vld [vmem:[%s138 + $0x88] sm:$0xf]
      %v228 = vld [vmem:[%s138 + $0x8c] sm:$0xf]
      %v229 = vld [vmem:[%s138 + $0x90] sm:$0xf]
      %v230 = vld [vmem:[%s138 + $0x94] sm:$0xf]
      %v231 = vld [vmem:[%s138 + $0x98] sm:$0xf]
      %v232 = vld [vmem:[%s138 + $0x9c] sm:$0xf]
      %v233 = vld [vmem:[%s138 + $0xa0] sm:$0xf]
      %v234 = vld [vmem:[%s138 + $0xa4] sm:$0xf]
      %v235 = vld [vmem:[%s138 + $0xa8] sm:$0xf]
      %v236 = vld [vmem:[%s138 + $0xac] sm:$0xf]
      %v237 = vld [vmem:[%s138 + $0xb0] sm:$0xf]
      %v238 = vld [vmem:[%s138 + $0xb4] sm:$0xf]
      %v239 = vld [vmem:[%s138 + $0xb8] sm:$0xf]
      %v240 = vld [vmem:[%s138 + $0xbc] sm:$0xf]
      %v241 = vld [vmem:[%s138 + $0xc0] sm:$0xf]
      %v242 = vld [vmem:[%s138 + $0xc4] sm:$0xf]
      %v243 = vld [vmem:[%s138 + $0xc8] sm:$0xf]
      %v244 = vld [vmem:[%s138 + $0xcc] sm:$0xf]
      %v245 = vld [vmem:[%s138 + $0xd0] sm:$0xf]
      %v246 = vld [vmem:[%s138 + $0xd4] sm:$0xf]
      %v247 = vld [vmem:[%s138 + $0xd8] sm:$0xf]
      %v248 = vld [vmem:[%s138 + $0xdc] sm:$0xf]
      %v249 = vld [vmem:[%s138 + $0xe0] sm:$0xf]
      %v250 = vld [vmem:[%s138 + $0xe4] sm:$0xf]
      %v251 = vld [vmem:[%s138 + $0xe8] sm:$0xf]
      %v252 = vld [vmem:[%s138 + $0xec] sm:$0xf]
      %v253 = vld [vmem:[%s138 + $0xf0] sm:$0xf]
      %v254 = vld [vmem:[%s138 + $0xf4] sm:$0xf]
      %v255 = vld [vmem:[%s138 + $0xf8] sm:$0xf]
      %v256 = vld [vmem:[%s138 + $0xfc] sm:$0xf]
      %v257 = vld [vmem:[%s138 + $0x100] sm:$0xf]
      %v258 = vld [vmem:[%s138 + $0x104] sm:$0xf]
      %v259 = vld [vmem:[%s138 + $0x108] sm:$0xf]
      %v260 = vld [vmem:[%s138 + $0x10c] sm:$0xf]
      %v261 = vld [vmem:[%s138 + $0x110] sm:$0xf]
      %v262 = vld [vmem:[%s138 + $0x114] sm:$0xf]
      %v263 = vld [vmem:[%s138 + $0x118] sm:$0xf]
      %v264 = vld [vmem:[%s138 + $0x11c] sm:$0xf]
      %v313 = vunpack.c.l.b16 %v145
      %v314 = vunpack.c.h.b16 %v145
      %v315 = vunpack.c.l.b16 %v146
      %v316 = vunpack.c.h.b16 %v146
      %v317 = vunpack.c.l.b16 %v147
      %v318 = vunpack.c.l.b16 %v148
      %v319 = vunpack.c.h.b16 %v148
      %v320 = vunpack.c.l.b16 %v149
      %v321 = vunpack.c.h.b16 %v149
      %v322 = vunpack.c.l.b16 %v150
      %v323 = vunpack.c.l.b16 %v151
      %v324 = vunpack.c.h.b16 %v151
      %v325 = vunpack.c.l.b16 %v152
      %v326 = vunpack.c.h.b16 %v152
      %v327 = vunpack.c.l.b16 %v153
      %v328 = vunpack.c.l.b16 %v154
      %v329 = vunpack.c.h.b16 %v154
      %v330 = vunpack.c.l.b16 %v155
      %v331 = vunpack.c.h.b16 %v155
      %v332 = vunpack.c.l.b16 %v156
      %v333 = vunpack.c.l.b16 %v157
      %v334 = vunpack.c.h.b16 %v157
      %v335 = vunpack.c.l.b16 %v158
      %v336 = vunpack.c.h.b16 %v158
      %v337 = vunpack.c.l.b16 %v159
      %v338 = vunpack.c.l.b16 %v160
      %v339 = vunpack.c.h.b16 %v160
      %v340 = vunpack.c.l.b16 %v161
      %v341 = vunpack.c.h.b16 %v161
      %v342 = vunpack.c.l.b16 %v162
      %v343 = vunpack.c.l.b16 %v163
      %v344 = vunpack.c.h.b16 %v163
      %v345 = vunpack.c.l.b16 %v164
      %v346 = vunpack.c.h.b16 %v164
      %v347 = vunpack.c.l.b16 %v165
      %v348 = vunpack.c.l.b16 %v166
      %v349 = vunpack.c.h.b16 %v166
      %v350 = vunpack.c.l.b16 %v167
      %v351 = vunpack.c.h.b16 %v167
      %v352 = vunpack.c.l.b16 %v168
      %v353 = vunpack.c.l.b16 %v169
      %v354 = vunpack.c.h.b16 %v169
      %v355 = vunpack.c.l.b16 %v170
      %v356 = vunpack.c.h.b16 %v170
      %v357 = vunpack.c.l.b16 %v171
      %v358 = vunpack.c.l.b16 %v172
      %v359 = vunpack.c.h.b16 %v172
      %v360 = vunpack.c.l.b16 %v173
      %v361 = vunpack.c.h.b16 %v173
      %v362 = vunpack.c.l.b16 %v174
      %v363 = vunpack.c.l.b16 %v175
      %v364 = vunpack.c.h.b16 %v175
      %v365 = vunpack.c.l.b16 %v176
      %v366 = vunpack.c.h.b16 %v176
      %v367 = vunpack.c.l.b16 %v177
      %v368 = vunpack.c.l.b16 %v178
      %v369 = vunpack.c.h.b16 %v178
      %v370 = vunpack.c.l.b16 %v179
      %v371 = vunpack.c.h.b16 %v179
      %v372 = vunpack.c.l.b16 %v180
      %v373 = vunpack.c.l.b16 %v181
      %v374 = vunpack.c.h.b16 %v181
      %v375 = vunpack.c.l.b16 %v182
      %v376 = vunpack.c.h.b16 %v182
      %v377 = vunpack.c.l.b16 %v183
      %v378 = vunpack.c.l.b16 %v184
      %v379 = vunpack.c.h.b16 %v184
      %v380 = vunpack.c.l.b16 %v185
      %v381 = vunpack.c.h.b16 %v185
      %v382 = vunpack.c.l.b16 %v186
      %v383 = vunpack.c.l.b16 %v187
      %v384 = vunpack.c.h.b16 %v187
      %v385 = vunpack.c.l.b16 %v188
      %v386 = vunpack.c.h.b16 %v188
      %v387 = vunpack.c.l.b16 %v189
      %v388 = vunpack.c.l.b16 %v190
      %v389 = vunpack.c.h.b16 %v190
      %v390 = vunpack.c.l.b16 %v191
      %v391 = vunpack.c.h.b16 %v191
      %v392 = vunpack.c.l.b16 %v192
      %v393 = vpack.c.b16 %v318, %v313
      %v394 = vpack.c.b16 %v319, %v314
      %v395 = vpack.c.b16 %v320, %v315
      %v396 = vpack.c.b16 %v321, %v316
      %v397 = vpack.c.b16 %v322, %v317
      %v398 = vpack.c.b16 %v328, %v323
      %v399 = vpack.c.b16 %v329, %v324
      %v400 = vpack.c.b16 %v330, %v325
      %v401 = vpack.c.b16 %v331, %v326
      %v402 = vpack.c.b16 %v332, %v327
      %v403 = vpack.c.b16 %v338, %v333
      %v404 = vpack.c.b16 %v339, %v334
      %v405 = vpack.c.b16 %v340, %v335
      %v406 = vpack.c.b16 %v341, %v336
      %v407 = vpack.c.b16 %v342, %v337
      %v408 = vpack.c.b16 %v348, %v343
      %v409 = vpack.c.b16 %v349, %v344
      %v410 = vpack.c.b16 %v350, %v345
      %v411 = vpack.c.b16 %v351, %v346
      %v412 = vpack.c.b16 %v352, %v347
      %v413 = vpack.c.b16 %v358, %v353
      %v414 = vpack.c.b16 %v359, %v354
      %v415 = vpack.c.b16 %v360, %v355
      %v416 = vpack.c.b16 %v361, %v356
      %v417 = vpack.c.b16 %v362, %v357
      %v418 = vpack.c.b16 %v368, %v363
      %v419 = vpack.c.b16 %v369, %v364
      %v420 = vpack.c.b16 %v370, %v365
      %v421 = vpack.c.b16 %v371, %v366
      %v422 = vpack.c.b16 %v372, %v367
      %v423 = vpack.c.b16 %v378, %v373
      %v424 = vpack.c.b16 %v379, %v374
      %v425 = vpack.c.b16 %v380, %v375
      %v426 = vpack.c.b16 %v381, %v376
      %v427 = vpack.c.b16 %v382, %v377
      %v428 = vpack.c.b16 %v388, %v383
      %v429 = vpack.c.b16 %v389, %v384
      %v430 = vpack.c.b16 %v390, %v385
      %v431 = vpack.c.b16 %v391, %v386
      %v432 = vpack.c.b16 %v392, %v387
      %v537 = vunpack.c.l.b16 %v193
      %v538 = vunpack.c.l.b16 %v194
      %v539 = vunpack.c.l.b16 %v195
      %v540 = vunpack.c.l.b16 %v196
      %v541 = vunpack.c.l.b16 %v197
      %v542 = vunpack.c.l.b16 %v198
      %v543 = vunpack.c.l.b16 %v199
      %v544 = vunpack.c.l.b16 %v200
      %v545 = vunpack.c.l.b16 %v201
      %v546 = vunpack.c.l.b16 %v202
      %v547 = vunpack.c.l.b16 %v203
      %v548 = vunpack.c.l.b16 %v204
      %v549 = vunpack.c.l.b16 %v205
      %v550 = vunpack.c.l.b16 %v206
      %v551 = vunpack.c.l.b16 %v207
      %v552 = vunpack.c.l.b16 %v208
      %v553 = vunpack.c.l.b16 %v209
      %v554 = vunpack.c.l.b16 %v210
      %v555 = vunpack.c.l.b16 %v211
      %v556 = vunpack.c.l.b16 %v212
      %v557 = vunpack.c.l.b16 %v213
      %v558 = vunpack.c.l.b16 %v214
      %v559 = vunpack.c.l.b16 %v215
      %v560 = vunpack.c.l.b16 %v216
      %v561 = vunpack.c.l.b16 %v217
      %v562 = vunpack.c.l.b16 %v218
      %v563 = vunpack.c.l.b16 %v219
      %v564 = vunpack.c.l.b16 %v220
      %v565 = vunpack.c.l.b16 %v221
      %v566 = vunpack.c.l.b16 %v222
      %v567 = vunpack.c.l.b16 %v223
      %v568 = vunpack.c.l.b16 %v224
      %v569 = vunpack.c.l.b16 %v225
      %v570 = vunpack.c.l.b16 %v226
      %v571 = vunpack.c.l.b16 %v227
      %v572 = vunpack.c.l.b16 %v228
      %v573 = vunpack.c.l.b16 %v229
      %v574 = vunpack.c.l.b16 %v230
      %v575 = vunpack.c.l.b16 %v231
      %v576 = vunpack.c.l.b16 %v232
      %v577 = vunpack.c.l.b16 %v233
      %v578 = vunpack.c.l.b16 %v234
      %v579 = vunpack.c.l.b16 %v235
      %v580 = vunpack.c.l.b16 %v236
      %v581 = vunpack.c.l.b16 %v237
      %v582 = vunpack.c.l.b16 %v238
      %v583 = vunpack.c.l.b16 %v239
      %v584 = vunpack.c.l.b16 %v240
      %v585 = vunpack.c.l.b16 %v241
      %v586 = vunpack.c.l.b16 %v242
      %v587 = vunpack.c.l.b16 %v243
      %v588 = vunpack.c.l.b16 %v244
      %v589 = vunpack.c.l.b16 %v245
      %v590 = vunpack.c.l.b16 %v246
      %v591 = vunpack.c.l.b16 %v247
      %v592 = vunpack.c.l.b16 %v248
      %v593 = vunpack.c.l.b16 %v249
      %v594 = vunpack.c.l.b16 %v250
      %v595 = vunpack.c.l.b16 %v251
      %v596 = vunpack.c.l.b16 %v252
      %v597 = vunpack.c.l.b16 %v253
      %v598 = vunpack.c.l.b16 %v254
      %v599 = vunpack.c.l.b16 %v255
      %v600 = vunpack.c.l.b16 %v256
      %v601 = vunpack.c.l.b16 %v257
      %v602 = vunpack.c.l.b16 %v258
      %v603 = vunpack.c.l.b16 %v259
      %v604 = vunpack.c.l.b16 %v260
      %v605 = vunpack.c.l.b16 %v261
      %v606 = vunpack.c.l.b16 %v262
      %v607 = vunpack.c.l.b16 %v263
      %v608 = vunpack.c.l.b16 %v264
      %v609 = vpack.c.b16 %v538, %v537
      %v610 = vpack.c.b16 %v540, %v539
      %v611 = vpack.c.b16 %v542, %v541
      %v612 = vpack.c.b16 %v544, %v543
      %v613 = vpack.c.b16 %v546, %v545
      %v614 = vpack.c.b16 %v548, %v547
      %v615 = vpack.c.b16 %v550, %v549
      %v616 = vpack.c.b16 %v552, %v551
      %v617 = vpack.c.b16 %v554, %v553
      %v618 = vpack.c.b16 %v556, %v555
      %v619 = vpack.c.b16 %v558, %v557
      %v620 = vpack.c.b16 %v560, %v559
      %v621 = vpack.c.b16 %v562, %v561
      %v622 = vpack.c.b16 %v564, %v563
      %v623 = vpack.c.b16 %v566, %v565
      %v624 = vpack.c.b16 %v568, %v567
      %v625 = vpack.c.b16 %v570, %v569
      %v626 = vpack.c.b16 %v572, %v571
      %v627 = vpack.c.b16 %v574, %v573
      %v628 = vpack.c.b16 %v576, %v575
      %v629 = vpack.c.b16 %v578, %v577
      %v630 = vpack.c.b16 %v580, %v579
      %v631 = vpack.c.b16 %v582, %v581
      %v632 = vpack.c.b16 %v584, %v583
      %v633 = vpack.c.b16 %v586, %v585
      %v634 = vpack.c.b16 %v588, %v587
      %v635 = vpack.c.b16 %v590, %v589
      %v636 = vpack.c.b16 %v592, %v591
      %v637 = vpack.c.b16 %v594, %v593
      %v638 = vpack.c.b16 %v596, %v595
      %v639 = vpack.c.b16 %v598, %v597
      %v640 = vpack.c.b16 %v600, %v599
      %v641 = vpack.c.b16 %v602, %v601
      %v642 = vpack.c.b16 %v604, %v603
      %v643 = vpack.c.b16 %v606, %v605
      %v644 = vpack.c.b16 %v608, %v607
      %vm681 = vcmask 523264
      %v683 = vsel %vm681, %v397, 0
      %v686 = vsel %vm681, %v402, 0
      %v689 = vsel %vm681, %v407, 0
      %v692 = vsel %vm681, %v412, 0
      %v695 = vsel %vm681, %v417, 0
      %v698 = vsel %vm681, %v422, 0
      %v701 = vsel %vm681, %v427, 0
      %v704 = vsel %vm681, %v432, 0
      %706 = vmatpush.bf16.msra.mxu0 %v616
      %707 = vmatpush.bf16.msra.mxu0 %v615
      %708 = vmatpush.bf16.msra.mxu0 %v614
      %709 = vmatpush.bf16.msra.mxu0 %v613
      %710 = vmatpush.bf16.msra.mxu0 %v612
      %711 = vmatpush.bf16.msra.mxu0 %v611
      %712 = vmatpush.bf16.msra.mxu0 %v610
      %713 = vmatpush.bf16.msra.mxu0 %v609
      %714 = vmatmul.bf16.gmra.mxu0 %v393
      %v715 = vpop.f32.mrf.mxu0
      %v716 = vadd.f32 0.0, %v715
      %v717 = vpop.f32.mrf.mxu0
      %v718 = vadd.f32 0.0, %v717
      %719 = vmatmul.bf16.gmra.mxu0 %v398
      %v720 = vpop.f32.mrf.mxu0
      %v721 = vadd.f32 0.0, %v720
      %v722 = vpop.f32.mrf.mxu0
      %v723 = vadd.f32 0.0, %v722
      %724 = vmatmul.bf16.gmra.mxu0 %v403
      %v725 = vpop.f32.mrf.mxu0
      %v726 = vadd.f32 0.0, %v725
      %v727 = vpop.f32.mrf.mxu0
      %v728 = vadd.f32 0.0, %v727
      %729 = vmatmul.bf16.gmra.mxu0 %v408
      %v730 = vpop.f32.mrf.mxu0
      %v731 = vadd.f32 0.0, %v730
      %v732 = vpop.f32.mrf.mxu0
      %v733 = vadd.f32 0.0, %v732
      %734 = vmatmul.bf16.gmra.mxu0 %v413
      %v735 = vpop.f32.mrf.mxu0
      %v736 = vadd.f32 0.0, %v735
      %v737 = vpop.f32.mrf.mxu0
      %v738 = vadd.f32 0.0, %v737
      %739 = vmatmul.bf16.gmra.mxu0 %v418
      %v740 = vpop.f32.mrf.mxu0
      %v741 = vadd.f32 0.0, %v740
      %v742 = vpop.f32.mrf.mxu0
      %v743 = vadd.f32 0.0, %v742
      %744 = vmatmul.bf16.gmra.mxu0 %v423
      %v745 = vpop.f32.mrf.mxu0
      %v746 = vadd.f32 0.0, %v745
      %v747 = vpop.f32.mrf.mxu0
      %v748 = vadd.f32 0.0, %v747
      %749 = vmatmul.bf16.gmra.mxu0 %v428
      %v750 = vpop.f32.mrf.mxu0
      %v751 = vadd.f32 0.0, %v750
      %v752 = vpop.f32.mrf.mxu0
      %v753 = vadd.f32 0.0, %v752
      %754 = vdwg.mxu0
      %755 = vmatpush.bf16.msra.mxu0 %v624
      %756 = vmatpush.bf16.msra.mxu0 %v623
      %757 = vmatpush.bf16.msra.mxu0 %v622
      %758 = vmatpush.bf16.msra.mxu0 %v621
      %759 = vmatpush.bf16.msra.mxu0 %v620
      %760 = vmatpush.bf16.msra.mxu0 %v619
      %761 = vmatpush.bf16.msra.mxu0 %v618
      %762 = vmatpush.bf16.msra.mxu0 %v617
      %763 = vmatmul.bf16.gmra.mxu0 %v394
      %v764 = vpop.f32.mrf.mxu0
      %v765 = vadd.f32 %v716, %v764
      %v766 = vpop.f32.mrf.mxu0
      %v767 = vadd.f32 %v718, %v766
      %768 = vmatmul.bf16.gmra.mxu0 %v399
      %v769 = vpop.f32.mrf.mxu0
      %v770 = vadd.f32 %v721, %v769
      %v771 = vpop.f32.mrf.mxu0
      %v772 = vadd.f32 %v723, %v771
      %773 = vmatmul.bf16.gmra.mxu0 %v404
      %v774 = vpop.f32.mrf.mxu0
      %v775 = vadd.f32 %v726, %v774
      %v776 = vpop.f32.mrf.mxu0
      %v777 = vadd.f32 %v728, %v776
      %778 = vmatmul.bf16.gmra.mxu0 %v409
      %v779 = vpop.f32.mrf.mxu0
      %v780 = vadd.f32 %v731, %v779
      %v781 = vpop.f32.mrf.mxu0
      %v782 = vadd.f32 %v733, %v781
      %783 = vmatmul.bf16.gmra.mxu0 %v414
      %v784 = vpop.f32.mrf.mxu0
      %v785 = vadd.f32 %v736, %v784
      %v786 = vpop.f32.mrf.mxu0
      %v787 = vadd.f32 %v738, %v786
      %788 = vmatmul.bf16.gmra.mxu0 %v419
      %v789 = vpop.f32.mrf.mxu0
      %v790 = vadd.f32 %v741, %v789
      %v791 = vpop.f32.mrf.mxu0
      %v792 = vadd.f32 %v743, %v791
      %793 = vmatmul.bf16.gmra.mxu0 %v424
      %v794 = vpop.f32.mrf.mxu0
      %v795 = vadd.f32 %v746, %v794
      %v796 = vpop.f32.mrf.mxu0
      %v797 = vadd.f32 %v748, %v796
      %798 = vmatmul.bf16.gmra.mxu0 %v429
      %v799 = vpop.f32.mrf.mxu0
      %v800 = vadd.f32 %v751, %v799
      %v801 = vpop.f32.mrf.mxu0
      %v802 = vadd.f32 %v753, %v801
      %803 = vdwg.mxu0
      %804 = vmatpush.bf16.msra.mxu0 %v632
      %805 = vmatpush.bf16.msra.mxu0 %v631
      %806 = vmatpush.bf16.msra.mxu0 %v630
      %807 = vmatpush.bf16.msra.mxu0 %v629
      %808 = vmatpush.bf16.msra.mxu0 %v628
      %809 = vmatpush.bf16.msra.mxu0 %v627
      %810 = vmatpush.bf16.msra.mxu0 %v626
      %811 = vmatpush.bf16.msra.mxu0 %v625
      %812 = vmatmul.bf16.gmra.mxu0 %v395
      %v813 = vpop.f32.mrf.mxu0
      %v814 = vadd.f32 %v765, %v813
      %v815 = vpop.f32.mrf.mxu0
      %v816 = vadd.f32 %v767, %v815
      %817 = vmatmul.bf16.gmra.mxu0 %v400
      %v818 = vpop.f32.mrf.mxu0
      %v819 = vadd.f32 %v770, %v818
      %v820 = vpop.f32.mrf.mxu0
      %v821 = vadd.f32 %v772, %v820
      %822 = vmatmul.bf16.gmra.mxu0 %v405
      %v823 = vpop.f32.mrf.mxu0
      %v824 = vadd.f32 %v775, %v823
      %v825 = vpop.f32.mrf.mxu0
      %v826 = vadd.f32 %v777, %v825
      %827 = vmatmul.bf16.gmra.mxu0 %v410
      %v828 = vpop.f32.mrf.mxu0
      %v829 = vadd.f32 %v780, %v828
      %v830 = vpop.f32.mrf.mxu0
      %v831 = vadd.f32 %v782, %v830
      %832 = vmatmul.bf16.gmra.mxu0 %v415
      %v833 = vpop.f32.mrf.mxu0
      %v834 = vadd.f32 %v785, %v833
      %v835 = vpop.f32.mrf.mxu0
      %v836 = vadd.f32 %v787, %v835
      %837 = vmatmul.bf16.gmra.mxu0 %v420
      %v838 = vpop.f32.mrf.mxu0
      %v839 = vadd.f32 %v790, %v838
      %v840 = vpop.f32.mrf.mxu0
      %v841 = vadd.f32 %v792, %v840
      %842 = vmatmul.bf16.gmra.mxu0 %v425
      %v843 = vpop.f32.mrf.mxu0
      %v844 = vadd.f32 %v795, %v843
      %v845 = vpop.f32.mrf.mxu0
      %v846 = vadd.f32 %v797, %v845
      %847 = vmatmul.bf16.gmra.mxu0 %v430
      %v848 = vpop.f32.mrf.mxu0
      %v849 = vadd.f32 %v800, %v848
      %v850 = vpop.f32.mrf.mxu0
      %v851 = vadd.f32 %v802, %v850
      %852 = vdwg.mxu0
      %853 = vmatpush.bf16.msra.mxu0 %v640
      %854 = vmatpush.bf16.msra.mxu0 %v639
      %855 = vmatpush.bf16.msra.mxu0 %v638
      %856 = vmatpush.bf16.msra.mxu0 %v637
      %857 = vmatpush.bf16.msra.mxu0 %v636
      %858 = vmatpush.bf16.msra.mxu0 %v635
      %859 = vmatpush.bf16.msra.mxu0 %v634
      %860 = vmatpush.bf16.msra.mxu0 %v633
      %861 = vmatmul.bf16.gmra.mxu0 %v396
      %v862 = vpop.f32.mrf.mxu0
      %v863 = vadd.f32 %v814, %v862
      %v864 = vpop.f32.mrf.mxu0
      %v865 = vadd.f32 %v816, %v864
      %866 = vmatmul.bf16.gmra.mxu0 %v401
      %v867 = vpop.f32.mrf.mxu0
      %v868 = vadd.f32 %v819, %v867
      %v869 = vpop.f32.mrf.mxu0
      %v870 = vadd.f32 %v821, %v869
      %871 = vmatmul.bf16.gmra.mxu0 %v406
      %v872 = vpop.f32.mrf.mxu0
      %v873 = vadd.f32 %v824, %v872
      %v874 = vpop.f32.mrf.mxu0
      %v875 = vadd.f32 %v826, %v874
      %876 = vmatmul.bf16.gmra.mxu0 %v411
      %v877 = vpop.f32.mrf.mxu0
      %v878 = vadd.f32 %v829, %v877
      %v879 = vpop.f32.mrf.mxu0
      %v880 = vadd.f32 %v831, %v879
      %881 = vmatmul.bf16.gmra.mxu0 %v416
      %v882 = vpop.f32.mrf.mxu0
      %v883 = vadd.f32 %v834, %v882
      %v884 = vpop.f32.mrf.mxu0
      %v885 = vadd.f32 %v836, %v884
      %886 = vmatmul.bf16.gmra.mxu0 %v421
      %v887 = vpop.f32.mrf.mxu0
      %v888 = vadd.f32 %v839, %v887
      %v889 = vpop.f32.mrf.mxu0
      %v890 = vadd.f32 %v841, %v889
      %891 = vmatmul.bf16.gmra.mxu0 %v426
      %v892 = vpop.f32.mrf.mxu0
      %v893 = vadd.f32 %v844, %v892
      %v894 = vpop.f32.mrf.mxu0
      %v895 = vadd.f32 %v846, %v894
      %896 = vmatmul.bf16.gmra.mxu0 %v431
      %v897 = vpop.f32.mrf.mxu0
      %v898 = vadd.f32 %v849, %v897
      %v899 = vpop.f32.mrf.mxu0
      %v900 = vadd.f32 %v851, %v899
      %901 = vdwg.mxu0
      %902 = vmatpush.bf16.msra.mxu0 0
      %903 = vmatpush.bf16.msra.mxu0 0
      %904 = vmatpush.bf16.msra.mxu0 0
      %905 = vmatpush.bf16.msra.mxu0 0
      %906 = vmatpush.bf16.msra.mxu0 %v644
      %907 = vmatpush.bf16.msra.mxu0 %v643
      %908 = vmatpush.bf16.msra.mxu0 %v642
      %909 = vmatpush.bf16.msra.mxu0 %v641
      %910 = vmatmul.bf16.gmra.mxu0 %v683
      %v911 = vpop.f32.mrf.mxu0
      %v912 = vadd.f32 %v863, %v911
      %v913 = vpop.f32.mrf.mxu0
      %v914 = vadd.f32 %v865, %v913
      %915 = vmatmul.bf16.gmra.mxu0 %v686
      %v916 = vpop.f32.mrf.mxu0
      %v917 = vadd.f32 %v868, %v916
      %v918 = vpop.f32.mrf.mxu0
      %v919 = vadd.f32 %v870, %v918
      %920 = vmatmul.bf16.gmra.mxu0 %v689
      %v921 = vpop.f32.mrf.mxu0
      %v922 = vadd.f32 %v873, %v921
      %v923 = vpop.f32.mrf.mxu0
      %v924 = vadd.f32 %v875, %v923
      %925 = vmatmul.bf16.gmra.mxu0 %v692
      %v926 = vpop.f32.mrf.mxu0
      %v927 = vadd.f32 %v878, %v926
      %v928 = vpop.f32.mrf.mxu0
      %v929 = vadd.f32 %v880, %v928
      %930 = vmatmul.bf16.gmra.mxu0 %v695
      %v931 = vpop.f32.mrf.mxu0
      %v932 = vadd.f32 %v883, %v931
      %v933 = vpop.f32.mrf.mxu0
      %v934 = vadd.f32 %v885, %v933
      %935 = vmatmul.bf16.gmra.mxu0 %v698
      %v936 = vpop.f32.mrf.mxu0
      %v937 = vadd.f32 %v888, %v936
      %v938 = vpop.f32.mrf.mxu0
      %v939 = vadd.f32 %v890, %v938
      %940 = vmatmul.bf16.gmra.mxu0 %v701
      %v941 = vpop.f32.mrf.mxu0
      %v942 = vadd.f32 %v893, %v941
      %v943 = vpop.f32.mrf.mxu0
      %v944 = vadd.f32 %v895, %v943
      %945 = vmatmul.bf16.gmra.mxu0 %v704
      %v946 = vpop.f32.mrf.mxu0
      %v947 = vadd.f32 %v898, %v946
      %v948 = vpop.f32.mrf.mxu0
      %v949 = vadd.f32 %v900, %v948
      %950 = vdwg.mxu0
      %vm951 = vcmask 293888
      %v952 = vsel %vm951, %v912, 0.0
      %953 = vadd.xlane.f32.xlu0 %v952
      %v954 = vpop.xlane.xlu0 %953
      %v955 = vsel %vm951, %v914, 0.0
      %956 = vadd.xlane.f32.xlu0 %v955
      %v957 = vpop.xlane.xlu0 %956
      %v958 = vsel %vm951, %v917, 0.0
      %959 = vadd.xlane.f32.xlu0 %v958
      %v960 = vpop.xlane.xlu0 %959
      %v961 = vsel %vm951, %v919, 0.0
      %962 = vadd.xlane.f32.xlu0 %v961
      %v963 = vpop.xlane.xlu0 %962
      %v964 = vsel %vm951, %v922, 0.0
      %965 = vadd.xlane.f32.xlu0 %v964
      %v966 = vpop.xlane.xlu0 %965
      %v967 = vsel %vm951, %v924, 0.0
      %968 = vadd.xlane.f32.xlu0 %v967
      %v969 = vpop.xlane.xlu0 %968
      %v970 = vsel %vm951, %v927, 0.0
      %971 = vadd.xlane.f32.xlu0 %v970
      %v972 = vpop.xlane.xlu0 %971
      %v973 = vsel %vm951, %v929, 0.0
      %974 = vadd.xlane.f32.xlu0 %v973
      %v975 = vpop.xlane.xlu0 %974
      %v976 = vsel %vm951, %v932, 0.0
      %977 = vadd.xlane.f32.xlu0 %v976
      %v978 = vpop.xlane.xlu0 %977
      %v979 = vsel %vm951, %v934, 0.0
      %980 = vadd.xlane.f32.xlu0 %v979
      %v981 = vpop.xlane.xlu0 %980
      %v982 = vsel %vm951, %v937, 0.0
      %983 = vadd.xlane.f32.xlu0 %v982
      %v984 = vpop.xlane.xlu0 %983
      %v985 = vsel %vm951, %v939, 0.0
      %986 = vadd.xlane.f32.xlu0 %v985
      %v987 = vpop.xlane.xlu0 %986
      %v988 = vsel %vm951, %v942, 0.0
      %989 = vadd.xlane.f32.xlu0 %v988
      %v990 = vpop.xlane.xlu0 %989
      %v991 = vsel %vm951, %v944, 0.0
      %992 = vadd.xlane.f32.xlu0 %v991
      %v993 = vpop.xlane.xlu0 %992
      %v994 = vsel %vm951, %v947, 0.0
      %995 = vadd.xlane.f32.xlu0 %v994
      %v996 = vpop.xlane.xlu0 %995
      %v997 = vsel %vm951, %v949, 0.0
      %998 = vadd.xlane.f32.xlu0 %v997
      %v999 = vpop.xlane.xlu0 %998
      %v1000 = vmul.f32 %v912, %v912
      %v1001 = vmul.f32 %v914, %v914
      %v1002 = vmul.f32 %v917, %v917
      %v1003 = vmul.f32 %v919, %v919
      %v1004 = vmul.f32 %v922, %v922
      %v1005 = vmul.f32 %v924, %v924
      %v1006 = vmul.f32 %v927, %v927
      %v1007 = vmul.f32 %v929, %v929
      %v1008 = vmul.f32 %v932, %v932
      %v1009 = vmul.f32 %v934, %v934
      %v1010 = vmul.f32 %v937, %v937
      %v1011 = vmul.f32 %v939, %v939
      %v1012 = vmul.f32 %v942, %v942
      %v1013 = vmul.f32 %v944, %v944
      %v1014 = vmul.f32 %v947, %v947
      %v1015 = vmul.f32 %v949, %v949
      %v1016 = vsel %vm951, %v1000, 0.0
      %1017 = vadd.xlane.f32.xlu0 %v1016
      %v1018 = vpop.xlane.xlu0 %1017
      %v1019 = vsel %vm951, %v1001, 0.0
      %1020 = vadd.xlane.f32.xlu0 %v1019
      %v1021 = vpop.xlane.xlu0 %1020
      %v1022 = vsel %vm951, %v1002, 0.0
      %1023 = vadd.xlane.f32.xlu0 %v1022
      %v1024 = vpop.xlane.xlu0 %1023
      %v1025 = vsel %vm951, %v1003, 0.0
      %1026 = vadd.xlane.f32.xlu0 %v1025
      %v1027 = vpop.xlane.xlu0 %1026
      %v1028 = vsel %vm951, %v1004, 0.0
      %1029 = vadd.xlane.f32.xlu0 %v1028
      %v1030 = vpop.xlane.xlu0 %1029
      %v1031 = vsel %vm951, %v1005, 0.0
      %1032 = vadd.xlane.f32.xlu0 %v1031
      %v1033 = vpop.xlane.xlu0 %1032
      %v1034 = vsel %vm951, %v1006, 0.0
      %1035 = vadd.xlane.f32.xlu0 %v1034
      %v1036 = vpop.xlane.xlu0 %1035
      %v1037 = vsel %vm951, %v1007, 0.0
      %1038 = vadd.xlane.f32.xlu0 %v1037
      %v1039 = vpop.xlane.xlu0 %1038
      %v1040 = vsel %vm951, %v1008, 0.0
      %1041 = vadd.xlane.f32.xlu0 %v1040
      %v1042 = vpop.xlane.xlu0 %1041
      %v1043 = vsel %vm951, %v1009, 0.0
      %1044 = vadd.xlane.f32.xlu0 %v1043
      %v1045 = vpop.xlane.xlu0 %1044
      %v1046 = vsel %vm951, %v1010, 0.0
      %1047 = vadd.xlane.f32.xlu0 %v1046
      %v1048 = vpop.xlane.xlu0 %1047
      %v1049 = vsel %vm951, %v1011, 0.0
      %1050 = vadd.xlane.f32.xlu0 %v1049
      %v1051 = vpop.xlane.xlu0 %1050
      %v1052 = vsel %vm951, %v1012, 0.0
      %1053 = vadd.xlane.f32.xlu0 %v1052
      %v1054 = vpop.xlane.xlu0 %1053
      %v1055 = vsel %vm951, %v1013, 0.0
      %1056 = vadd.xlane.f32.xlu0 %v1055
      %v1057 = vpop.xlane.xlu0 %1056
      %v1058 = vsel %vm951, %v1014, 0.0
      %1059 = vadd.xlane.f32.xlu0 %v1058
      %v1060 = vpop.xlane.xlu0 %1059
      %v1061 = vsel %vm951, %v1015, 0.0
      %1062 = vadd.xlane.f32.xlu0 %v1061
      %v1063 = vpop.xlane.xlu0 %1062
      %v1064 = vadd.f32 %v954, %v966
      %v1065 = vadd.f32 %v957, %v969
      %v1066 = vadd.f32 %v960, %v972
      %v1067 = vadd.f32 %v963, %v975
      %v1068 = vadd.f32 %v1018, %v1030
      %v1069 = vadd.f32 %v1021, %v1033
      %v1070 = vadd.f32 %v1024, %v1036
      %v1071 = vadd.f32 %v1027, %v1039
      %v1072 = vadd.f32 %v1064, %v978
      %v1073 = vadd.f32 %v1065, %v981
      %v1074 = vadd.f32 %v1066, %v984
      %v1075 = vadd.f32 %v1067, %v987
      %v1076 = vadd.f32 %v1068, %v1042
      %v1077 = vadd.f32 %v1069, %v1045
      %v1078 = vadd.f32 %v1070, %v1048
      %v1079 = vadd.f32 %v1071, %v1051
      %v1080 = vadd.f32 %v1072, %v990
      %v1081 = vadd.f32 %v1073, %v993
      %v1082 = vadd.f32 %v1074, %v996
      %v1083 = vadd.f32 %v1075, %v999
      %v1084 = vadd.f32 %v1076, %v1054
      %v1085 = vadd.f32 %v1077, %v1057
      %v1086 = vadd.f32 %v1078, %v1060
      %v1087 = vadd.f32 %v1079, %v1063
      %v1088 = vmul.f32 %v1080, 0.0069444445
      %v1089 = vmul.f32 %v1081, 0.0069444445
      %v1090 = vmul.f32 %v1082, 0.0069444445
      %v1091 = vmul.f32 %v1083, 0.0069444445
      %v1092 = vmul.f32 %v1084, 0.0069444445
      %v1093 = vmul.f32 %v1085, 0.0069444445
      %v1094 = vmul.f32 %v1086, 0.0069444445
      %v1095 = vmul.f32 %v1087, 0.0069444445
      %v1096 = vmul.f32 %v1088, %v1088
      %v1097 = vmul.f32 %v1089, %v1089
      %v1098 = vmul.f32 %v1090, %v1090
      %v1099 = vmul.f32 %v1091, %v1091
      %v1100 = vsub.f32 %v1092, %v1096
      %v1101 = vsub.f32 %v1093, %v1097
      %v1102 = vsub.f32 %v1094, %v1098
      %v1103 = vsub.f32 %v1095, %v1099
      %v1104 = vadd.f32 %v1100, 1e-05
      %v1105 = vadd.f32 %v1101, 1e-05
      %v1106 = vadd.f32 %v1102, 1e-05
      %v1107 = vadd.f32 %v1103, 1e-05
      %v1108 = vrsqrt.pop %v1104
      %v1109 = vmul.f32 %v1108, %v1104
      %v1110 = vmul.f32 %v1109, %v1108
      %v1111 = vmul.f32 0.5, %v1110
      %v1112 = vsub.f32 1.5, %v1111
      %v1113 = vmul.f32 %v1108, %v1112
      %vm1114 = vweird.f32 %v1104
      %vm1115 = vweird.f32 %v1108
      %vm1116 = vmor %vm1114, %vm1115
      %v1117 = vsel %vm1116, %v1108, %v1113
      %v1118 = vrsqrt.pop %v1105
      %v1119 = vmul.f32 %v1118, %v1105
      %v1120 = vmul.f32 %v1119, %v1118
      %v1121 = vmul.f32 0.5, %v1120
      %v1122 = vsub.f32 1.5, %v1121
      %v1123 = vmul.f32 %v1118, %v1122
      %vm1124 = vweird.f32 %v1105
      %vm1125 = vweird.f32 %v1118
      %vm1126 = vmor %vm1124, %vm1125
      %v1127 = vsel %vm1126, %v1118, %v1123
      %v1128 = vrsqrt.pop %v1106
      %v1129 = vmul.f32 %v1128, %v1106
      %v1130 = vmul.f32 %v1129, %v1128
      %v1131 = vmul.f32 0.5, %v1130
      %v1132 = vsub.f32 1.5, %v1131
      %v1133 = vmul.f32 %v1128, %v1132
      %vm1134 = vweird.f32 %v1106
      %vm1135 = vweird.f32 %v1128
      %vm1136 = vmor %vm1134, %vm1135
      %v1137 = vsel %vm1136, %v1128, %v1133
      %v1138 = vrsqrt.pop %v1107
      %v1139 = vmul.f32 %v1138, %v1107
      %v1140 = vmul.f32 %v1139, %v1138
      %v1141 = vmul.f32 0.5, %v1140
      %v1142 = vsub.f32 1.5, %v1141
      %v1143 = vmul.f32 %v1138, %v1142
      %vm1144 = vweird.f32 %v1107
      %vm1145 = vweird.f32 %v1138
      %vm1146 = vmor %vm1144, %vm1145
      %v1147 = vsel %vm1146, %v1138, %v1143
      %1149 = vset.pattern.permute.xlu0 0
      %1150 = vperm.xlu0 %1149, %v1088
      %v1151 = vpop.permute.xlu0 %1150
      %1154 = vset.pattern.permute.xlu0 0
      %1155 = vperm.xlu0 %1154, %v1089
      %v1156 = vpop.permute.xlu0 %1155
      %1159 = vset.pattern.permute.xlu0 0
      %1160 = vperm.xlu0 %1159, %v1090
      %v1161 = vpop.permute.xlu0 %1160
      %1164 = vset.pattern.permute.xlu0 0
      %1165 = vperm.xlu0 %1164, %v1091
      %v1166 = vpop.permute.xlu0 %1165
      %v1168 = vsub.f32 %v912, %v1151
      %v1169 = vsub.f32 %v914, %v1156
      %v1170 = vsub.f32 %v917, %v1161
      %v1171 = vsub.f32 %v919, %v1166
      %v1172 = vsub.f32 %v922, %v1151
      %v1173 = vsub.f32 %v924, %v1156
      %v1174 = vsub.f32 %v927, %v1161
      %v1175 = vsub.f32 %v929, %v1166
      %v1176 = vsub.f32 %v932, %v1151
      %v1177 = vsub.f32 %v934, %v1156
      %v1178 = vsub.f32 %v937, %v1161
      %v1179 = vsub.f32 %v939, %v1166
      %v1180 = vsub.f32 %v942, %v1151
      %v1181 = vsub.f32 %v944, %v1156
      %v1182 = vsub.f32 %v947, %v1161
      %v1183 = vsub.f32 %v949, %v1166
      %1185 = vset.pattern.permute.xlu0 0
      %1186 = vperm.xlu0 %1185, %v1117
      %v1187 = vpop.permute.xlu0 %1186
      %1190 = vset.pattern.permute.xlu0 0
      %1191 = vperm.xlu0 %1190, %v1127
      %v1192 = vpop.permute.xlu0 %1191
      %1195 = vset.pattern.permute.xlu0 0
      %1196 = vperm.xlu0 %1195, %v1137
      %v1197 = vpop.permute.xlu0 %1196
      %1200 = vset.pattern.permute.xlu0 0
      %1201 = vperm.xlu0 %1200, %v1147
      %v1202 = vpop.permute.xlu0 %1201
      %v1204 = vmul.f32 %v1168, %v1187
      %v1205 = vmul.f32 %v1169, %v1192
      %v1206 = vmul.f32 %v1170, %v1197
      %v1207 = vmul.f32 %v1171, %v1202
      %v1208 = vmul.f32 %v1172, %v1187
      %v1209 = vmul.f32 %v1173, %v1192
      %v1210 = vmul.f32 %v1174, %v1197
      %v1211 = vmul.f32 %v1175, %v1202
      %v1212 = vmul.f32 %v1176, %v1187
      %v1213 = vmul.f32 %v1177, %v1192
      %v1214 = vmul.f32 %v1178, %v1197
      %v1215 = vmul.f32 %v1179, %v1202
      %v1216 = vmul.f32 %v1180, %v1187
      %v1217 = vmul.f32 %v1181, %v1192
      %v1218 = vmul.f32 %v1182, %v1197
      %v1219 = vmul.f32 %v1183, %v1202
      %v1220 = vmax.f32 %v1204, 0.0
      %v1221 = vmax.f32 %v1205, 0.0
      %v1222 = vmax.f32 %v1206, 0.0
      %v1223 = vmax.f32 %v1207, 0.0
      %v1224 = vmax.f32 %v1208, 0.0
      %v1225 = vmax.f32 %v1209, 0.0
      %v1226 = vmax.f32 %v1210, 0.0
      %v1227 = vmax.f32 %v1211, 0.0
      %v1228 = vmax.f32 %v1212, 0.0
      %v1229 = vmax.f32 %v1213, 0.0
      %v1230 = vmax.f32 %v1214, 0.0
      %v1231 = vmax.f32 %v1215, 0.0
      %v1232 = vmax.f32 %v1216, 0.0
      %v1233 = vmax.f32 %v1217, 0.0
      %v1234 = vmax.f32 %v1218, 0.0
      %v1235 = vmax.f32 %v1219, 0.0
      %v1236 = vpack.c.bf16 %v1220, %v1220
      %v1237 = vpack.c.bf16 %v1221, %v1221
      %v1238 = vpack.c.bf16 %v1222, %v1222
      %v1239 = vpack.c.bf16 %v1223, %v1223
      %v1240 = vpack.c.bf16 %v1224, %v1224
      %v1241 = vpack.c.bf16 %v1225, %v1225
      %v1242 = vpack.c.bf16 %v1226, %v1226
      %v1243 = vpack.c.bf16 %v1227, %v1227
      %v1244 = vpack.c.bf16 %v1228, %v1228
      %v1245 = vpack.c.bf16 %v1229, %v1229
      %v1246 = vpack.c.bf16 %v1230, %v1230
      %v1247 = vpack.c.bf16 %v1231, %v1231
      %v1248 = vpack.c.bf16 %v1232, %v1232
      %v1249 = vpack.c.bf16 %v1233, %v1233
      %v1250 = vpack.c.bf16 %v1234, %v1234
      %v1251 = vpack.c.bf16 %v1235, %v1235
      %vm1252 = vcmask 289792
      %1253 = vst.msk [vmem:[%s143] sm:$0xf] %vm1252, %v1236
      %1254 = vst.msk [vmem:[%s143 + $0x4] sm:$0xf] %vm1252, %v1237
      %1255 = vst.msk [vmem:[%s143 + $0x8] sm:$0xf] %vm1252, %v1238
      %1256 = vst.msk [vmem:[%s143 + $0xc] sm:$0xf] %vm1252, %v1239
      %1257 = vst.msk [vmem:[%s143 + $0x10] sm:$0xf] %vm1252, %v1240
      %1258 = vst.msk [vmem:[%s143 + $0x14] sm:$0xf] %vm1252, %v1241
      %1259 = vst.msk [vmem:[%s143 + $0x18] sm:$0xf] %vm1252, %v1242
      %1260 = vst.msk [vmem:[%s143 + $0x1c] sm:$0xf] %vm1252, %v1243
      %1261 = vst.msk [vmem:[%s143 + $0x20] sm:$0xf] %vm1252, %v1244
      %1262 = vst.msk [vmem:[%s143 + $0x24] sm:$0xf] %vm1252, %v1245
      %1263 = vst.msk [vmem:[%s143 + $0x28] sm:$0xf] %vm1252, %v1246
      %1264 = vst.msk [vmem:[%s143 + $0x2c] sm:$0xf] %vm1252, %v1247
      %1265 = vst.msk [vmem:[%s143 + $0x30] sm:$0xf] %vm1252, %v1248
      %1266 = vst.msk [vmem:[%s143 + $0x34] sm:$0xf] %vm1252, %v1249
      %1267 = vst.msk [vmem:[%s143 + $0x38] sm:$0xf] %vm1252, %v1250
      %1268 = vst.msk [vmem:[%s143 + $0x3c] sm:$0xf] %vm1252, %v1251
      %p1269 = scmp.lt.s32.totalorder %s13, 1
      %s1270 = scalar_select %p1269, %s13, 1
      %s1271 = smul.addr %s1270, 16
      %s1272 = smul.addr %s1271, 4
      %s1273 = scalar_lea.vmem %s2, %s1272
      // Predicated region
      $region29: #{netg_forward.6} parent=27 // pred_check
        %p1274 = pneg %p78
      $region30: #{netg_forward.6} parent=27 // pred_check_branch
        %1276 = sbr.rel (%p1274) target = $region32
      $region31: #{netg_forward.6} parent=27 // pred_region
        _
      $region32: #{netg_forward.6} parent=27 // pred_fallthru
        _
    $region28: #{netg_forward.6} parent=5 // pred_fallthru
      _
    %p1277 = scmp.le.s32.totalorder 2, %s8
    // Predicated region
    $region33: #{netg_forward.6} parent=5 // pred_check
      %p1278 = pneg %p1277
    $region34: #{netg_forward.6} parent=5 // pred_check_branch
      %1280 = sbr.rel (%p1278) target = $region36
    $region35: #{netg_forward.6} parent=5 // pred_region
      %s1281 = ssub.s32 %s8, 2
      // Predicated region
      $region37: #{netg_forward.6} parent=35 // pred_check
        %p1282 = pneg %p84
      $region38: #{netg_forward.6} parent=35 // pred_check_branch
        %1284 = sbr.rel (%p1282) target = $region40
      $region39: #{netg_forward.6} parent=35 // pred_region
        %p1285 = scmp.lt.s32.totalorder %s14, 1
        %s1286 = scalar_select %p1285, %s14, 1
        %s1287 = smul.addr %s1286, 16
        %s1288 = smul.addr %s1287, 4
        %s1289 = scalar_lea.vmem %s2, %s1288
      $region40: #{netg_forward.6} parent=35 // pred_fallthru
        _
    $region36: #{netg_forward.6} parent=5 // pred_fallthru
      _
  $region6: #{netg_forward.6} parent=0 // loop_footer
    %s12 = sadd.s32 1, %s8
  $region7: #{netg_forward.6} parent=0 // loop_footer_branch
    %7 = sbr.rel target = $region3
  $region8: #{netg_forward.6} parent=0 // loop_exit
    _

// kernel: netg_forward.7
$region0: #{netg_forward.7}
  #allocation0 [shape = 'u32[]', space=smem, size = 0x4, offset = 0x4, fixed_abs, tag = 'smem constant byte address 0x4 - core index']
  #allocation1 [shape = 'u32[72,128]{1,0:T(1,128)}', space=vmem, size = 0x9000, scoped, tag = 'internal scratch']
  %s0 = inlined_call_operand.vmem [shape: bf16[2,288,169], index: 0, kind: input, shape index: {}]
  %s1 = inlined_call_operand.vmem [shape: bf16[64,288], index: 1, kind: input, shape index: {}]
  %s2 = inlined_call_operand.vmem [shape: f32[64,169], index: 2, kind: input, shape index: {}]
  %s3 = inlined_call_operand.vmem [shape: bf16[2,64,169], index: 3, kind: output, shape index: {}]
  %s4 = sld [smem:[#allocation0]]
  $region45: #{netg_forward.7} parent=0
    _
  %s6 = ssub.s32 1, %s4
  %s7 = scalar_select 0, %s6, %s4
  loop: start=0, step=1, limit=4
  $region2: #{netg_forward.7} parent=0 // loop_pre_header
    _
  $region3: #{netg_forward.7} parent=0 // loop_header
    %s9 = sphi 0, %s13
    %p10 = scmp.ge.s32.totalorder %s9, 4
    %s19 = sphi 0, %s21
    %s22 = sphi 0, %s19
    %s23 = sphi 0, %s22
    %s39 = sphi 0, %s23
    %s43 = sphi 0, %s43
    %s45 = sphi 0, %s43
    %s46 = sphi 0, %s45
    %s60 = sphi 0, %s46
    %s64 = sphi 0, %s64
    %s66 = sphi 0, %s64
    %s67 = sphi 0, %s66
    %s81 = sphi 0, %s67
    %s87 = sphi 0, %s89
    %s90 = sphi 0, %s87
    %s91 = sphi 0, %s90
    %s107 = sphi 0, %s91
  $region4: #{netg_forward.7} parent=0 // loop_header_branch
    %12 = sbr.rel (%p10) target = $region8
  $region5: #{netg_forward.7} parent=0 // loop_body
    %s14 = ssub.s32 %s9, 1
    %s15 = ssub.s32 %s9, 2
    %s16 = sadd.s32 %s9, 1
    %s17 = ssub.s32 %s9, %s16
    %p18 = scmp.eq.s32.totalorder %s17, 0
    %s20 = sadd.s32 %s19, 1
    %s21 = scalar_select %p18, %s19, %s20
    %p24 = pneg %p18
    %p25 = scmp.eq.s32.totalorder %s9, 1
    %p26 = por %p24, %p25
    %p27 = scmp.ne.s32.totalorder %s19, %s22
    %p28 = scmp.eq.s32.totalorder %s9, 0
    %p29 = por %p27, %p28
    %p30 = scmp.ne.s32.totalorder %s19, %s22
    %p31 = scmp.eq.s32.totalorder %s14, 1
    %p32 = por %p30, %p31
    %p33 = scmp.ne.s32.totalorder %s22, %s23
    %p34 = scmp.eq.s32.totalorder %s14, 0
    %p35 = por %p33, %p34
    %p36 = scmp.ne.s32.totalorder %s22, %s23
    %p37 = scmp.eq.s32.totalorder %s15, 1
    %p38 = por %p36, %p37
    %p40 = scmp.ne.s32.totalorder %s23, %s39
    %p41 = scmp.eq.s32.totalorder %s15, 0
    %p42 = por %p40, %p41
    %s44 = sadd.s32 %s43, 1
    %p47 = scmp.eq.s32.totalorder %s9, 1
    %p48 = scmp.ne.s32.totalorder %s43, %s45
    %p49 = scmp.eq.s32.totalorder %s9, 0
    %p50 = por %p48, %p49
    %p51 = scmp.ne.s32.totalorder %s43, %s45
    %p52 = scmp.eq.s32.totalorder %s14, 1
    %p53 = por %p51, %p52
    %p54 = scmp.ne.s32.totalorder %s45, %s46
    %p55 = scmp.eq.s32.totalorder %s14, 0
    %p56 = por %p54, %p55
    %p57 = scmp.ne.s32.totalorder %s45, %s46
    %p58 = scmp.eq.s32.totalorder %s15, 1
    %p59 = por %p57, %p58
    %p61 = scmp.ne.s32.totalorder %s46, %s60
    %p62 = scmp.eq.s32.totalorder %s15, 0
    %p63 = por %p61, %p62
    %s65 = sadd.s32 %s64, 1
    %p68 = scmp.eq.s32.totalorder %s9, 1
    %p69 = scmp.ne.s32.totalorder %s64, %s66
    %p70 = scmp.eq.s32.totalorder %s9, 0
    %p71 = por %p69, %p70
    %p72 = scmp.ne.s32.totalorder %s64, %s66
    %p73 = scmp.eq.s32.totalorder %s14, 1
    %p74 = por %p72, %p73
    %p75 = scmp.ne.s32.totalorder %s66, %s67
    %p76 = scmp.eq.s32.totalorder %s14, 0
    %p77 = por %p75, %p76
    %p78 = scmp.ne.s32.totalorder %s66, %s67
    %p79 = scmp.eq.s32.totalorder %s15, 1
    %p80 = por %p78, %p79
    %p82 = scmp.ne.s32.totalorder %s67, %s81
    %p83 = scmp.eq.s32.totalorder %s15, 0
    %p84 = por %p82, %p83
    %s85 = ssub.s32 %s9, %s16
    %p86 = scmp.eq.s32.totalorder %s85, 0
    %s88 = sadd.s32 %s87, 1
    %s89 = scalar_select %p86, %s87, %s88
    %p92 = pneg %p86
    %p93 = scmp.eq.s32.totalorder %s9, 1
    %p94 = por %p92, %p93
    %p95 = scmp.ne.s32.totalorder %s87, %s90
    %p96 = scmp.eq.s32.totalorder %s9, 0
    %p97 = por %p95, %p96
    %p98 = scmp.ne.s32.totalorder %s87, %s90
    %p99 = scmp.eq.s32.totalorder %s14, 1
    %p100 = por %p98, %p99
    %p101 = scmp.ne.s32.totalorder %s90, %s91
    %p102 = scmp.eq.s32.totalorder %s14, 0
    %p103 = por %p101, %p102
    %p104 = scmp.ne.s32.totalorder %s90, %s91
    %p105 = scmp.eq.s32.totalorder %s15, 1
    %p106 = por %p104, %p105
    %p108 = scmp.ne.s32.totalorder %s91, %s107
    %p109 = scmp.eq.s32.totalorder %s15, 0
    %p110 = por %p108, %p109
    %p111 = scmp.le.s32.totalorder 1, %s9
    %p112 = scmp.lt.s32.totalorder %s9, 3
    %p113 = pnand %p111, %p112
    %p114 = pneg %p113
    // Predicated region
    $region9: #{netg_forward.7} parent=5 // pred_check
      _
    $region10: #{netg_forward.7} parent=5 // pred_check_branch
      %116 = sbr.rel (%p113) target = $region12
    $region11: #{netg_forward.7} parent=5 // pred_region
      %s117 = ssub.s32 %s9, 1
      // Predicated region
      $region13: #{netg_forward.7} parent=11 // pred_check
        %p118 = pneg %p56
      $region14: #{netg_forward.7} parent=11 // pred_check_branch
        %120 = sbr.rel (%p118) target = $region16
      $region15: #{netg_forward.7} parent=11 // pred_region
        _
      $region16: #{netg_forward.7} parent=11 // pred_fallthru
        _
      // Predicated region
      $region17: #{netg_forward.7} parent=11 // pred_check
        %p121 = pneg %p77
      $region18: #{netg_forward.7} parent=11 // pred_check_branch
        %123 = sbr.rel (%p121) target = $region20
      $region19: #{netg_forward.7} parent=11 // pred_region
        _
      $region20: #{netg_forward.7} parent=11 // pred_fallthru
        _
    $region12: #{netg_forward.7} parent=5 // pred_fallthru
      _
    %p124 = scmp.lt.s32.totalorder %s9, 2
    // Predicated region
    $region21: #{netg_forward.7} parent=5 // pred_check
      %p125 = pneg %p124
    $region22: #{netg_forward.7} parent=5 // pred_check_branch
      %127 = sbr.rel (%p125) target = $region24
    $region23: #{netg_forward.7} parent=5 // pred_region
      // Predicated region
      $region25: #{netg_forward.7} parent=23 // pred_check
        %p128 = pneg %p29
      $region26: #{netg_forward.7} parent=23 // pred_check_branch
        %130 = sbr.rel (%p128) target = $region28
      $region27: #{netg_forward.7} parent=23 // pred_region
        %p131 = scmp.lt.s32.totalorder %s9, 1
        %s132 = scalar_select %p131, %s9, 1
        %s133 = smul.addr %s132, 72
        %s134 = smul.addr %s133, 4
        %s135 = scalar_lea.vmem %s0, %s134
      $region28: #{netg_forward.7} parent=23 // pred_fallthru
        _
    $region24: #{netg_forward.7} parent=5 // pred_fallthru
      _
    %p136 = scmp.le.s32.totalorder 1, %s9
    %p137 = scmp.lt.s32.totalorder %s9, 3
    %p138 = pnand %p136, %p137
    %p139 = pneg %p138
    // Predicated region
    $region29: #{netg_forward.7} parent=5 // pred_check
      _
    $region30: #{netg_forward.7} parent=5 // pred_check_branch
      %141 = sbr.rel (%p138) target = $region32
    $region31: #{netg_forward.7} parent=5 // pred_region
      %s142 = ssub.s32 %s9, 1
      %p143 = scmp.lt.s32.totalorder %s14, 1
      %s144 = scalar_select %p143, %s14, 1
      %s145 = smul.addr %s144, 72
      %s146 = smul.addr %s145, 4
      %s147 = scalar_lea.vmem %s0, %s146
      %p148 = pneg %p35
      %p149 = pneg %p32
      %p150 = pneg %p56
      %p151 = pneg %p53
      %p152 = pneg %p77
      %p153 = pneg %p74
      %p154 = pneg %p103
      %p155 = pneg %p100
      %p156 = scmp.lt.s32.totalorder %s14, 1
      %s157 = scalar_select %p156, %s14, 1
      %s158 = smul.addr %s157, 16
      %s159 = smul.addr %s158, 4
      %s160 = scalar_lea.vmem %s3, %s159
      %p161 = scmp.lt.s32.totalorder %s14, 1
      %s162 = scalar_select %p161, %s14, 1
      %s163 = smul.addr %s162, 72
      %s164 = smul.addr %s163, 4
      %s165 = scalar_lea.vmem %s0, %s164
      %p166 = scmp.lt.s32.totalorder %s14, 1
      %s167 = scalar_select %p166, %s14, 1
      %s168 = smul.addr %s167, 16
      %s169 = smul.addr %s168, 4
      %s170 = scalar_lea.vmem %s3, %s169
      %v172 = vld [vmem:[%s1] sm:$0xff]
      %v173 = vld [vmem:[%s1 + $0x8] sm:$0xf]
      %v174 = vld [vmem:[%s1 + $0xc] sm:$0xff]
      %v175 = vld [vmem:[%s1 + $0x14] sm:$0xf]
      %v176 = vld [vmem:[%s1 + $0x18] sm:$0xff]
      %v177 = vld [vmem:[%s1 + $0x20] sm:$0xf]
      %v178 = vld [vmem:[%s1 + $0x24] sm:$0xff]
      %v179 = vld [vmem:[%s1 + $0x2c] sm:$0xf]
      %v180 = vld [vmem:[%s1 + $0x30] sm:$0xff]
      %v181 = vld [vmem:[%s1 + $0x38] sm:$0xf]
      %v182 = vld [vmem:[%s1 + $0x3c] sm:$0xff]
      %v183 = vld [vmem:[%s1 + $0x44] sm:$0xf]
      %v184 = vld [vmem:[%s1 + $0x48] sm:$0xff]
      %v185 = vld [vmem:[%s1 + $0x50] sm:$0xf]
      %v186 = vld [vmem:[%s1 + $0x54] sm:$0xff]
      %v187 = vld [vmem:[%s1 + $0x5c] sm:$0xf]
      %v188 = vld [vmem:[%s165] sm:$0xff]
      %v189 = vld [vmem:[%s165 + $0x8] sm:$0xff]
      %v190 = vld [vmem:[%s165 + $0x10] sm:$0xff]
      %v191 = vld [vmem:[%s165 + $0x18] sm:$0xff]
      %v192 = vld [vmem:[%s165 + $0x20] sm:$0xff]
      %v193 = vld [vmem:[%s165 + $0x28] sm:$0xff]
      %v194 = vld [vmem:[%s165 + $0x30] sm:$0xff]
      %v195 = vld [vmem:[%s165 + $0x38] sm:$0xff]
      %v196 = vld [vmem:[%s165 + $0x40] sm:$0xff]
      %v197 = vld [vmem:[%s165 + $0x48] sm:$0xff]
      %v198 = vld [vmem:[%s165 + $0x50] sm:$0xff]
      %v199 = vld [vmem:[%s165 + $0x58] sm:$0xff]
      %v200 = vld [vmem:[%s165 + $0x60] sm:$0xff]
      %v201 = vld [vmem:[%s165 + $0x68] sm:$0xff]
      %v202 = vld [vmem:[%s165 + $0x70] sm:$0xff]
      %v203 = vld [vmem:[%s165 + $0x78] sm:$0xff]
      %v204 = vld [vmem:[%s165 + $0x80] sm:$0xff]
      %v205 = vld [vmem:[%s165 + $0x88] sm:$0xff]
      %v206 = vld [vmem:[%s165 + $0x90] sm:$0xff]
      %v207 = vld [vmem:[%s165 + $0x98] sm:$0xff]
      %v208 = vld [vmem:[%s165 + $0xa0] sm:$0xff]
      %v209 = vld [vmem:[%s165 + $0xa8] sm:$0xff]
      %v210 = vld [vmem:[%s165 + $0xb0] sm:$0xff]
      %v211 = vld [vmem:[%s165 + $0xb8] sm:$0xff]
      %v212 = vld [vmem:[%s165 + $0xc0] sm:$0xff]
      %v213 = vld [vmem:[%s165 + $0xc8] sm:$0xff]
      %v214 = vld [vmem:[%s165 + $0xd0] sm:$0xff]
      %v215 = vld [vmem:[%s165 + $0xd8] sm:$0xff]
      %v216 = vld [vmem:[%s165 + $0xe0] sm:$0xff]
      %v217 = vld [vmem:[%s165 + $0xe8] sm:$0xff]
      %v218 = vld [vmem:[%s165 + $0xf0] sm:$0xff]
      %v219 = vld [vmem:[%s165 + $0xf8] sm:$0xff]
      %v220 = vld [vmem:[%s165 + $0x100] sm:$0xff]
      %v221 = vld [vmem:[%s165 + $0x108] sm:$0xff]
      %v222 = vld [vmem:[%s165 + $0x110] sm:$0xff]
      %v223 = vld [vmem:[%s165 + $0x118] sm:$0xff]
      %v240 = vunpack.c.l.b16 %v172
      %v241 = vunpack.c.h.b16 %v172
      %v242 = vunpack.c.l.b16 %v173
      %v243 = vunpack.c.l.b16 %v174
      %v244 = vunpack.c.h.b16 %v174
      %v245 = vunpack.c.l.b16 %v175
      %v246 = vunpack.c.l.b16 %v176
      %v247 = vunpack.c.h.b16 %v176
      %v248 = vunpack.c.l.b16 %v177
      %v249 = vunpack.c.l.b16 %v178
      %v250 = vunpack.c.h.b16 %v178
      %v251 = vunpack.c.l.b16 %v179
      %v252 = vunpack.c.l.b16 %v180
      %v253 = vunpack.c.h.b16 %v180
      %v254 = vunpack.c.l.b16 %v181
      %v255 = vunpack.c.l.b16 %v182
      %v256 = vunpack.c.h.b16 %v182
      %v257 = vunpack.c.l.b16 %v183
      %v258 = vunpack.c.l.b16 %v184
      %v259 = vunpack.c.h.b16 %v184
      %v260 = vunpack.c.l.b16 %v185
      %v261 = vunpack.c.l.b16 %v186
      %v262 = vunpack.c.h.b16 %v186
      %v263 = vunpack.c.l.b16 %v187
      %v264 = vpack.c.b16 %v243, %v240
      %v265 = vpack.c.b16 %v244, %v241
      %v266 = vpack.c.b16 %v245, %v242
      %v267 = vpack.c.b16 %v249, %v246
      %v268 = vpack.c.b16 %v250, %v247
      %v269 = vpack.c.b16 %v251, %v248
      %v270 = vpack.c.b16 %v255, %v252
      %v271 = vpack.c.b16 %v256, %v253
      %v272 = vpack.c.b16 %v257, %v254
      %v273 = vpack.c.b16 %v261, %v258
      %v274 = vpack.c.b16 %v262, %v259
      %v275 = vpack.c.b16 %v263, %v260
      %v320 = vunpack.c.l.b16 %v188
      %v321 = vunpack.c.h.b16 %v188
      %v322 = vunpack.c.l.b16 %v189
      %v323 = vunpack.c.h.b16 %v189
      %v324 = vunpack.c.l.b16 %v190
      %v325 = vunpack.c.h.b16 %v190
      %v326 = vunpack.c.l.b16 %v191
      %v327 = vunpack.c.h.b16 %v191
      %v328 = vunpack.c.l.b16 %v192
      %v329 = vunpack.c.h.b16 %v192
      %v330 = vunpack.c.l.b16 %v193
      %v331 = vunpack.c.h.b16 %v193
      %v332 = vunpack.c.l.b16 %v194
      %v333 = vunpack.c.h.b16 %v194
      %v334 = vunpack.c.l.b16 %v195
      %v335 = vunpack.c.h.b16 %v195
      %v336 = vunpack.c.l.b16 %v196
      %v337 = vunpack.c.h.b16 %v196
      %v338 = vunpack.c.l.b16 %v197
      %v339 = vunpack.c.h.b16 %v197
      %v340 = vunpack.c.l.b16 %v198
      %v341 = vunpack.c.h.b16 %v198
      %v342 = vunpack.c.l.b16 %v199
      %v343 = vunpack.c.h.b16 %v199
      %v344 = vunpack.c.l.b16 %v200
      %v345 = vunpack.c.h.b16 %v200
      %v346 = vunpack.c.l.b16 %v201
      %v347 = vunpack.c.h.b16 %v201
      %v348 = vunpack.c.l.b16 %v202
      %v349 = vunpack.c.h.b16 %v202
      %v350 = vunpack.c.l.b16 %v203
      %v351 = vunpack.c.h.b16 %v203
      %v352 = vunpack.c.l.b16 %v204
      %v353 = vunpack.c.h.b16 %v204
      %v354 = vunpack.c.l.b16 %v205
      %v355 = vunpack.c.h.b16 %v205
      %v356 = vunpack.c.l.b16 %v206
      %v357 = vunpack.c.h.b16 %v206
      %v358 = vunpack.c.l.b16 %v207
      %v359 = vunpack.c.h.b16 %v207
      %v360 = vunpack.c.l.b16 %v208
      %v361 = vunpack.c.h.b16 %v208
      %v362 = vunpack.c.l.b16 %v209
      %v363 = vunpack.c.h.b16 %v209
      %v364 = vunpack.c.l.b16 %v210
      %v365 = vunpack.c.h.b16 %v210
      %v366 = vunpack.c.l.b16 %v211
      %v367 = vunpack.c.h.b16 %v211
      %v368 = vunpack.c.l.b16 %v212
      %v369 = vunpack.c.h.b16 %v212
      %v370 = vunpack.c.l.b16 %v213
      %v371 = vunpack.c.h.b16 %v213
      %v372 = vunpack.c.l.b16 %v214
      %v373 = vunpack.c.h.b16 %v214
      %v374 = vunpack.c.l.b16 %v215
      %v375 = vunpack.c.h.b16 %v215
      %v376 = vunpack.c.l.b16 %v216
      %v377 = vunpack.c.h.b16 %v216
      %v378 = vunpack.c.l.b16 %v217
      %v379 = vunpack.c.h.b16 %v217
      %v380 = vunpack.c.l.b16 %v218
      %v381 = vunpack.c.h.b16 %v218
      %v382 = vunpack.c.l.b16 %v219
      %v383 = vunpack.c.h.b16 %v219
      %v384 = vunpack.c.l.b16 %v220
      %v385 = vunpack.c.h.b16 %v220
      %v386 = vunpack.c.l.b16 %v221
      %v387 = vunpack.c.h.b16 %v221
      %v388 = vunpack.c.l.b16 %v222
      %v389 = vunpack.c.h.b16 %v222
      %v390 = vunpack.c.l.b16 %v223
      %v391 = vunpack.c.h.b16 %v223
      %v392 = vpack.c.b16 %v322, %v320
      %v393 = vpack.c.b16 %v323, %v321
      %v394 = vpack.c.b16 %v326, %v324
      %v395 = vpack.c.b16 %v327, %v325
      %v396 = vpack.c.b16 %v330, %v328
      %v397 = vpack.c.b16 %v331, %v329
      %v398 = vpack.c.b16 %v334, %v332
      %v399 = vpack.c.b16 %v335, %v333
      %v400 = vpack.c.b16 %v338, %v336
      %v401 = vpack.c.b16 %v339, %v337
      %v402 = vpack.c.b16 %v342, %v340
      %v403 = vpack.c.b16 %v343, %v341
      %v404 = vpack.c.b16 %v346, %v344
      %v405 = vpack.c.b16 %v347, %v345
      %v406 = vpack.c.b16 %v350, %v348
      %v407 = vpack.c.b16 %v351, %v349
      %v408 = vpack.c.b16 %v354, %v352
      %v409 = vpack.c.b16 %v355, %v353
      %v410 = vpack.c.b16 %v358, %v356
      %v411 = vpack.c.b16 %v359, %v357
      %v412 = vpack.c.b16 %v362, %v360
      %v413 = vpack.c.b16 %v363, %v361
      %v414 = vpack.c.b16 %v366, %v364
      %v415 = vpack.c.b16 %v367, %v365
      %v416 = vpack.c.b16 %v370, %v368
      %v417 = vpack.c.b16 %v371, %v369
      %v418 = vpack.c.b16 %v374, %v372
      %v419 = vpack.c.b16 %v375, %v373
      %v420 = vpack.c.b16 %v378, %v376
      %v421 = vpack.c.b16 %v379, %v377
      %v422 = vpack.c.b16 %v382, %v380
      %v423 = vpack.c.b16 %v383, %v381
      %v424 = vpack.c.b16 %v386, %v384
      %v425 = vpack.c.b16 %v387, %v385
      %v426 = vpack.c.b16 %v390, %v388
      %v427 = vpack.c.b16 %v391, %v389
      %vm464 = vcmask 261120
      %v466 = vsel %vm464, %v266, 0
      %v469 = vsel %vm464, %v269, 0
      %v472 = vsel %vm464, %v272, 0
      %v475 = vsel %vm464, %v275, 0
      %477 = vmatpush.bf16.msra.mxu0 %v406
      %478 = vmatpush.bf16.msra.mxu0 %v404
      %479 = vmatpush.bf16.msra.mxu0 %v402
      %480 = vmatpush.bf16.msra.mxu0 %v400
      %481 = vmatpush.bf16.msra.mxu0 %v398
      %482 = vmatpush.bf16.msra.mxu0 %v396
      %483 = vmatpush.bf16.msra.mxu0 %v394
      %484 = vmatpush.bf16.msra.mxu0 %v392
      %485 = vmatmul.bf16.gmra.mxu0 %v264
      %v486 = vpop.f32.mrf.mxu0
      %v487 = vadd.f32 0.0, %v486
      %v488 = vpop.f32.mrf.mxu0
      %v489 = vadd.f32 0.0, %v488
      %490 = vmatmul.bf16.gmra.mxu0 %v267
      %v491 = vpop.f32.mrf.mxu0
      %v492 = vadd.f32 0.0, %v491
      %v493 = vpop.f32.mrf.mxu0
      %v494 = vadd.f32 0.0, %v493
      %495 = vmatmul.bf16.gmra.mxu0 %v270
      %v496 = vpop.f32.mrf.mxu0
      %v497 = vadd.f32 0.0, %v496
      %v498 = vpop.f32.mrf.mxu0
      %v499 = vadd.f32 0.0, %v498
      %500 = vmatmul.bf16.gmra.mxu0 %v273
      %v501 = vpop.f32.mrf.mxu0
      %v502 = vadd.f32 0.0, %v501
      %v503 = vpop.f32.mrf.mxu0
      %v504 = vadd.f32 0.0, %v503
      %505 = vdwg.mxu0
      %506 = vmatpush.bf16.msra.mxu0 %v422
      %507 = vmatpush.bf16.msra.mxu0 %v420
      %508 = vmatpush.bf16.msra.mxu0 %v418
      %509 = vmatpush.bf16.msra.mxu0 %v416
      %510 = vmatpush.bf16.msra.mxu0 %v414
      %511 = vmatpush.bf16.msra.mxu0 %v412
      %512 = vmatpush.bf16.msra.mxu0 %v410
      %513 = vmatpush.bf16.msra.mxu0 %v408
      %514 = vmatmul.bf16.gmra.mxu0 %v265
      %v515 = vpop.f32.mrf.mxu0
      %v516 = vadd.f32 %v487, %v515
      %v517 = vpop.f32.mrf.mxu0
      %v518 = vadd.f32 %v489, %v517
      %519 = vmatmul.bf16.gmra.mxu0 %v268
      %v520 = vpop.f32.mrf.mxu0
      %v521 = vadd.f32 %v492, %v520
      %v522 = vpop.f32.mrf.mxu0
      %v523 = vadd.f32 %v494, %v522
      %524 = vmatmul.bf16.gmra.mxu0 %v271
      %v525 = vpop.f32.mrf.mxu0
      %v526 = vadd.f32 %v497, %v525
      %v527 = vpop.f32.mrf.mxu0
      %v528 = vadd.f32 %v499, %v527
      %529 = vmatmul.bf16.gmra.mxu0 %v274
      %v530 = vpop.f32.mrf.mxu0
      %v531 = vadd.f32 %v502, %v530
      %v532 = vpop.f32.mrf.mxu0
      %v533 = vadd.f32 %v504, %v532
      %534 = vdwg.mxu0
      %535 = vmatpush.bf16.msra.mxu0 0
      %536 = vmatpush.bf16.msra.mxu0 0
      %537 = vmatpush.bf16.msra.mxu0 0
      %538 = vmatpush.bf16.msra.mxu0 0
      %539 = vmatpush.bf16.msra.mxu0 0
      %540 = vmatpush.bf16.msra.mxu0 0
      %541 = vmatpush.bf16.msra.mxu0 %v426
      %542 = vmatpush.bf16.msra.mxu0 %v424
      %543 = vmatmul.bf16.gmra.mxu0 %v466
      %v544 = vpop.f32.mrf.mxu0
      %v545 = vadd.f32 %v516, %v544
      %v546 = vpop.f32.mrf.mxu0
      %v547 = vadd.f32 %v518, %v546
      %548 = vmatmul.bf16.gmra.mxu0 %v469
      %v549 = vpop.f32.mrf.mxu0
      %v550 = vadd.f32 %v521, %v549
      %v551 = vpop.f32.mrf.mxu0
      %v552 = vadd.f32 %v523, %v551
      %553 = vmatmul.bf16.gmra.mxu0 %v472
      %v554 = vpop.f32.mrf.mxu0
      %v555 = vadd.f32 %v526, %v554
      %v556 = vpop.f32.mrf.mxu0
      %v557 = vadd.f32 %v528, %v556
      %558 = vmatmul.bf16.gmra.mxu0 %v475
      %v559 = vpop.f32.mrf.mxu0
      %v560 = vadd.f32 %v531, %v559
      %v561 = vpop.f32.mrf.mxu0
      %v562 = vadd.f32 %v533, %v561
      %563 = vdwg.mxu0
      %564 = vmatpush.bf16.msra.mxu0 %v407
      %565 = vmatpush.bf16.msra.mxu0 %v405
      %566 = vmatpush.bf16.msra.mxu0 %v403
      %567 = vmatpush.bf16.msra.mxu0 %v401
      %568 = vmatpush.bf16.msra.mxu0 %v399
      %569 = vmatpush.bf16.msra.mxu0 %v397
      %570 = vmatpush.bf16.msra.mxu0 %v395
      %571 = vmatpush.bf16.msra.mxu0 %v393
      %572 = vmatmul.bf16.gmra.mxu0 %v264
      %v573 = vpop.f32.mrf.mxu0
      %v574 = vadd.f32 0.0, %v573
      %v575 = vpop.f32.mrf.mxu0
      %v576 = vadd.f32 0.0, %v575
      %577 = vmatmul.bf16.gmra.mxu0 %v267
      %v578 = vpop.f32.mrf.mxu0
      %v579 = vadd.f32 0.0, %v578
      %v580 = vpop.f32.mrf.mxu0
      %v581 = vadd.f32 0.0, %v580
      %582 = vmatmul.bf16.gmra.mxu0 %v270
      %v583 = vpop.f32.mrf.mxu0
      %v584 = vadd.f32 0.0, %v583
      %v585 = vpop.f32.mrf.mxu0
      %v586 = vadd.f32 0.0, %v585
      %587 = vmatmul.bf16.gmra.mxu0 %v273
      %v588 = vpop.f32.mrf.mxu0
      %v589 = vadd.f32 0.0, %v588
      %v590 = vpop.f32.mrf.mxu0
      %v591 = vadd.f32 0.0, %v590
      %592 = vdwg.mxu0
      %593 = vmatpush.bf16.msra.mxu0 %v423
      %594 = vmatpush.bf16.msra.mxu0 %v421
      %595 = vmatpush.bf16.msra.mxu0 %v419
      %596 = vmatpush.bf16.msra.mxu0 %v417
      %597 = vmatpush.bf16.msra.mxu0 %v415
      %598 = vmatpush.bf16.msra.mxu0 %v413
      %599 = vmatpush.bf16.msra.mxu0 %v411
      %600 = vmatpush.bf16.msra.mxu0 %v409
      %601 = vmatmul.bf16.gmra.mxu0 %v265
      %v602 = vpop.f32.mrf.mxu0
      %v603 = vadd.f32 %v574, %v602
      %v604 = vpop.f32.mrf.mxu0
      %v605 = vadd.f32 %v576, %v604
      %606 = vmatmul.bf16.gmra.mxu0 %v268
      %v607 = vpop.f32.mrf.mxu0
      %v608 = vadd.f32 %v579, %v607
      %v609 = vpop.f32.mrf.mxu0
      %v610 = vadd.f32 %v581, %v609
      %611 = vmatmul.bf16.gmra.mxu0 %v271
      %v612 = vpop.f32.mrf.mxu0
      %v613 = vadd.f32 %v584, %v612
      %v614 = vpop.f32.mrf.mxu0
      %v615 = vadd.f32 %v586, %v614
      %616 = vmatmul.bf16.gmra.mxu0 %v274
      %v617 = vpop.f32.mrf.mxu0
      %v618 = vadd.f32 %v589, %v617
      %v619 = vpop.f32.mrf.mxu0
      %v620 = vadd.f32 %v591, %v619
      %621 = vdwg.mxu0
      %622 = vmatpush.bf16.msra.mxu0 0
      %623 = vmatpush.bf16.msra.mxu0 0
      %624 = vmatpush.bf16.msra.mxu0 0
      %625 = vmatpush.bf16.msra.mxu0 0
      %626 = vmatpush.bf16.msra.mxu0 0
      %627 = vmatpush.bf16.msra.mxu0 0
      %628 = vmatpush.bf16.msra.mxu0 %v427
      %629 = vmatpush.bf16.msra.mxu0 %v425
      %630 = vmatmul.bf16.gmra.mxu0 %v466
      %v631 = vpop.f32.mrf.mxu0
      %v632 = vadd.f32 %v603, %v631
      %v633 = vpop.f32.mrf.mxu0
      %v634 = vadd.f32 %v605, %v633
      %635 = vmatmul.bf16.gmra.mxu0 %v469
      %v636 = vpop.f32.mrf.mxu0
      %v637 = vadd.f32 %v608, %v636
      %v638 = vpop.f32.mrf.mxu0
      %v639 = vadd.f32 %v610, %v638
      %640 = vmatmul.bf16.gmra.mxu0 %v472
      %v641 = vpop.f32.mrf.mxu0
      %v642 = vadd.f32 %v613, %v641
      %v643 = vpop.f32.mrf.mxu0
      %v644 = vadd.f32 %v615, %v643
      %645 = vmatmul.bf16.gmra.mxu0 %v475
      %v646 = vpop.f32.mrf.mxu0
      %v647 = vadd.f32 %v618, %v646
      %v648 = vpop.f32.mrf.mxu0
      %v649 = vadd.f32 %v620, %v648
      %650 = vdwg.mxu0
      %v651 = vld [vmem:[%s2] sm:$0xff]
      %v652 = vld [vmem:[%s2 + $0x8] sm:$0xff]
      %v653 = vld [vmem:[%s2 + $0x10] sm:$0xff]
      %v654 = vld [vmem:[%s2 + $0x18] sm:$0xff]
      %v655 = vld [vmem:[%s2 + $0x20] sm:$0xff]
      %v656 = vld [vmem:[%s2 + $0x28] sm:$0xff]
      %v657 = vld [vmem:[%s2 + $0x30] sm:$0xff]
      %v658 = vld [vmem:[%s2 + $0x38] sm:$0xff]
      %v659 = vld [vmem:[%s2 + $0x40] sm:$0xff]
      %v660 = vld [vmem:[%s2 + $0x48] sm:$0xff]
      %v661 = vld [vmem:[%s2 + $0x50] sm:$0xff]
      %v662 = vld [vmem:[%s2 + $0x58] sm:$0xff]
      %v663 = vld [vmem:[%s2 + $0x60] sm:$0xff]
      %v664 = vld [vmem:[%s2 + $0x68] sm:$0xff]
      %v665 = vld [vmem:[%s2 + $0x70] sm:$0xff]
      %v666 = vld [vmem:[%s2 + $0x78] sm:$0xff]
      %v667 = vmul.f32 %v545, %v651
      %v668 = vmul.f32 %v632, %v652
      %v669 = vmul.f32 %v547, %v653
      %v670 = vmul.f32 %v634, %v654
      %v671 = vmul.f32 %v550, %v655
      %v672 = vmul.f32 %v637, %v656
      %v673 = vmul.f32 %v552, %v657
      %v674 = vmul.f32 %v639, %v658
      %v675 = vmul.f32 %v555, %v659
      %v676 = vmul.f32 %v642, %v660
      %v677 = vmul.f32 %v557, %v661
      %v678 = vmul.f32 %v644, %v662
      %v679 = vmul.f32 %v560, %v663
      %v680 = vmul.f32 %v647, %v664
      %v681 = vmul.f32 %v562, %v665
      %v682 = vmul.f32 %v649, %v666
      %vm683 = vcmask 334848
      %v684 = vsel %vm683, %v668, 0.0
      %v685 = vadd.f32 %v667, %v684
      %686 = vadd.xlane.f32.xlu0 %v685
      %v687 = vpop.xlane.xlu0 %686
      %v688 = vsel %vm683, %v670, 0.0
      %v689 = vadd.f32 %v669, %v688
      %690 = vadd.xlane.f32.xlu0 %v689
      %v691 = vpop.xlane.xlu0 %690
      %v692 = vsel %vm683, %v672, 0.0
      %v693 = vadd.f32 %v671, %v692
      %694 = vadd.xlane.f32.xlu0 %v693
      %v695 = vpop.xlane.xlu0 %694
      %v696 = vsel %vm683, %v674, 0.0
      %v697 = vadd.f32 %v673, %v696
      %698 = vadd.xlane.f32.xlu0 %v697
      %v699 = vpop.xlane.xlu0 %698
      %v700 = vsel %vm683, %v676, 0.0
      %v701 = vadd.f32 %v675, %v700
      %702 = vadd.xlane.f32.xlu0 %v701
      %v703 = vpop.xlane.xlu0 %702
      %v704 = vsel %vm683, %v678, 0.0
      %v705 = vadd.f32 %v677, %v704
      %706 = vadd.xlane.f32.xlu0 %v705
      %v707 = vpop.xlane.xlu0 %706
      %v708 = vsel %vm683, %v680, 0.0
      %v709 = vadd.f32 %v679, %v708
      %710 = vadd.xlane.f32.xlu0 %v709
      %v711 = vpop.xlane.xlu0 %710
      %v712 = vsel %vm683, %v682, 0.0
      %v713 = vadd.f32 %v681, %v712
      %714 = vadd.xlane.f32.xlu0 %v713
      %v715 = vpop.xlane.xlu0 %714
      %v716 = vmul.f32 %v667, %v667
      %v717 = vmul.f32 %v668, %v668
      %v718 = vmul.f32 %v669, %v669
      %v719 = vmul.f32 %v670, %v670
      %v720 = vmul.f32 %v671, %v671
      %v721 = vmul.f32 %v672, %v672
      %v722 = vmul.f32 %v673, %v673
      %v723 = vmul.f32 %v674, %v674
      %v724 = vmul.f32 %v675, %v675
      %v725 = vmul.f32 %v676, %v676
      %v726 = vmul.f32 %v677, %v677
      %v727 = vmul.f32 %v678, %v678
      %v728 = vmul.f32 %v679, %v679
      %v729 = vmul.f32 %v680, %v680
      %v730 = vmul.f32 %v681, %v681
      %v731 = vmul.f32 %v682, %v682
      %v732 = vsel %vm683, %v717, 0.0
      %v733 = vadd.f32 %v716, %v732
      %734 = vadd.xlane.f32.xlu0 %v733
      %v735 = vpop.xlane.xlu0 %734
      %v736 = vsel %vm683, %v719, 0.0
      %v737 = vadd.f32 %v718, %v736
      %738 = vadd.xlane.f32.xlu0 %v737
      %v739 = vpop.xlane.xlu0 %738
      %v740 = vsel %vm683, %v721, 0.0
      %v741 = vadd.f32 %v720, %v740
      %742 = vadd.xlane.f32.xlu0 %v741
      %v743 = vpop.xlane.xlu0 %742
      %v744 = vsel %vm683, %v723, 0.0
      %v745 = vadd.f32 %v722, %v744
      %746 = vadd.xlane.f32.xlu0 %v745
      %v747 = vpop.xlane.xlu0 %746
      %v748 = vsel %vm683, %v725, 0.0
      %v749 = vadd.f32 %v724, %v748
      %750 = vadd.xlane.f32.xlu0 %v749
      %v751 = vpop.xlane.xlu0 %750
      %v752 = vsel %vm683, %v727, 0.0
      %v753 = vadd.f32 %v726, %v752
      %754 = vadd.xlane.f32.xlu0 %v753
      %v755 = vpop.xlane.xlu0 %754
      %v756 = vsel %vm683, %v729, 0.0
      %v757 = vadd.f32 %v728, %v756
      %758 = vadd.xlane.f32.xlu0 %v757
      %v759 = vpop.xlane.xlu0 %758
      %v760 = vsel %vm683, %v731, 0.0
      %v761 = vadd.f32 %v730, %v760
      %762 = vadd.xlane.f32.xlu0 %v761
      %v763 = vpop.xlane.xlu0 %762
      %v764 = vadd.f32 %v687, %v695
      %v765 = vadd.f32 %v691, %v699
      %v766 = vadd.f32 %v735, %v743
      %v767 = vadd.f32 %v739, %v747
      %v768 = vadd.f32 %v764, %v703
      %v769 = vadd.f32 %v765, %v707
      %v770 = vadd.f32 %v766, %v751
      %v771 = vadd.f32 %v767, %v755
      %v772 = vadd.f32 %v768, %v711
      %v773 = vadd.f32 %v769, %v715
      %v774 = vadd.f32 %v770, %v759
      %v775 = vadd.f32 %v771, %v763
      %v776 = vmul.f32 %v772, 0.0016
      %v777 = vmul.f32 %v773, 0.0016
      %v778 = vmul.f32 %v774, 0.0016
      %v779 = vmul.f32 %v775, 0.0016
      %v780 = vmul.f32 %v776, %v776
      %v781 = vmul.f32 %v777, %v777
      %v782 = vsub.f32 %v778, %v780
      %v783 = vsub.f32 %v779, %v781
      %v784 = vadd.f32 %v782, 1e-05
      %v785 = vadd.f32 %v783, 1e-05
      %v786 = vrsqrt.pop %v784
      %v787 = vmul.f32 %v786, %v784
      %v788 = vmul.f32 %v787, %v786
      %v789 = vmul.f32 0.5, %v788
      %v790 = vsub.f32 1.5, %v789
      %v791 = vmul.f32 %v786, %v790
      %vm792 = vweird.f32 %v784
      %vm793 = vweird.f32 %v786
      %vm794 = vmor %vm792, %vm793
      %v795 = vsel %vm794, %v786, %v791
      %v796 = vrsqrt.pop %v785
      %v797 = vmul.f32 %v796, %v785
      %v798 = vmul.f32 %v797, %v796
      %v799 = vmul.f32 0.5, %v798
      %v800 = vsub.f32 1.5, %v799
      %v801 = vmul.f32 %v796, %v800
      %vm802 = vweird.f32 %v785
      %vm803 = vweird.f32 %v796
      %vm804 = vmor %vm802, %vm803
      %v805 = vsel %vm804, %v796, %v801
      %807 = vset.pattern.permute.xlu0 0
      %808 = vperm.xlu0 %807, %v776
      %v809 = vpop.permute.xlu0 %808
      %812 = vset.pattern.permute.xlu0 0
      %813 = vperm.xlu0 %812, %v777
      %v814 = vpop.permute.xlu0 %813
      %v816 = vsub.f32 %v545, %v809
      %v817 = vsub.f32 %v632, %v809
      %v818 = vsub.f32 %v547, %v814
      %v819 = vsub.f32 %v634, %v814
      %v820 = vsub.f32 %v550, %v809
      %v821 = vsub.f32 %v637, %v809
      %v822 = vsub.f32 %v552, %v814
      %v823 = vsub.f32 %v639, %v814
      %v824 = vsub.f32 %v555, %v809
      %v825 = vsub.f32 %v642, %v809
      %v826 = vsub.f32 %v557, %v814
      %v827 = vsub.f32 %v644, %v814
      %v828 = vsub.f32 %v560, %v809
      %v829 = vsub.f32 %v647, %v809
      %v830 = vsub.f32 %v562, %v814
      %v831 = vsub.f32 %v649, %v814
      %833 = vset.pattern.permute.xlu0 0
      %834 = vperm.xlu0 %833, %v795
      %v835 = vpop.permute.xlu0 %834
      %838 = vset.pattern.permute.xlu0 0
      %839 = vperm.xlu0 %838, %v805
      %v840 = vpop.permute.xlu0 %839
      %v842 = vmul.f32 %v816, %v835
      %v843 = vmul.f32 %v817, %v835
      %v844 = vmul.f32 %v818, %v840
      %v845 = vmul.f32 %v819, %v840
      %v846 = vmul.f32 %v820, %v835
      %v847 = vmul.f32 %v821, %v835
      %v848 = vmul.f32 %v822, %v840
      %v849 = vmul.f32 %v823, %v840
      %v850 = vmul.f32 %v824, %v835
      %v851 = vmul.f32 %v825, %v835
      %v852 = vmul.f32 %v826, %v840
      %v853 = vmul.f32 %v827, %v840
      %v854 = vmul.f32 %v828, %v835
      %v855 = vmul.f32 %v829, %v835
      %v856 = vmul.f32 %v830, %v840
      %v857 = vmul.f32 %v831, %v840
      %v858 = vmax.f32 %v842, 0.0
      %v859 = vmax.f32 %v843, 0.0
      %v860 = vmax.f32 %v844, 0.0
      %v861 = vmax.f32 %v845, 0.0
      %v862 = vmax.f32 %v846, 0.0
      %v863 = vmax.f32 %v847, 0.0
      %v864 = vmax.f32 %v848, 0.0
      %v865 = vmax.f32 %v849, 0.0
      %v866 = vmax.f32 %v850, 0.0
      %v867 = vmax.f32 %v851, 0.0
      %v868 = vmax.f32 %v852, 0.0
      %v869 = vmax.f32 %v853, 0.0
      %v870 = vmax.f32 %v854, 0.0
      %v871 = vmax.f32 %v855, 0.0
      %v872 = vmax.f32 %v856, 0.0
      %v873 = vmax.f32 %v857, 0.0
      %v874 = vpack.c.bf16 %v859, %v858
      %v875 = vpack.c.bf16 %v861, %v860
      %v876 = vpack.c.bf16 %v863, %v862
      %v877 = vpack.c.bf16 %v865, %v864
      %v878 = vpack.c.bf16 %v867, %v866
      %v879 = vpack.c.bf16 %v869, %v868
      %v880 = vpack.c.bf16 %v871, %v870
      %v881 = vpack.c.bf16 %v873, %v872
      %vm882 = vcmask 1043456
      %vm883 = vcmask 334852
      %vm884 = vmor %vm883, %vm882
      %885 = vst.msk [vmem:[%s170] sm:$0xff] %vm884, %v874
      %886 = vst.msk [vmem:[%s170 + $0x8] sm:$0xff] %vm884, %v875
      %887 = vst.msk [vmem:[%s170 + $0x10] sm:$0xff] %vm884, %v876
      %888 = vst.msk [vmem:[%s170 + $0x18] sm:$0xff] %vm884, %v877
      %889 = vst.msk [vmem:[%s170 + $0x20] sm:$0xff] %vm884, %v878
      %890 = vst.msk [vmem:[%s170 + $0x28] sm:$0xff] %vm884, %v879
      %891 = vst.msk [vmem:[%s170 + $0x30] sm:$0xff] %vm884, %v880
      %892 = vst.msk [vmem:[%s170 + $0x38] sm:$0xff] %vm884, %v881
      %p893 = scmp.lt.s32.totalorder %s14, 1
      %s894 = scalar_select %p893, %s14, 1
      %s895 = smul.addr %s894, 16
      %s896 = smul.addr %s895, 4
      %s897 = scalar_lea.vmem %s3, %s896
      // Predicated region
      $region33: #{netg_forward.7} parent=31 // pred_check
        %p898 = pneg %p100
      $region34: #{netg_forward.7} parent=31 // pred_check_branch
        %900 = sbr.rel (%p898) target = $region36
      $region35: #{netg_forward.7} parent=31 // pred_region
        _
      $region36: #{netg_forward.7} parent=31 // pred_fallthru
        _
    $region32: #{netg_forward.7} parent=5 // pred_fallthru
      _
    %p901 = scmp.le.s32.totalorder 2, %s9
    // Predicated region
    $region37: #{netg_forward.7} parent=5 // pred_check
      %p902 = pneg %p901
    $region38: #{netg_forward.7} parent=5 // pred_check_branch
      %904 = sbr.rel (%p902) target = $region40
    $region39: #{netg_forward.7} parent=5 // pred_region
      %s905 = ssub.s32 %s9, 2
      // Predicated region
      $region41: #{netg_forward.7} parent=39 // pred_check
        %p906 = pneg %p106
      $region42: #{netg_forward.7} parent=39 // pred_check_branch
        %908 = sbr.rel (%p906) target = $region44
      $region43: #{netg_forward.7} parent=39 // pred_region
        %p909 = scmp.lt.s32.totalorder %s15, 1
        %s910 = scalar_select %p909, %s15, 1
        %s911 = smul.addr %s910, 16
        %s912 = smul.addr %s911, 4
        %s913 = scalar_lea.vmem %s3, %s912
      $region44: #{netg_forward.7} parent=39 // pred_fallthru
        _
    $region40: #{netg_forward.7} parent=5 // pred_fallthru
      _
  $region6: #{netg_forward.7} parent=0 // loop_footer
    %s13 = sadd.s32 1, %s9
  $region7: #{netg_forward.7} parent=0 // loop_footer_branch
    %8 = sbr.rel target = $region3
  $region8: #{netg_forward.7} parent=0 // loop_exit
    _

// kernel: netg_forward.8
$region0: #{netg_forward.8}
  #allocation0 [shape = 'u32[]', space=smem, size = 0x4, offset = 0x4, fixed_abs, tag = 'smem constant byte address 0x4 - core index']
  #allocation1 [shape = 'u32[72,128]{1,0:T(1,128)}', space=vmem, size = 0x9000, scoped, tag = 'internal scratch']
  %s0 = inlined_call_operand.vmem [shape: bf16[2,144,625], index: 0, kind: input, shape index: {}]
  %s1 = inlined_call_operand.vmem [shape: bf16[32,144], index: 1, kind: input, shape index: {}]
  %s2 = inlined_call_operand.vmem [shape: bf16[2,32,625], index: 2, kind: output, shape index: {}]
  %s3 = sld [smem:[#allocation0]]
  $region41: #{netg_forward.8} parent=0
    _
  %s5 = ssub.s32 1, %s3
  %s6 = scalar_select 0, %s5, %s3
  loop: start=0, step=1, limit=4
  $region2: #{netg_forward.8} parent=0 // loop_pre_header
    _
  $region3: #{netg_forward.8} parent=0 // loop_header
    %s8 = sphi 0, %s12
    %p9 = scmp.ge.s32.totalorder %s8, 4
    %s18 = sphi 0, %s20
    %s21 = sphi 0, %s18
    %s22 = sphi 0, %s21
    %s38 = sphi 0, %s22
    %s42 = sphi 0, %s42
    %s44 = sphi 0, %s42
    %s45 = sphi 0, %s44
    %s59 = sphi 0, %s45
    %s65 = sphi 0, %s67
    %s68 = sphi 0, %s65
    %s69 = sphi 0, %s68
    %s85 = sphi 0, %s69
  $region4: #{netg_forward.8} parent=0 // loop_header_branch
    %11 = sbr.rel (%p9) target = $region8
  $region5: #{netg_forward.8} parent=0 // loop_body
    %s13 = ssub.s32 %s8, 1
    %s14 = ssub.s32 %s8, 2
    %s15 = sadd.s32 %s8, 1
    %s16 = ssub.s32 %s8, %s15
    %p17 = scmp.eq.s32.totalorder %s16, 0
    %s19 = sadd.s32 %s18, 1
    %s20 = scalar_select %p17, %s18, %s19
    %p23 = pneg %p17
    %p24 = scmp.eq.s32.totalorder %s8, 1
    %p25 = por %p23, %p24
    %p26 = scmp.ne.s32.totalorder %s18, %s21
    %p27 = scmp.eq.s32.totalorder %s8, 0
    %p28 = por %p26, %p27
    %p29 = scmp.ne.s32.totalorder %s18, %s21
    %p30 = scmp.eq.s32.totalorder %s13, 1
    %p31 = por %p29, %p30
    %p32 = scmp.ne.s32.totalorder %s21, %s22
    %p33 = scmp.eq.s32.totalorder %s13, 0
    %p34 = por %p32, %p33
    %p35 = scmp.ne.s32.totalorder %s21, %s22
    %p36 = scmp.eq.s32.totalorder %s14, 1
    %p37 = por %p35, %p36
    %p39 = scmp.ne.s32.totalorder %s22, %s38
    %p40 = scmp.eq.s32.totalorder %s14, 0
    %p41 = por %p39, %p40
    %s43 = sadd.s32 %s42, 1
    %p46 = scmp.eq.s32.totalorder %s8, 1
    %p47 = scmp.ne.s32.totalorder %s42, %s44
    %p48 = scmp.eq.s32.totalorder %s8, 0
    %p49 = por %p47, %p48
    %p50 = scmp.ne.s32.totalorder %s42, %s44
    %p51 = scmp.eq.s32.totalorder %s13, 1
    %p52 = por %p50, %p51
    %p53 = scmp.ne.s32.totalorder %s44, %s45
    %p54 = scmp.eq.s32.totalorder %s13, 0
    %p55 = por %p53, %p54
    %p56 = scmp.ne.s32.totalorder %s44, %s45
    %p57 = scmp.eq.s32.totalorder %s14, 1
    %p58 = por %p56, %p57
    %p60 = scmp.ne.s32.totalorder %s45, %s59
    %p61 = scmp.eq.s32.totalorder %s14, 0
    %p62 = por %p60, %p61
    %s63 = ssub.s32 %s8, %s15
    %p64 = scmp.eq.s32.totalorder %s63, 0
    %s66 = sadd.s32 %s65, 1
    %s67 = scalar_select %p64, %s65, %s66
    %p70 = pneg %p64
    %p71 = scmp.eq.s32.totalorder %s8, 1
    %p72 = por %p70, %p71
    %p73 = scmp.ne.s32.totalorder %s65, %s68
    %p74 = scmp.eq.s32.totalorder %s8, 0
    %p75 = por %p73, %p74
    %p76 = scmp.ne.s32.totalorder %s65, %s68
    %p77 = scmp.eq.s32.totalorder %s13, 1
    %p78 = por %p76, %p77
    %p79 = scmp.ne.s32.totalorder %s68, %s69
    %p80 = scmp.eq.s32.totalorder %s13, 0
    %p81 = por %p79, %p80
    %p82 = scmp.ne.s32.totalorder %s68, %s69
    %p83 = scmp.eq.s32.totalorder %s14, 1
    %p84 = por %p82, %p83
    %p86 = scmp.ne.s32.totalorder %s69, %s85
    %p87 = scmp.eq.s32.totalorder %s14, 0
    %p88 = por %p86, %p87
    %p89 = scmp.le.s32.totalorder 1, %s8
    %p90 = scmp.lt.s32.totalorder %s8, 3
    %p91 = pnand %p89, %p90
    %p92 = pneg %p91
    // Predicated region
    $region9: #{netg_forward.8} parent=5 // pred_check
      _
    $region10: #{netg_forward.8} parent=5 // pred_check_branch
      %94 = sbr.rel (%p91) target = $region12
    $region11: #{netg_forward.8} parent=5 // pred_region
      %s95 = ssub.s32 %s8, 1
      // Predicated region
      $region13: #{netg_forward.8} parent=11 // pred_check
        %p96 = pneg %p55
      $region14: #{netg_forward.8} parent=11 // pred_check_branch
        %98 = sbr.rel (%p96) target = $region16
      $region15: #{netg_forward.8} parent=11 // pred_region
        _
      $region16: #{netg_forward.8} parent=11 // pred_fallthru
        _
    $region12: #{netg_forward.8} parent=5 // pred_fallthru
      _
    %p99 = scmp.lt.s32.totalorder %s8, 2
    // Predicated region
    $region17: #{netg_forward.8} parent=5 // pred_check
      %p100 = pneg %p99
    $region18: #{netg_forward.8} parent=5 // pred_check_branch
      %102 = sbr.rel (%p100) target = $region20
    $region19: #{netg_forward.8} parent=5 // pred_region
      // Predicated region
      $region21: #{netg_forward.8} parent=19 // pred_check
        %p103 = pneg %p28
      $region22: #{netg_forward.8} parent=19 // pred_check_branch
        %105 = sbr.rel (%p103) target = $region24
      $region23: #{netg_forward.8} parent=19 // pred_region
        %p106 = scmp.lt.s32.totalorder %s8, 1
        %s107 = scalar_select %p106, %s8, 1
        %s108 = smul.addr %s107, 90
        %s109 = smul.addr %s108, 4
        %s110 = scalar_lea.vmem %s0, %s109
      $region24: #{netg_forward.8} parent=19 // pred_fallthru
        _
    $region20: #{netg_forward.8} parent=5 // pred_fallthru
      _
    %p111 = scmp.le.s32.totalorder 1, %s8
    %p112 = scmp.lt.s32.totalorder %s8, 3
    %p113 = pnand %p111, %p112
    %p114 = pneg %p113
    // Predicated region
    $region25: #{netg_forward.8} parent=5 // pred_check
      _
    $region26: #{netg_forward.8} parent=5 // pred_check_branch
      %116 = sbr.rel (%p113) target = $region28
    $region27: #{netg_forward.8} parent=5 // pred_region
      %s117 = ssub.s32 %s8, 1
      %p118 = scmp.lt.s32.totalorder %s13, 1
      %s119 = scalar_select %p118, %s13, 1
      %s120 = smul.addr %s119, 90
      %s121 = smul.addr %s120, 4
      %s122 = scalar_lea.vmem %s0, %s121
      %p123 = pneg %p34
      %p124 = pneg %p31
      %p125 = pneg %p55
      %p126 = pneg %p52
      %p127 = pneg %p81
      %p128 = pneg %p78
      %p129 = scmp.lt.s32.totalorder %s13, 1
      %s130 = scalar_select %p129, %s13, 1
      %s131 = smul.addr %s130, 20
      %s132 = smul.addr %s131, 4
      %s133 = scalar_lea.vmem %s2, %s132
      %p134 = scmp.lt.s32.totalorder %s13, 1
      %s135 = scalar_select %p134, %s13, 1
      %s136 = smul.addr %s135, 90
      %s137 = smul.addr %s136, 4
      %s138 = scalar_lea.vmem %s0, %s137
      %p139 = scmp.lt.s32.totalorder %s13, 1
      %s140 = scalar_select %p139, %s13, 1
      %s141 = smul.addr %s140, 20
      %s142 = smul.addr %s141, 4
      %s143 = scalar_lea.vmem %s2, %s142
      %v145 = vld [vmem:[%s1] sm:$0xff]
      %v146 = vld [vmem:[%s1 + $0x8] sm:$0xff]
      %v147 = vld [vmem:[%s1 + $0x10] sm:$0xff]
      %v148 = vld [vmem:[%s1 + $0x18] sm:$0xff]
      %v149 = vld [vmem:[%s138] sm:$0xff]
      %v150 = vld [vmem:[%s138 + $0x8] sm:$0xff]
      %v151 = vld [vmem:[%s138 + $0x10] sm:$0xf]
      %v152 = vld [vmem:[%s138 + $0x14] sm:$0xff]
      %v153 = vld [vmem:[%s138 + $0x1c] sm:$0xff]
      %v154 = vld [vmem:[%s138 + $0x24] sm:$0xf]
      %v155 = vld [vmem:[%s138 + $0x28] sm:$0xff]
      %v156 = vld [vmem:[%s138 + $0x30] sm:$0xff]
      %v157 = vld [vmem:[%s138 + $0x38] sm:$0xf]
      %v158 = vld [vmem:[%s138 + $0x3c] sm:$0xff]
      %v159 = vld [vmem:[%s138 + $0x44] sm:$0xff]
      %v160 = vld [vmem:[%s138 + $0x4c] sm:$0xf]
      %v161 = vld [vmem:[%s138 + $0x50] sm:$0xff]
      %v162 = vld [vmem:[%s138 + $0x58] sm:$0xff]
      %v163 = vld [vmem:[%s138 + $0x60] sm:$0xf]
      %v164 = vld [vmem:[%s138 + $0x64] sm:$0xff]
      %v165 = vld [vmem:[%s138 + $0x6c] sm:$0xff]
      %v166 = vld [vmem:[%s138 + $0x74] sm:$0xf]
      %v167 = vld [vmem:[%s138 + $0x78] sm:$0xff]
      %v168 = vld [vmem:[%s138 + $0x80] sm:$0xff]
      %v169 = vld [vmem:[%s138 + $0x88] sm:$0xf]
      %v170 = vld [vmem:[%s138 + $0x8c] sm:$0xff]
      %v171 = vld [vmem:[%s138 + $0x94] sm:$0xff]
      %v172 = vld [vmem:[%s138 + $0x9c] sm:$0xf]
      %v173 = vld [vmem:[%s138 + $0xa0] sm:$0xff]
      %v174 = vld [vmem:[%s138 + $0xa8] sm:$0xff]
      %v175 = vld [vmem:[%s138 + $0xb0] sm:$0xf]
      %v176 = vld [vmem:[%s138 + $0xb4] sm:$0xff]
      %v177 = vld [vmem:[%s138 + $0xbc] sm:$0xff]
      %v178 = vld [vmem:[%s138 + $0xc4] sm:$0xf]
      %v179 = vld [vmem:[%s138 + $0xc8] sm:$0xff]
      %v180 = vld [vmem:[%s138 + $0xd0] sm:$0xff]
      %v181 = vld [vmem:[%s138 + $0xd8] sm:$0xf]
      %v182 = vld [vmem:[%s138 + $0xdc] sm:$0xff]
      %v183 = vld [vmem:[%s138 + $0xe4] sm:$0xff]
      %v184 = vld [vmem:[%s138 + $0xec] sm:$0xf]
      %v185 = vld [vmem:[%s138 + $0xf0] sm:$0xff]
      %v186 = vld [vmem:[%s138 + $0xf8] sm:$0xff]
      %v187 = vld [vmem:[%s138 + $0x100] sm:$0xf]
      %v188 = vld [vmem:[%s138 + $0x104] sm:$0xff]
      %v189 = vld [vmem:[%s138 + $0x10c] sm:$0xff]
      %v190 = vld [vmem:[%s138 + $0x114] sm:$0xf]
      %v191 = vld [vmem:[%s138 + $0x118] sm:$0xff]
      %v192 = vld [vmem:[%s138 + $0x120] sm:$0xff]
      %v193 = vld [vmem:[%s138 + $0x128] sm:$0xf]
      %v194 = vld [vmem:[%s138 + $0x12c] sm:$0xff]
      %v195 = vld [vmem:[%s138 + $0x134] sm:$0xff]
      %v196 = vld [vmem:[%s138 + $0x13c] sm:$0xf]
      %v197 = vld [vmem:[%s138 + $0x140] sm:$0xff]
      %v198 = vld [vmem:[%s138 + $0x148] sm:$0xff]
      %v199 = vld [vmem:[%s138 + $0x150] sm:$0xf]
      %v200 = vld [vmem:[%s138 + $0x154] sm:$0xff]
      %v201 = vld [vmem:[%s138 + $0x15c] sm:$0xff]
      %v202 = vld [vmem:[%s138 + $0x164] sm:$0xf]
      %v207 = vunpack.c.l.b16 %v145
      %v208 = vunpack.c.h.b16 %v145
      %v209 = vunpack.c.l.b16 %v146
      %v210 = vunpack.c.h.b16 %v146
      %v211 = vunpack.c.l.b16 %v147
      %v212 = vunpack.c.h.b16 %v147
      %v213 = vunpack.c.l.b16 %v148
      %v214 = vunpack.c.h.b16 %v148
      %v215 = vpack.c.b16 %v209, %v207
      %v216 = vpack.c.b16 %v210, %v208
      %v217 = vpack.c.b16 %v213, %v211
      %v218 = vpack.c.b16 %v214, %v212
      %v275 = vunpack.c.l.b16 %v149
      %v276 = vunpack.c.h.b16 %v149
      %v277 = vunpack.c.l.b16 %v150
      %v278 = vunpack.c.h.b16 %v150
      %v279 = vunpack.c.l.b16 %v151
      %v280 = vunpack.c.l.b16 %v152
      %v281 = vunpack.c.h.b16 %v152
      %v282 = vunpack.c.l.b16 %v153
      %v283 = vunpack.c.h.b16 %v153
      %v284 = vunpack.c.l.b16 %v154
      %v285 = vunpack.c.l.b16 %v155
      %v286 = vunpack.c.h.b16 %v155
      %v287 = vunpack.c.l.b16 %v156
      %v288 = vunpack.c.h.b16 %v156
      %v289 = vunpack.c.l.b16 %v157
      %v290 = vunpack.c.l.b16 %v158
      %v291 = vunpack.c.h.b16 %v158
      %v292 = vunpack.c.l.b16 %v159
      %v293 = vunpack.c.h.b16 %v159
      %v294 = vunpack.c.l.b16 %v160
      %v295 = vunpack.c.l.b16 %v161
      %v296 = vunpack.c.h.b16 %v161
      %v297 = vunpack.c.l.b16 %v162
      %v298 = vunpack.c.h.b16 %v162
      %v299 = vunpack.c.l.b16 %v163
      %v300 = vunpack.c.l.b16 %v164
      %v301 = vunpack.c.h.b16 %v164
      %v302 = vunpack.c.l.b16 %v165
      %v303 = vunpack.c.h.b16 %v165
      %v304 = vunpack.c.l.b16 %v166
      %v305 = vunpack.c.l.b16 %v167
      %v306 = vunpack.c.h.b16 %v167
      %v307 = vunpack.c.l.b16 %v168
      %v308 = vunpack.c.h.b16 %v168
      %v309 = vunpack.c.l.b16 %v169
      %v310 = vunpack.c.l.b16 %v170
      %v311 = vunpack.c.h.b16 %v170
      %v312 = vunpack.c.l.b16 %v171
      %v313 = vunpack.c.h.b16 %v171
      %v314 = vunpack.c.l.b16 %v172
      %v315 = vunpack.c.l.b16 %v173
      %v316 = vunpack.c.h.b16 %v173
      %v317 = vunpack.c.l.b16 %v174
      %v318 = vunpack.c.h.b16 %v174
      %v319 = vunpack.c.l.b16 %v175
      %v320 = vunpack.c.l.b16 %v176
      %v321 = vunpack.c.h.b16 %v176
      %v322 = vunpack.c.l.b16 %v177
      %v323 = vunpack.c.h.b16 %v177
      %v324 = vunpack.c.l.b16 %v178
      %v325 = vunpack.c.l.b16 %v179
      %v326 = vunpack.c.h.b16 %v179
      %v327 = vunpack.c.l.b16 %v180
      %v328 = vunpack.c.h.b16 %v180
      %v329 = vunpack.c.l.b16 %v181
      %v330 = vunpack.c.l.b16 %v182
      %v331 = vunpack.c.h.b16 %v182
      %v332 = vunpack.c.l.b16 %v183
      %v333 = vunpack.c.h.b16 %v183
      %v334 = vunpack.c.l.b16 %v184
      %v335 = vunpack.c.l.b16 %v185
      %v336 = vunpack.c.h.b16 %v185
      %v337 = vunpack.c.l.b16 %v186
      %v338 = vunpack.c.h.b16 %v186
      %v339 = vunpack.c.l.b16 %v187
      %v340 = vunpack.c.l.b16 %v188
      %v341 = vunpack.c.h.b16 %v188
      %v342 = vunpack.c.l.b16 %v189
      %v343 = vunpack.c.h.b16 %v189
      %v344 = vunpack.c.l.b16 %v190
      %v345 = vunpack.c.l.b16 %v191
      %v346 = vunpack.c.h.b16 %v191
      %v347 = vunpack.c.l.b16 %v192
      %v348 = vunpack.c.h.b16 %v192
      %v349 = vunpack.c.l.b16 %v193
      %v350 = vunpack.c.l.b16 %v194
      %v351 = vunpack.c.h.b16 %v194
      %v352 = vunpack.c.l.b16 %v195
      %v353 = vunpack.c.h.b16 %v195
      %v354 = vunpack.c.l.b16 %v196
      %v355 = vunpack.c.l.b16 %v197
      %v356 = vunpack.c.h.b16 %v197
      %v357 = vunpack.c.l.b16 %v198
      %v358 = vunpack.c.h.b16 %v198
      %v359 = vunpack.c.l.b16 %v199
      %v360 = vunpack.c.l.b16 %v200
      %v361 = vunpack.c.h.b16 %v200
      %v362 = vunpack.c.l.b16 %v201
      %v363 = vunpack.c.h.b16 %v201
      %v364 = vunpack.c.l.b16 %v202
      %v365 = vpack.c.b16 %v280, %v275
      %v366 = vpack.c.b16 %v281, %v276
      %v367 = vpack.c.b16 %v282, %v277
      %v368 = vpack.c.b16 %v283, %v278
      %v369 = vpack.c.b16 %v284, %v279
      %v370 = vpack.c.b16 %v290, %v285
      %v371 = vpack.c.b16 %v291, %v286
      %v372 = vpack.c.b16 %v292, %v287
      %v373 = vpack.c.b16 %v293, %v288
      %v374 = vpack.c.b16 %v294, %v289
      %v375 = vpack.c.b16 %v300, %v295
      %v376 = vpack.c.b16 %v301, %v296
      %v377 = vpack.c.b16 %v302, %v297
      %v378 = vpack.c.b16 %v303, %v298
      %v379 = vpack.c.b16 %v304, %v299
      %v380 = vpack.c.b16 %v310, %v305
      %v381 = vpack.c.b16 %v311, %v306
      %v382 = vpack.c.b16 %v312, %v307
      %v383 = vpack.c.b16 %v313, %v308
      %v384 = vpack.c.b16 %v314, %v309
      %v385 = vpack.c.b16 %v320, %v315
      %v386 = vpack.c.b16 %v321, %v316
      %v387 = vpack.c.b16 %v322, %v317
      %v388 = vpack.c.b16 %v323, %v318
      %v389 = vpack.c.b16 %v324, %v319
      %v390 = vpack.c.b16 %v330, %v325
      %v391 = vpack.c.b16 %v331, %v326
      %v392 = vpack.c.b16 %v332, %v327
      %v393 = vpack.c.b16 %v333, %v328
      %v394 = vpack.c.b16 %v334, %v329
      %v395 = vpack.c.b16 %v340, %v335
      %v396 = vpack.c.b16 %v341, %v336
      %v397 = vpack.c.b16 %v342, %v337
      %v398 = vpack.c.b16 %v343, %v338
      %v399 = vpack.c.b16 %v344, %v339
      %v400 = vpack.c.b16 %v350, %v345
      %v401 = vpack.c.b16 %v351, %v346
      %v402 = vpack.c.b16 %v352, %v347
      %v403 = vpack.c.b16 %v353, %v348
      %v404 = vpack.c.b16 %v354, %v349
      %v405 = vpack.c.b16 %v360, %v355
      %v406 = vpack.c.b16 %v361, %v356
      %v407 = vpack.c.b16 %v362, %v357
      %v408 = vpack.c.b16 %v363, %v358
      %v409 = vpack.c.b16 %v364, %v359
      %vm455 = vcmask 130048
      %v457 = vsel %vm455, %v216, 0
      %v460 = vsel %vm455, %v218, 0
      %462 = vmatpush.bf16.msra.mxu0 %v400
      %463 = vmatpush.bf16.msra.mxu0 %v395
      %464 = vmatpush.bf16.msra.mxu0 %v390
      %465 = vmatpush.bf16.msra.mxu0 %v385
      %466 = vmatpush.bf16.msra.mxu0 %v380
      %467 = vmatpush.bf16.msra.mxu0 %v375
      %468 = vmatpush.bf16.msra.mxu0 %v370
      %469 = vmatpush.bf16.msra.mxu0 %v365
      %470 = vmatmul.bf16.gmra.mxu0 %v215
      %v471 = vpop.f32.mrf.mxu0
      %v472 = vadd.f32 0.0, %v471
      %v473 = vpop.f32.mrf.mxu0
      %v474 = vadd.f32 0.0, %v473
      %475 = vmatmul.bf16.gmra.mxu0 %v217
      %v476 = vpop.f32.mrf.mxu0
      %v477 = vadd.f32 0.0, %v476
      %v478 = vpop.f32.mrf.mxu0
      %v479 = vadd.f32 0.0, %v478
      %480 = vdwg.mxu0
      %481 = vmatpush.bf16.msra.mxu0 0
      %482 = vmatpush.bf16.msra.mxu0 0
      %483 = vmatpush.bf16.msra.mxu0 0
      %484 = vmatpush.bf16.msra.mxu0 0
      %485 = vmatpush.bf16.msra.mxu0 0
      %486 = vmatpush.bf16.msra.mxu0 0
      %487 = vmatpush.bf16.msra.mxu0 0
      %488 = vmatpush.bf16.msra.mxu0 %v405
      %489 = vmatmul.bf16.gmra.mxu0 %v457
      %v490 = vpop.f32.mrf.mxu0
      %v491 = vadd.f32 %v472, %v490
      %v492 = vpop.f32.mrf.mxu0
      %v493 = vadd.f32 %v474, %v492
      %494 = vmatmul.bf16.gmra.mxu0 %v460
      %v495 = vpop.f32.mrf.mxu0
      %v496 = vadd.f32 %v477, %v495
      %v497 = vpop.f32.mrf.mxu0
      %v498 = vadd.f32 %v479, %v497
      %499 = vdwg.mxu0
      %500 = vmatpush.bf16.msra.mxu0 %v401
      %501 = vmatpush.bf16.msra.mxu0 %v396
      %502 = vmatpush.bf16.msra.mxu0 %v391
      %503 = vmatpush.bf16.msra.mxu0 %v386
      %504 = vmatpush.bf16.msra.mxu0 %v381
      %505 = vmatpush.bf16.msra.mxu0 %v376
      %506 = vmatpush.bf16.msra.mxu0 %v371
      %507 = vmatpush.bf16.msra.mxu0 %v366
      %508 = vmatmul.bf16.gmra.mxu0 %v215
      %v509 = vpop.f32.mrf.mxu0
      %v510 = vadd.f32 0.0, %v509
      %v511 = vpop.f32.mrf.mxu0
      %v512 = vadd.f32 0.0, %v511
      %513 = vmatmul.bf16.gmra.mxu0 %v217
      %v514 = vpop.f32.mrf.mxu0
      %v515 = vadd.f32 0.0, %v514
      %v516 = vpop.f32.mrf.mxu0
      %v517 = vadd.f32 0.0, %v516
      %518 = vdwg.mxu0
      %519 = vmatpush.bf16.msra.mxu0 0
      %520 = vmatpush.bf16.msra.mxu0 0
      %521 = vmatpush.bf16.msra.mxu0 0
      %522 = vmatpush.bf16.msra.mxu0 0
      %523 = vmatpush.bf16.msra.mxu0 0
      %524 = vmatpush.bf16.msra.mxu0 0
      %525 = vmatpush.bf16.msra.mxu0 0
      %526 = vmatpush.bf16.msra.mxu0 %v406
      %527 = vmatmul.bf16.gmra.mxu0 %v457
      %v528 = vpop.f32.mrf.mxu0
      %v529 = vadd.f32 %v510, %v528
      %v530 = vpop.f32.mrf.mxu0
      %v531 = vadd.f32 %v512, %v530
      %532 = vmatmul.bf16.gmra.mxu0 %v460
      %v533 = vpop.f32.mrf.mxu0
      %v534 = vadd.f32 %v515, %v533
      %v535 = vpop.f32.mrf.mxu0
      %v536 = vadd.f32 %v517, %v535
      %537 = vdwg.mxu0
      %538 = vmatpush.bf16.msra.mxu0 %v402
      %539 = vmatpush.bf16.msra.mxu0 %v397
      %540 = vmatpush.bf16.msra.mxu0 %v392
      %541 = vmatpush.bf16.msra.mxu0 %v387
      %542 = vmatpush.bf16.msra.mxu0 %v382
      %543 = vmatpush.bf16.msra.mxu0 %v377
      %544 = vmatpush.bf16.msra.mxu0 %v372
      %545 = vmatpush.bf16.msra.mxu0 %v367
      %546 = vmatmul.bf16.gmra.mxu0 %v215
      %v547 = vpop.f32.mrf.mxu0
      %v548 = vadd.f32 0.0, %v547
      %v549 = vpop.f32.mrf.mxu0
      %v550 = vadd.f32 0.0, %v549
      %551 = vmatmul.bf16.gmra.mxu0 %v217
      %v552 = vpop.f32.mrf.mxu0
      %v553 = vadd.f32 0.0, %v552
      %v554 = vpop.f32.mrf.mxu0
      %v555 = vadd.f32 0.0, %v554
      %556 = vdwg.mxu0
      %557 = vmatpush.bf16.msra.mxu0 0
      %558 = vmatpush.bf16.msra.mxu0 0
      %559 = vmatpush.bf16.msra.mxu0 0
      %560 = vmatpush.bf16.msra.mxu0 0
      %561 = vmatpush.bf16.msra.mxu0 0
      %562 = vmatpush.bf16.msra.mxu0 0
      %563 = vmatpush.bf16.msra.mxu0 0
      %564 = vmatpush.bf16.msra.mxu0 %v407
      %565 = vmatmul.bf16.gmra.mxu0 %v457
      %v566 = vpop.f32.mrf.mxu0
      %v567 = vadd.f32 %v548, %v566
      %v568 = vpop.f32.mrf.mxu0
      %v569 = vadd.f32 %v550, %v568
      %570 = vmatmul.bf16.gmra.mxu0 %v460
      %v571 = vpop.f32.mrf.mxu0
      %v572 = vadd.f32 %v553, %v571
      %v573 = vpop.f32.mrf.mxu0
      %v574 = vadd.f32 %v555, %v573
      %575 = vdwg.mxu0
      %576 = vmatpush.bf16.msra.mxu0 %v403
      %577 = vmatpush.bf16.msra.mxu0 %v398
      %578 = vmatpush.bf16.msra.mxu0 %v393
      %579 = vmatpush.bf16.msra.mxu0 %v388
      %580 = vmatpush.bf16.msra.mxu0 %v383
      %581 = vmatpush.bf16.msra.mxu0 %v378
      %582 = vmatpush.bf16.msra.mxu0 %v373
      %583 = vmatpush.bf16.msra.mxu0 %v368
      %584 = vmatmul.bf16.gmra.mxu0 %v215
      %v585 = vpop.f32.mrf.mxu0
      %v586 = vadd.f32 0.0, %v585
      %v587 = vpop.f32.mrf.mxu0
      %v588 = vadd.f32 0.0, %v587
      %589 = vmatmul.bf16.gmra.mxu0 %v217
      %v590 = vpop.f32.mrf.mxu0
      %v591 = vadd.f32 0.0, %v590
      %v592 = vpop.f32.mrf.mxu0
      %v593 = vadd.f32 0.0, %v592
      %594 = vdwg.mxu0
      %595 = vmatpush.bf16.msra.mxu0 0
      %596 = vmatpush.bf16.msra.mxu0 0
      %597 = vmatpush.bf16.msra.mxu0 0
      %598 = vmatpush.bf16.msra.mxu0 0
      %599 = vmatpush.bf16.msra.mxu0 0
      %600 = vmatpush.bf16.msra.mxu0 0
      %601 = vmatpush.bf16.msra.mxu0 0
      %602 = vmatpush.bf16.msra.mxu0 %v408
      %603 = vmatmul.bf16.gmra.mxu0 %v457
      %v604 = vpop.f32.mrf.mxu0
      %v605 = vadd.f32 %v586, %v604
      %v606 = vpop.f32.mrf.mxu0
      %v607 = vadd.f32 %v588, %v606
      %608 = vmatmul.bf16.gmra.mxu0 %v460
      %v609 = vpop.f32.mrf.mxu0
      %v610 = vadd.f32 %v591, %v609
      %v611 = vpop.f32.mrf.mxu0
      %v612 = vadd.f32 %v593, %v611
      %613 = vdwg.mxu0
      %614 = vmatpush.bf16.msra.mxu0 %v404
      %615 = vmatpush.bf16.msra.mxu0 %v399
      %616 = vmatpush.bf16.msra.mxu0 %v394
      %617 = vmatpush.bf16.msra.mxu0 %v389
      %618 = vmatpush.bf16.msra.mxu0 %v384
      %619 = vmatpush.bf16.msra.mxu0 %v379
      %620 = vmatpush.bf16.msra.mxu0 %v374
      %621 = vmatpush.bf16.msra.mxu0 %v369
      %622 = vmatmul.bf16.gmra.mxu0 %v215
      %v623 = vpop.f32.mrf.mxu0
      %v624 = vadd.f32 0.0, %v623
      %v625 = vpop.f32.mrf.mxu0
      %v626 = vadd.f32 0.0, %v625
      %627 = vmatmul.bf16.gmra.mxu0 %v217
      %v628 = vpop.f32.mrf.mxu0
      %v629 = vadd.f32 0.0, %v628
      %v630 = vpop.f32.mrf.mxu0
      %v631 = vadd.f32 0.0, %v630
      %632 = vdwg.mxu0
      %633 = vmatpush.bf16.msra.mxu0 0
      %634 = vmatpush.bf16.msra.mxu0 0
      %635 = vmatpush.bf16.msra.mxu0 0
      %636 = vmatpush.bf16.msra.mxu0 0
      %637 = vmatpush.bf16.msra.mxu0 0
      %638 = vmatpush.bf16.msra.mxu0 0
      %639 = vmatpush.bf16.msra.mxu0 0
      %640 = vmatpush.bf16.msra.mxu0 %v409
      %641 = vmatmul.bf16.gmra.mxu0 %v457
      %v642 = vpop.f32.mrf.mxu0
      %v643 = vadd.f32 %v624, %v642
      %v644 = vpop.f32.mrf.mxu0
      %v645 = vadd.f32 %v626, %v644
      %646 = vmatmul.bf16.gmra.mxu0 %v460
      %v647 = vpop.f32.mrf.mxu0
      %v648 = vadd.f32 %v629, %v647
      %v649 = vpop.f32.mrf.mxu0
      %v650 = vadd.f32 %v631, %v649
      %651 = vdwg.mxu0
      %v652 = vadd.f32 %v491, %v529
      %v653 = vadd.f32 %v652, %v567
      %v654 = vadd.f32 %v653, %v605
      %vm655 = vcmask 924672
      %v656 = vsel %vm655, %v643, 0.0
      %v657 = vadd.f32 %v654, %v656
      %658 = vadd.xlane.f32.xlu0 %v657
      %v659 = vpop.xlane.xlu0 %658
      %v660 = vadd.f32 %v493, %v531
      %v661 = vadd.f32 %v660, %v569
      %v662 = vadd.f32 %v661, %v607
      %v663 = vsel %vm655, %v645, 0.0
      %v664 = vadd.f32 %v662, %v663
      %665 = vadd.xlane.f32.xlu0 %v664
      %v666 = vpop.xlane.xlu0 %665
      %v667 = vadd.f32 %v496, %v534
      %v668 = vadd.f32 %v667, %v572
      %v669 = vadd.f32 %v668, %v610
      %v670 = vsel %vm655, %v648, 0.0
      %v671 = vadd.f32 %v669, %v670
      %672 = vadd.xlane.f32.xlu0 %v671
      %v673 = vpop.xlane.xlu0 %672
      %v674 = vadd.f32 %v498, %v536
      %v675 = vadd.f32 %v674, %v574
      %v676 = vadd.f32 %v675, %v612
      %v677 = vsel %vm655, %v650, 0.0
      %v678 = vadd.f32 %v676, %v677
      %679 = vadd.xlane.f32.xlu0 %v678
      %v680 = vpop.xlane.xlu0 %679
      %v681 = vmul.f32 %v491, %v491
      %v682 = vmul.f32 %v529, %v529
      %v683 = vmul.f32 %v567, %v567
      %v684 = vmul.f32 %v605, %v605
      %v685 = vmul.f32 %v643, %v643
      %v686 = vmul.f32 %v493, %v493
      %v687 = vmul.f32 %v531, %v531
      %v688 = vmul.f32 %v569, %v569
      %v689 = vmul.f32 %v607, %v607
      %v690 = vmul.f32 %v645, %v645
      %v691 = vmul.f32 %v496, %v496
      %v692 = vmul.f32 %v534, %v534
      %v693 = vmul.f32 %v572, %v572
      %v694 = vmul.f32 %v610, %v610
      %v695 = vmul.f32 %v648, %v648
      %v696 = vmul.f32 %v498, %v498
      %v697 = vmul.f32 %v536, %v536
      %v698 = vmul.f32 %v574, %v574
      %v699 = vmul.f32 %v612, %v612
      %v700 = vmul.f32 %v650, %v650
      %v701 = vadd.f32 %v681, %v682
      %v702 = vadd.f32 %v701, %v683
      %v703 = vadd.f32 %v702, %v684
      %v704 = vsel %vm655, %v685, 0.0
      %v705 = vadd.f32 %v703, %v704
      %706 = vadd.xlane.f32.xlu0 %v705
      %v707 = vpop.xlane.xlu0 %706
      %v708 = vadd.f32 %v686, %v687
      %v709 = vadd.f32 %v708, %v688
      %v710 = vadd.f32 %v709, %v689
      %v711 = vsel %vm655, %v690, 0.0
      %v712 = vadd.f32 %v710, %v711
      %713 = vadd.xlane.f32.xlu0 %v712
      %v714 = vpop.xlane.xlu0 %713
      %v715 = vadd.f32 %v691, %v692
      %v716 = vadd.f32 %v715, %v693
      %v717 = vadd.f32 %v716, %v694
      %v718 = vsel %vm655, %v695, 0.0
      %v719 = vadd.f32 %v717, %v718
      %720 = vadd.xlane.f32.xlu0 %v719
      %v721 = vpop.xlane.xlu0 %720
      %v722 = vadd.f32 %v696, %v697
      %v723 = vadd.f32 %v722, %v698
      %v724 = vadd.f32 %v723, %v699
      %v725 = vsel %vm655, %v700, 0.0
      %v726 = vadd.f32 %v724, %v725
      %727 = vadd.xlane.f32.xlu0 %v726
      %v728 = vpop.xlane.xlu0 %727
      %v729 = vadd.f32 %v659, %v666
      %v730 = vadd.f32 %v707, %v714
      %v731 = vadd.f32 %v729, %v673
      %v732 = vadd.f32 %v730, %v721
      %v733 = vadd.f32 %v731, %v680
      %v734 = vadd.f32 %v732, %v728
      %v735 = vmul.f32 %v733, 0.0004
      %v736 = vmul.f32 %v734, 0.0004
      %v737 = vmul.f32 %v735, %v735
      %v738 = vsub.f32 %v736, %v737
      %v739 = vadd.f32 %v738, 1e-05
      %v740 = vrsqrt.pop %v739
      %v741 = vmul.f32 %v740, %v739
      %v742 = vmul.f32 %v741, %v740
      %v743 = vmul.f32 0.5, %v742
      %v744 = vsub.f32 1.5, %v743
      %v745 = vmul.f32 %v740, %v744
      %vm746 = vweird.f32 %v739
      %vm747 = vweird.f32 %v740
      %vm748 = vmor %vm746, %vm747
      %v749 = vsel %vm748, %v740, %v745
      %751 = vset.pattern.permute.xlu0 0
      %752 = vperm.xlu0 %751, %v735
      %v753 = vpop.permute.xlu0 %752
      %v755 = vsub.f32 %v491, %v753
      %v756 = vsub.f32 %v529, %v753
      %v757 = vsub.f32 %v567, %v753
      %v758 = vsub.f32 %v605, %v753
      %v759 = vsub.f32 %v643, %v753
      %v760 = vsub.f32 %v493, %v753
      %v761 = vsub.f32 %v531, %v753
      %v762 = vsub.f32 %v569, %v753
      %v763 = vsub.f32 %v607, %v753
      %v764 = vsub.f32 %v645, %v753
      %v765 = vsub.f32 %v496, %v753
      %v766 = vsub.f32 %v534, %v753
      %v767 = vsub.f32 %v572, %v753
      %v768 = vsub.f32 %v610, %v753
      %v769 = vsub.f32 %v648, %v753
      %v770 = vsub.f32 %v498, %v753
      %v771 = vsub.f32 %v536, %v753
      %v772 = vsub.f32 %v574, %v753
      %v773 = vsub.f32 %v612, %v753
      %v774 = vsub.f32 %v650, %v753
      %776 = vset.pattern.permute.xlu0 0
      %777 = vperm.xlu0 %776, %v749
      %v778 = vpop.permute.xlu0 %777
      %v780 = vmul.f32 %v755, %v778
      %v781 = vmul.f32 %v756, %v778
      %v782 = vmul.f32 %v757, %v778
      %v783 = vmul.f32 %v758, %v778
      %v784 = vmul.f32 %v759, %v778
      %v785 = vmul.f32 %v760, %v778
      %v786 = vmul.f32 %v761, %v778
      %v787 = vmul.f32 %v762, %v778
      %v788 = vmul.f32 %v763, %v778
      %v789 = vmul.f32 %v764, %v778
      %v790 = vmul.f32 %v765, %v778
      %v791 = vmul.f32 %v766, %v778
      %v792 = vmul.f32 %v767, %v778
      %v793 = vmul.f32 %v768, %v778
      %v794 = vmul.f32 %v769, %v778
      %v795 = vmul.f32 %v770, %v778
      %v796 = vmul.f32 %v771, %v778
      %v797 = vmul.f32 %v772, %v778
      %v798 = vmul.f32 %v773, %v778
      %v799 = vmul.f32 %v774, %v778
      %v800 = vmax.f32 %v780, 0.0
      %v801 = vmax.f32 %v781, 0.0
      %v802 = vmax.f32 %v782, 0.0
      %v803 = vmax.f32 %v783, 0.0
      %v804 = vmax.f32 %v784, 0.0
      %v805 = vmax.f32 %v785, 0.0
      %v806 = vmax.f32 %v786, 0.0
      %v807 = vmax.f32 %v787, 0.0
      %v808 = vmax.f32 %v788, 0.0
      %v809 = vmax.f32 %v789, 0.0
      %v810 = vmax.f32 %v790, 0.0
      %v811 = vmax.f32 %v791, 0.0
      %v812 = vmax.f32 %v792, 0.0
      %v813 = vmax.f32 %v793, 0.0
      %v814 = vmax.f32 %v794, 0.0
      %v815 = vmax.f32 %v795, 0.0
      %v816 = vmax.f32 %v796, 0.0
      %v817 = vmax.f32 %v797, 0.0
      %v818 = vmax.f32 %v798, 0.0
      %v819 = vmax.f32 %v799, 0.0
      %v820 = vpack.c.bf16 %v801, %v800
      %v821 = vpack.c.bf16 %v803, %v802
      %v822 = vpack.c.bf16 %v804, %v804
      %v823 = vpack.c.bf16 %v806, %v805
      %v824 = vpack.c.bf16 %v808, %v807
      %v825 = vpack.c.bf16 %v809, %v809
      %v826 = vpack.c.bf16 %v811, %v810
      %v827 = vpack.c.bf16 %v813, %v812
      %v828 = vpack.c.bf16 %v814, %v814
      %v829 = vpack.c.bf16 %v816, %v815
      %v830 = vpack.c.bf16 %v818, %v817
      %v831 = vpack.c.bf16 %v819, %v819
      %832 = vst [vmem:[%s143] sm:$0xff] %v820
      %833 = vst [vmem:[%s143 + $0x8] sm:$0xff] %v821
      %vm834 = vcmask 920576
      %835 = vst.msk [vmem:[%s143 + $0x10] sm:$0xf] %vm834, %v822
      %836 = vst [vmem:[%s143 + $0x14] sm:$0xff] %v823
      %837 = vst [vmem:[%s143 + $0x1c] sm:$0xff] %v824
      %838 = vst.msk [vmem:[%s143 + $0x24] sm:$0xf] %vm834, %v825
      %839 = vst [vmem:[%s143 + $0x28] sm:$0xff] %v826
      %840 = vst [vmem:[%s143 + $0x30] sm:$0xff] %v827
      %841 = vst.msk [vmem:[%s143 + $0x38] sm:$0xf] %vm834, %v828
      %842 = vst [vmem:[%s143 + $0x3c] sm:$0xff] %v829
      %843 = vst [vmem:[%s143 + $0x44] sm:$0xff] %v830
      %844 = vst.msk [vmem:[%s143 + $0x4c] sm:$0xf] %vm834, %v831
      %p845 = scmp.lt.s32.totalorder %s13, 1
      %s846 = scalar_select %p845, %s13, 1
      %s847 = smul.addr %s846, 20
      %s848 = smul.addr %s847, 4
      %s849 = scalar_lea.vmem %s2, %s848
      // Predicated region
      $region29: #{netg_forward.8} parent=27 // pred_check
        %p850 = pneg %p78
      $region30: #{netg_forward.8} parent=27 // pred_check_branch
        %852 = sbr.rel (%p850) target = $region32
      $region31: #{netg_forward.8} parent=27 // pred_region
        _
      $region32: #{netg_forward.8} parent=27 // pred_fallthru
        _
    $region28: #{netg_forward.8} parent=5 // pred_fallthru
      _
    %p853 = scmp.le.s32.totalorder 2, %s8
    // Predicated region
    $region33: #{netg_forward.8} parent=5 // pred_check
      %p854 = pneg %p853
    $region34: #{netg_forward.8} parent=5 // pred_check_branch
      %856 = sbr.rel (%p854) target = $region36
    $region35: #{netg_forward.8} parent=5 // pred_region
      %s857 = ssub.s32 %s8, 2
      // Predicated region
      $region37: #{netg_forward.8} parent=35 // pred_check
        %p858 = pneg %p84
      $region38: #{netg_forward.8} parent=35 // pred_check_branch
        %860 = sbr.rel (%p858) target = $region40
      $region39: #{netg_forward.8} parent=35 // pred_region
        %p861 = scmp.lt.s32.totalorder %s14, 1
        %s862 = scalar_select %p861, %s14, 1
        %s863 = smul.addr %s862, 20
        %s864 = smul.addr %s863, 4
        %s865 = scalar_lea.vmem %s2, %s864
      $region40: #{netg_forward.8} parent=35 // pred_fallthru
        _
    $region36: #{netg_forward.8} parent=5 // pred_fallthru
      _
  $region6: #{netg_forward.8} parent=0 // loop_footer
    %s12 = sadd.s32 1, %s8
  $region7: #{netg_forward.8} parent=0 // loop_footer_branch
    %7 = sbr.rel target = $region3
  $region8: #{netg_forward.8} parent=0 // loop_exit
    _

// kernel: netg_forward.9
$region0: #{netg_forward.9}
  #allocation0 [shape = 'u32[]', space=smem, size = 0x4, offset = 0x4, fixed_abs, tag = 'smem constant byte address 0x4 - core index']
  #allocation1 [shape = 'u32[72,128]{1,0:T(1,128)}', space=vmem, size = 0x9000, scoped, tag = 'internal scratch']
  %s0 = inlined_call_operand.vmem [shape: bf16[2,72,2500], index: 0, kind: input, shape index: {}]
  %s1 = inlined_call_operand.vmem [shape: bf16[27,72], index: 1, kind: input, shape index: {}]
  %s2 = inlined_call_operand.vmem [shape: f32[2,27,2500], index: 2, kind: output, shape index: {}]
  %s3 = sld [smem:[#allocation0]]
  $region41: #{netg_forward.9} parent=0
    _
  %s5 = ssub.s32 1, %s3
  %s6 = scalar_select 0, %s5, %s3
  loop: start=0, step=1, limit=4
  $region2: #{netg_forward.9} parent=0 // loop_pre_header
    _
  $region3: #{netg_forward.9} parent=0 // loop_header
    %s8 = sphi 0, %s12
    %p9 = scmp.ge.s32.totalorder %s8, 4
    %s18 = sphi 0, %s20
    %s21 = sphi 0, %s18
    %s22 = sphi 0, %s21
    %s38 = sphi 0, %s22
    %s42 = sphi 0, %s42
    %s44 = sphi 0, %s42
    %s45 = sphi 0, %s44
    %s59 = sphi 0, %s45
    %s65 = sphi 0, %s67
    %s68 = sphi 0, %s65
    %s69 = sphi 0, %s68
    %s85 = sphi 0, %s69
  $region4: #{netg_forward.9} parent=0 // loop_header_branch
    %11 = sbr.rel (%p9) target = $region8
  $region5: #{netg_forward.9} parent=0 // loop_body
    %s13 = ssub.s32 %s8, 1
    %s14 = ssub.s32 %s8, 2
    %s15 = sadd.s32 %s8, 1
    %s16 = ssub.s32 %s8, %s15
    %p17 = scmp.eq.s32.totalorder %s16, 0
    %s19 = sadd.s32 %s18, 1
    %s20 = scalar_select %p17, %s18, %s19
    %p23 = pneg %p17
    %p24 = scmp.eq.s32.totalorder %s8, 1
    %p25 = por %p23, %p24
    %p26 = scmp.ne.s32.totalorder %s18, %s21
    %p27 = scmp.eq.s32.totalorder %s8, 0
    %p28 = por %p26, %p27
    %p29 = scmp.ne.s32.totalorder %s18, %s21
    %p30 = scmp.eq.s32.totalorder %s13, 1
    %p31 = por %p29, %p30
    %p32 = scmp.ne.s32.totalorder %s21, %s22
    %p33 = scmp.eq.s32.totalorder %s13, 0
    %p34 = por %p32, %p33
    %p35 = scmp.ne.s32.totalorder %s21, %s22
    %p36 = scmp.eq.s32.totalorder %s14, 1
    %p37 = por %p35, %p36
    %p39 = scmp.ne.s32.totalorder %s22, %s38
    %p40 = scmp.eq.s32.totalorder %s14, 0
    %p41 = por %p39, %p40
    %s43 = sadd.s32 %s42, 1
    %p46 = scmp.eq.s32.totalorder %s8, 1
    %p47 = scmp.ne.s32.totalorder %s42, %s44
    %p48 = scmp.eq.s32.totalorder %s8, 0
    %p49 = por %p47, %p48
    %p50 = scmp.ne.s32.totalorder %s42, %s44
    %p51 = scmp.eq.s32.totalorder %s13, 1
    %p52 = por %p50, %p51
    %p53 = scmp.ne.s32.totalorder %s44, %s45
    %p54 = scmp.eq.s32.totalorder %s13, 0
    %p55 = por %p53, %p54
    %p56 = scmp.ne.s32.totalorder %s44, %s45
    %p57 = scmp.eq.s32.totalorder %s14, 1
    %p58 = por %p56, %p57
    %p60 = scmp.ne.s32.totalorder %s45, %s59
    %p61 = scmp.eq.s32.totalorder %s14, 0
    %p62 = por %p60, %p61
    %s63 = ssub.s32 %s8, %s15
    %p64 = scmp.eq.s32.totalorder %s63, 0
    %s66 = sadd.s32 %s65, 1
    %s67 = scalar_select %p64, %s65, %s66
    %p70 = pneg %p64
    %p71 = scmp.eq.s32.totalorder %s8, 1
    %p72 = por %p70, %p71
    %p73 = scmp.ne.s32.totalorder %s65, %s68
    %p74 = scmp.eq.s32.totalorder %s8, 0
    %p75 = por %p73, %p74
    %p76 = scmp.ne.s32.totalorder %s65, %s68
    %p77 = scmp.eq.s32.totalorder %s13, 1
    %p78 = por %p76, %p77
    %p79 = scmp.ne.s32.totalorder %s68, %s69
    %p80 = scmp.eq.s32.totalorder %s13, 0
    %p81 = por %p79, %p80
    %p82 = scmp.ne.s32.totalorder %s68, %s69
    %p83 = scmp.eq.s32.totalorder %s14, 1
    %p84 = por %p82, %p83
    %p86 = scmp.ne.s32.totalorder %s69, %s85
    %p87 = scmp.eq.s32.totalorder %s14, 0
    %p88 = por %p86, %p87
    %p89 = scmp.le.s32.totalorder 1, %s8
    %p90 = scmp.lt.s32.totalorder %s8, 3
    %p91 = pnand %p89, %p90
    %p92 = pneg %p91
    // Predicated region
    $region9: #{netg_forward.9} parent=5 // pred_check
      _
    $region10: #{netg_forward.9} parent=5 // pred_check_branch
      %94 = sbr.rel (%p91) target = $region12
    $region11: #{netg_forward.9} parent=5 // pred_region
      %s95 = ssub.s32 %s8, 1
      // Predicated region
      $region13: #{netg_forward.9} parent=11 // pred_check
        %p96 = pneg %p55
      $region14: #{netg_forward.9} parent=11 // pred_check_branch
        %98 = sbr.rel (%p96) target = $region16
      $region15: #{netg_forward.9} parent=11 // pred_region
        _
      $region16: #{netg_forward.9} parent=11 // pred_fallthru
        _
    $region12: #{netg_forward.9} parent=5 // pred_fallthru
      _
    %p99 = scmp.lt.s32.totalorder %s8, 2
    // Predicated region
    $region17: #{netg_forward.9} parent=5 // pred_check
      %p100 = pneg %p99
    $region18: #{netg_forward.9} parent=5 // pred_check_branch
      %102 = sbr.rel (%p100) target = $region20
    $region19: #{netg_forward.9} parent=5 // pred_region
      // Predicated region
      $region21: #{netg_forward.9} parent=19 // pred_check
        %p103 = pneg %p28
      $region22: #{netg_forward.9} parent=19 // pred_check_branch
        %105 = sbr.rel (%p103) target = $region24
      $region23: #{netg_forward.9} parent=19 // pred_region
        %p106 = scmp.lt.s32.totalorder %s8, 1
        %s107 = scalar_select %p106, %s8, 1
        %s108 = smul.addr %s107, 180
        %s109 = smul.addr %s108, 4
        %s110 = scalar_lea.vmem %s0, %s109
      $region24: #{netg_forward.9} parent=19 // pred_fallthru
        _
    $region20: #{netg_forward.9} parent=5 // pred_fallthru
      _
    %p111 = scmp.le.s32.totalorder 1, %s8
    %p112 = scmp.lt.s32.totalorder %s8, 3
    %p113 = pnand %p111, %p112
    %p114 = pneg %p113
    // Predicated region
    $region25: #{netg_forward.9} parent=5 // pred_check
      _
    $region26: #{netg_forward.9} parent=5 // pred_check_branch
      %116 = sbr.rel (%p113) target = $region28
    $region27: #{netg_forward.9} parent=5 // pred_region
      %s117 = ssub.s32 %s8, 1
      %p118 = scmp.lt.s32.totalorder %s13, 1
      %s119 = scalar_select %p118, %s13, 1
      %s120 = smul.addr %s119, 180
      %s121 = smul.addr %s120, 4
      %s122 = scalar_lea.vmem %s0, %s121
      %p123 = pneg %p34
      %p124 = pneg %p31
      %p125 = pneg %p55
      %p126 = pneg %p52
      %p127 = pneg %p81
      %p128 = pneg %p78
      %p129 = scmp.lt.s32.totalorder %s13, 1
      %s130 = scalar_select %p129, %s13, 1
      %s131 = smul.addr %s130, 80
      %s132 = smul.addr %s131, 8
      %s133 = scalar_lea.vmem %s2, %s132
      %p134 = scmp.lt.s32.totalorder %s13, 1
      %s135 = scalar_select %p134, %s13, 1
      %s136 = smul.addr %s135, 180
      %s137 = smul.addr %s136, 4
      %s138 = scalar_lea.vmem %s0, %s137
      %p139 = scmp.lt.s32.totalorder %s13, 1
      %s140 = scalar_select %p139, %s13, 1
      %s141 = smul.addr %s140, 80
      %s142 = smul.addr %s141, 8
      %s143 = scalar_lea.vmem %s2, %s142
      %v145 = vld [vmem:[%s1] sm:$0xf]
      %v146 = vld [vmem:[%s1 + $0x4] sm:$0xf]
      %v147 = vld [vmem:[%s1 + $0x8] sm:$0xf]
      %v148 = vld [vmem:[%s1 + $0xc] sm:$0x3]
      %v149 = vld [vmem:[%s138] sm:$0xff]
      %v150 = vld [vmem:[%s138 + $0x8] sm:$0xff]
      %v151 = vld [vmem:[%s138 + $0x10] sm:$0xff]
      %v152 = vld [vmem:[%s138 + $0x18] sm:$0xff]
      %v153 = vld [vmem:[%s138 + $0x20] sm:$0xff]
      %v154 = vld [vmem:[%s138 + $0x28] sm:$0xff]
      %v155 = vld [vmem:[%s138 + $0x30] sm:$0xff]
      %v156 = vld [vmem:[%s138 + $0x38] sm:$0xff]
      %v157 = vld [vmem:[%s138 + $0x40] sm:$0xff]
      %v158 = vld [vmem:[%s138 + $0x48] sm:$0xff]
      %v159 = vld [vmem:[%s138 + $0x50] sm:$0xff]
      %v160 = vld [vmem:[%s138 + $0x58] sm:$0xff]
      %v161 = vld [vmem:[%s138 + $0x60] sm:$0xff]
      %v162 = vld [vmem:[%s138 + $0x68] sm:$0xff]
      %v163 = vld [vmem:[%s138 + $0x70] sm:$0xff]
      %v164 = vld [vmem:[%s138 + $0x78] sm:$0xff]
      %v165 = vld [vmem:[%s138 + $0x80] sm:$0xff]
      %v166 = vld [vmem:[%s138 + $0x88] sm:$0xff]
      %v167 = vld [vmem:[%s138 + $0x90] sm:$0xff]
      %v168 = vld [vmem:[%s138 + $0x98] sm:$0xff]
      %v169 = vld [vmem:[%s138 + $0xa0] sm:$0xff]
      %v170 = vld [vmem:[%s138 + $0xa8] sm:$0xff]
      %v171 = vld [vmem:[%s138 + $0xb0] sm:$0xff]
      %v172 = vld [vmem:[%s138 + $0xb8] sm:$0xff]
      %v173 = vld [vmem:[%s138 + $0xc0] sm:$0xff]
      %v174 = vld [vmem:[%s138 + $0xc8] sm:$0xff]
      %v175 = vld [vmem:[%s138 + $0xd0] sm:$0xff]
      %v176 = vld [vmem:[%s138 + $0xd8] sm:$0xff]
      %v177 = vld [vmem:[%s138 + $0xe0] sm:$0xff]
      %v178 = vld [vmem:[%s138 + $0xe8] sm:$0xff]
      %v179 = vld [vmem:[%s138 + $0xf0] sm:$0xff]
      %v180 = vld [vmem:[%s138 + $0xf8] sm:$0xff]
      %v181 = vld [vmem:[%s138 + $0x100] sm:$0xff]
      %v182 = vld [vmem:[%s138 + $0x108] sm:$0xff]
      %v183 = vld [vmem:[%s138 + $0x110] sm:$0xff]
      %v184 = vld [vmem:[%s138 + $0x118] sm:$0xff]
      %v185 = vld [vmem:[%s138 + $0x120] sm:$0xff]
      %v186 = vld [vmem:[%s138 + $0x128] sm:$0xff]
      %v187 = vld [vmem:[%s138 + $0x130] sm:$0xff]
      %v188 = vld [vmem:[%s138 + $0x138] sm:$0xff]
      %v189 = vld [vmem:[%s138 + $0x140] sm:$0xff]
      %v190 = vld [vmem:[%s138 + $0x148] sm:$0xff]
      %v191 = vld [vmem:[%s138 + $0x150] sm:$0xff]
      %v192 = vld [vmem:[%s138 + $0x158] sm:$0xff]
      %v193 = vld [vmem:[%s138 + $0x160] sm:$0xff]
      %v194 = vld [vmem:[%s138 + $0x168] sm:$0xff]
      %v195 = vld [vmem:[%s138 + $0x170] sm:$0xff]
      %v196 = vld [vmem:[%s138 + $0x178] sm:$0xff]
      %v197 = vld [vmem:[%s138 + $0x180] sm:$0xff]
      %v198 = vld [vmem:[%s138 + $0x188] sm:$0xff]
      %v199 = vld [vmem:[%s138 + $0x190] sm:$0xff]
      %v200 = vld [vmem:[%s138 + $0x198] sm:$0xff]
      %v201 = vld [vmem:[%s138 + $0x1a0] sm:$0xff]
      %v202 = vld [vmem:[%s138 + $0x1a8] sm:$0xff]
      %v203 = vld [vmem:[%s138 + $0x1b0] sm:$0xff]
      %v204 = vld [vmem:[%s138 + $0x1b8] sm:$0xff]
      %v205 = vld [vmem:[%s138 + $0x1c0] sm:$0xff]
      %v206 = vld [vmem:[%s138 + $0x1c8] sm:$0xff]
      %v207 = vld [vmem:[%s138 + $0x1d0] sm:$0xff]
      %v208 = vld [vmem:[%s138 + $0x1d8] sm:$0xff]
      %v209 = vld [vmem:[%s138 + $0x1e0] sm:$0xff]
      %v210 = vld [vmem:[%s138 + $0x1e8] sm:$0xff]
      %v211 = vld [vmem:[%s138 + $0x1f0] sm:$0xff]
      %v212 = vld [vmem:[%s138 + $0x1f8] sm:$0xff]
      %v213 = vld [vmem:[%s138 + $0x200] sm:$0xff]
      %v214 = vld [vmem:[%s138 + $0x208] sm:$0xff]
      %v215 = vld [vmem:[%s138 + $0x210] sm:$0xff]
      %v216 = vld [vmem:[%s138 + $0x218] sm:$0xff]
      %v217 = vld [vmem:[%s138 + $0x220] sm:$0xff]
      %v218 = vld [vmem:[%s138 + $0x228] sm:$0xff]
      %v219 = vld [vmem:[%s138 + $0x230] sm:$0xff]
      %v220 = vld [vmem:[%s138 + $0x238] sm:$0xff]
      %v221 = vld [vmem:[%s138 + $0x240] sm:$0xff]
      %v222 = vld [vmem:[%s138 + $0x248] sm:$0xff]
      %v223 = vld [vmem:[%s138 + $0x250] sm:$0xff]
      %v224 = vld [vmem:[%s138 + $0x258] sm:$0xff]
      %v225 = vld [vmem:[%s138 + $0x260] sm:$0xff]
      %v226 = vld [vmem:[%s138 + $0x268] sm:$0xff]
      %v227 = vld [vmem:[%s138 + $0x270] sm:$0xff]
      %v228 = vld [vmem:[%s138 + $0x278] sm:$0xff]
      %v229 = vld [vmem:[%s138 + $0x280] sm:$0xff]
      %v230 = vld [vmem:[%s138 + $0x288] sm:$0xff]
      %v231 = vld [vmem:[%s138 + $0x290] sm:$0xff]
      %v232 = vld [vmem:[%s138 + $0x298] sm:$0xff]
      %v233 = vld [vmem:[%s138 + $0x2a0] sm:$0xff]
      %v234 = vld [vmem:[%s138 + $0x2a8] sm:$0xff]
      %v235 = vld [vmem:[%s138 + $0x2b0] sm:$0xff]
      %v236 = vld [vmem:[%s138 + $0x2b8] sm:$0xff]
      %v237 = vld [vmem:[%s138 + $0x2c0] sm:$0xff]
      %v238 = vld [vmem:[%s138 + $0x2c8] sm:$0xff]
      %v243 = vunpack.c.l.b16 %v145
      %v244 = vunpack.c.l.b16 %v146
      %v245 = vunpack.c.l.b16 %v147
      %v246 = vunpack.c.l.b16 %v148
      %v247 = vpack.c.b16 %v244, %v243
      %v248 = vpack.c.b16 %v246, %v245
      %v339 = vunpack.c.l.b16 %v149
      %v340 = vunpack.c.h.b16 %v149
      %v341 = vunpack.c.l.b16 %v150
      %v342 = vunpack.c.h.b16 %v150
      %v343 = vunpack.c.l.b16 %v151
      %v344 = vunpack.c.h.b16 %v151
      %v345 = vunpack.c.l.b16 %v152
      %v346 = vunpack.c.h.b16 %v152
      %v347 = vunpack.c.l.b16 %v153
      %v348 = vunpack.c.h.b16 %v153
      %v349 = vunpack.c.l.b16 %v154
      %v350 = vunpack.c.h.b16 %v154
      %v351 = vunpack.c.l.b16 %v155
      %v352 = vunpack.c.h.b16 %v155
      %v353 = vunpack.c.l.b16 %v156
      %v354 = vunpack.c.h.b16 %v156
      %v355 = vunpack.c.l.b16 %v157
      %v356 = vunpack.c.h.b16 %v157
      %v357 = vunpack.c.l.b16 %v158
      %v358 = vunpack.c.h.b16 %v158
      %v359 = vunpack.c.l.b16 %v159
      %v360 = vunpack.c.h.b16 %v159
      %v361 = vunpack.c.l.b16 %v160
      %v362 = vunpack.c.h.b16 %v160
      %v363 = vunpack.c.l.b16 %v161
      %v364 = vunpack.c.h.b16 %v161
      %v365 = vunpack.c.l.b16 %v162
      %v366 = vunpack.c.h.b16 %v162
      %v367 = vunpack.c.l.b16 %v163
      %v368 = vunpack.c.h.b16 %v163
      %v369 = vunpack.c.l.b16 %v164
      %v370 = vunpack.c.h.b16 %v164
      %v371 = vunpack.c.l.b16 %v165
      %v372 = vunpack.c.h.b16 %v165
      %v373 = vunpack.c.l.b16 %v166
      %v374 = vunpack.c.h.b16 %v166
      %v375 = vunpack.c.l.b16 %v167
      %v376 = vunpack.c.h.b16 %v167
      %v377 = vunpack.c.l.b16 %v168
      %v378 = vunpack.c.h.b16 %v168
      %v379 = vunpack.c.l.b16 %v169
      %v380 = vunpack.c.h.b16 %v169
      %v381 = vunpack.c.l.b16 %v170
      %v382 = vunpack.c.h.b16 %v170
      %v383 = vunpack.c.l.b16 %v171
      %v384 = vunpack.c.h.b16 %v171
      %v385 = vunpack.c.l.b16 %v172
      %v386 = vunpack.c.h.b16 %v172
      %v387 = vunpack.c.l.b16 %v173
      %v388 = vunpack.c.h.b16 %v173
      %v389 = vunpack.c.l.b16 %v174
      %v390 = vunpack.c.h.b16 %v174
      %v391 = vunpack.c.l.b16 %v175
      %v392 = vunpack.c.h.b16 %v175
      %v393 = vunpack.c.l.b16 %v176
      %v394 = vunpack.c.h.b16 %v176
      %v395 = vunpack.c.l.b16 %v177
      %v396 = vunpack.c.h.b16 %v177
      %v397 = vunpack.c.l.b16 %v178
      %v398 = vunpack.c.h.b16 %v178
      %v399 = vunpack.c.l.b16 %v179
      %v400 = vunpack.c.h.b16 %v179
      %v401 = vunpack.c.l.b16 %v180
      %v402 = vunpack.c.h.b16 %v180
      %v403 = vunpack.c.l.b16 %v181
      %v404 = vunpack.c.h.b16 %v181
      %v405 = vunpack.c.l.b16 %v182
      %v406 = vunpack.c.h.b16 %v182
      %v407 = vunpack.c.l.b16 %v183
      %v408 = vunpack.c.h.b16 %v183
      %v409 = vunpack.c.l.b16 %v184
      %v410 = vunpack.c.h.b16 %v184
      %v411 = vunpack.c.l.b16 %v185
      %v412 = vunpack.c.h.b16 %v185
      %v413 = vunpack.c.l.b16 %v186
      %v414 = vunpack.c.h.b16 %v186
      %v415 = vunpack.c.l.b16 %v187
      %v416 = vunpack.c.h.b16 %v187
      %v417 = vunpack.c.l.b16 %v188
      %v418 = vunpack.c.h.b16 %v188
      %v419 = vunpack.c.l.b16 %v189
      %v420 = vunpack.c.h.b16 %v189
      %v421 = vunpack.c.l.b16 %v190
      %v422 = vunpack.c.h.b16 %v190
      %v423 = vunpack.c.l.b16 %v191
      %v424 = vunpack.c.h.b16 %v191
      %v425 = vunpack.c.l.b16 %v192
      %v426 = vunpack.c.h.b16 %v192
      %v427 = vunpack.c.l.b16 %v193
      %v428 = vunpack.c.h.b16 %v193
      %v429 = vunpack.c.l.b16 %v194
      %v430 = vunpack.c.h.b16 %v194
      %v431 = vunpack.c.l.b16 %v195
      %v432 = vunpack.c.h.b16 %v195
      %v433 = vunpack.c.l.b16 %v196
      %v434 = vunpack.c.h.b16 %v196
      %v435 = vunpack.c.l.b16 %v197
      %v436 = vunpack.c.h.b16 %v197
      %v437 = vunpack.c.l.b16 %v198
      %v438 = vunpack.c.h.b16 %v198
      %v439 = vunpack.c.l.b16 %v199
      %v440 = vunpack.c.h.b16 %v199
      %v441 = vunpack.c.l.b16 %v200
      %v442 = vunpack.c.h.b16 %v200
      %v443 = vunpack.c.l.b16 %v201
      %v444 = vunpack.c.h.b16 %v201
      %v445 = vunpack.c.l.b16 %v202
      %v446 = vunpack.c.h.b16 %v202
      %v447 = vunpack.c.l.b16 %v203
      %v448 = vunpack.c.h.b16 %v203
      %v449 = vunpack.c.l.b16 %v204
      %v450 = vunpack.c.h.b16 %v204
      %v451 = vunpack.c.l.b16 %v205
      %v452 = vunpack.c.h.b16 %v205
      %v453 = vunpack.c.l.b16 %v206
      %v454 = vunpack.c.h.b16 %v206
      %v455 = vunpack.c.l.b16 %v207
      %v456 = vunpack.c.h.b16 %v207
      %v457 = vunpack.c.l.b16 %v208
      %v458 = vunpack.c.h.b16 %v208
      %v459 = vunpack.c.l.b16 %v209
      %v460 = vunpack.c.h.b16 %v209
      %v461 = vunpack.c.l.b16 %v210
      %v462 = vunpack.c.h.b16 %v210
      %v463 = vunpack.c.l.b16 %v211
      %v464 = vunpack.c.h.b16 %v211
      %v465 = vunpack.c.l.b16 %v212
      %v466 = vunpack.c.h.b16 %v212
      %v467 = vunpack.c.l.b16 %v213
      %v468 = vunpack.c.h.b16 %v213
      %v469 = vunpack.c.l.b16 %v214
      %v470 = vunpack.c.h.b16 %v214
      %v471 = vunpack.c.l.b16 %v215
      %v472 = vunpack.c.h.b16 %v215
      %v473 = vunpack.c.l.b16 %v216
      %v474 = vunpack.c.h.b16 %v216
      %v475 = vunpack.c.l.b16 %v217
      %v476 = vunpack.c.h.b16 %v217
      %v477 = vunpack.c.l.b16 %v218
      %v478 = vunpack.c.h.b16 %v218
      %v479 = vunpack.c.l.b16 %v219
      %v480 = vunpack.c.h.b16 %v219
      %v481 = vunpack.c.l.b16 %v220
      %v482 = vunpack.c.h.b16 %v220
      %v483 = vunpack.c.l.b16 %v221
      %v484 = vunpack.c.h.b16 %v221
      %v485 = vunpack.c.l.b16 %v222
      %v486 = vunpack.c.h.b16 %v222
      %v487 = vunpack.c.l.b16 %v223
      %v488 = vunpack.c.h.b16 %v223
      %v489 = vunpack.c.l.b16 %v224
      %v490 = vunpack.c.h.b16 %v224
      %v491 = vunpack.c.l.b16 %v225
      %v492 = vunpack.c.h.b16 %v225
      %v493 = vunpack.c.l.b16 %v226
      %v494 = vunpack.c.h.b16 %v226
      %v495 = vunpack.c.l.b16 %v227
      %v496 = vunpack.c.h.b16 %v227
      %v497 = vunpack.c.l.b16 %v228
      %v498 = vunpack.c.h.b16 %v228
      %v499 = vunpack.c.l.b16 %v229
      %v500 = vunpack.c.h.b16 %v229
      %v501 = vunpack.c.l.b16 %v230
      %v502 = vunpack.c.h.b16 %v230
      %v503 = vunpack.c.l.b16 %v231
      %v504 = vunpack.c.h.b16 %v231
      %v505 = vunpack.c.l.b16 %v232
      %v506 = vunpack.c.h.b16 %v232
      %v507 = vunpack.c.l.b16 %v233
      %v508 = vunpack.c.h.b16 %v233
      %v509 = vunpack.c.l.b16 %v234
      %v510 = vunpack.c.h.b16 %v234
      %v511 = vunpack.c.l.b16 %v235
      %v512 = vunpack.c.h.b16 %v235
      %v513 = vunpack.c.l.b16 %v236
      %v514 = vunpack.c.h.b16 %v236
      %v515 = vunpack.c.l.b16 %v237
      %v516 = vunpack.c.h.b16 %v237
      %v517 = vunpack.c.l.b16 %v238
      %v518 = vunpack.c.h.b16 %v238
      %v519 = vpack.c.b16 %v359, %v339
      %v520 = vpack.c.b16 %v360, %v340
      %v521 = vpack.c.b16 %v361, %v341
      %v522 = vpack.c.b16 %v362, %v342
      %v523 = vpack.c.b16 %v363, %v343
      %v524 = vpack.c.b16 %v364, %v344
      %v525 = vpack.c.b16 %v365, %v345
      %v526 = vpack.c.b16 %v366, %v346
      %v527 = vpack.c.b16 %v367, %v347
      %v528 = vpack.c.b16 %v368, %v348
      %v529 = vpack.c.b16 %v369, %v349
      %v530 = vpack.c.b16 %v370, %v350
      %v531 = vpack.c.b16 %v371, %v351
      %v532 = vpack.c.b16 %v372, %v352
      %v533 = vpack.c.b16 %v373, %v353
      %v534 = vpack.c.b16 %v374, %v354
      %v535 = vpack.c.b16 %v375, %v355
      %v536 = vpack.c.b16 %v376, %v356
      %v537 = vpack.c.b16 %v377, %v357
      %v538 = vpack.c.b16 %v378, %v358
      %v539 = vpack.c.b16 %v399, %v379
      %v540 = vpack.c.b16 %v400, %v380
      %v541 = vpack.c.b16 %v401, %v381
      %v542 = vpack.c.b16 %v402, %v382
      %v543 = vpack.c.b16 %v403, %v383
      %v544 = vpack.c.b16 %v404, %v384
      %v545 = vpack.c.b16 %v405, %v385
      %v546 = vpack.c.b16 %v406, %v386
      %v547 = vpack.c.b16 %v407, %v387
      %v548 = vpack.c.b16 %v408, %v388
      %v549 = vpack.c.b16 %v409, %v389
      %v550 = vpack.c.b16 %v410, %v390
      %v551 = vpack.c.b16 %v411, %v391
      %v552 = vpack.c.b16 %v412, %v392
      %v553 = vpack.c.b16 %v413, %v393
      %v554 = vpack.c.b16 %v414, %v394
      %v555 = vpack.c.b16 %v415, %v395
      %v556 = vpack.c.b16 %v416, %v396
      %v557 = vpack.c.b16 %v417, %v397
      %v558 = vpack.c.b16 %v418, %v398
      %v559 = vpack.c.b16 %v439, %v419
      %v560 = vpack.c.b16 %v440, %v420
      %v561 = vpack.c.b16 %v441, %v421
      %v562 = vpack.c.b16 %v442, %v422
      %v563 = vpack.c.b16 %v443, %v423
      %v564 = vpack.c.b16 %v444, %v424
      %v565 = vpack.c.b16 %v445, %v425
      %v566 = vpack.c.b16 %v446, %v426
      %v567 = vpack.c.b16 %v447, %v427
      %v568 = vpack.c.b16 %v448, %v428
      %v569 = vpack.c.b16 %v449, %v429
      %v570 = vpack.c.b16 %v450, %v430
      %v571 = vpack.c.b16 %v451, %v431
      %v572 = vpack.c.b16 %v452, %v432
      %v573 = vpack.c.b16 %v453, %v433
      %v574 = vpack.c.b16 %v454, %v434
      %v575 = vpack.c.b16 %v455, %v435
      %v576 = vpack.c.b16 %v456, %v436
      %v577 = vpack.c.b16 %v457, %v437
      %v578 = vpack.c.b16 %v458, %v438
      %v579 = vpack.c.b16 %v479, %v459
      %v580 = vpack.c.b16 %v480, %v460
      %v581 = vpack.c.b16 %v481, %v461
      %v582 = vpack.c.b16 %v482, %v462
      %v583 = vpack.c.b16 %v483, %v463
      %v584 = vpack.c.b16 %v484, %v464
      %v585 = vpack.c.b16 %v485, %v465
      %v586 = vpack.c.b16 %v486, %v466
      %v587 = vpack.c.b16 %v487, %v467
      %v588 = vpack.c.b16 %v488, %v468
      %v589 = vpack.c.b16 %v489, %v469
      %v590 = vpack.c.b16 %v490, %v470
      %v591 = vpack.c.b16 %v491, %v471
      %v592 = vpack.c.b16 %v492, %v472
      %v593 = vpack.c.b16 %v493, %v473
      %v594 = vpack.c.b16 %v494, %v474
      %v595 = vpack.c.b16 %v495, %v475
      %v596 = vpack.c.b16 %v496, %v476
      %v597 = vpack.c.b16 %v497, %v477
      %v598 = vpack.c.b16 %v498, %v478
      %v599 = vpack.c.b16 %v499, %v499
      %v600 = vpack.c.b16 %v500, %v500
      %v601 = vpack.c.b16 %v501, %v501
      %v602 = vpack.c.b16 %v502, %v502
      %v603 = vpack.c.b16 %v503, %v503
      %v604 = vpack.c.b16 %v504, %v504
      %v605 = vpack.c.b16 %v505, %v505
      %v606 = vpack.c.b16 %v506, %v506
      %v607 = vpack.c.b16 %v507, %v507
      %v608 = vpack.c.b16 %v508, %v508
      %v609 = vpack.c.b16 %v509, %v509
      %v610 = vpack.c.b16 %v510, %v510
      %v611 = vpack.c.b16 %v511, %v511
      %v612 = vpack.c.b16 %v512, %v512
      %v613 = vpack.c.b16 %v513, %v513
      %v614 = vpack.c.b16 %v514, %v514
      %v615 = vpack.c.b16 %v515, %v515
      %v616 = vpack.c.b16 %v516, %v516
      %v617 = vpack.c.b16 %v517, %v517
      %v618 = vpack.c.b16 %v518, %v518
      %vm699 = vcmask 588800
      %v701 = vsel %vm699, %v247, 0
      %v704 = vsel %vm699, %v248, 0
      %vm706 = vcmask 1043456
      %v708 = vsel %vm706, %v599, 0
      %v711 = vsel %vm706, %v600, 0
      %v714 = vsel %vm706, %v601, 0
      %v717 = vsel %vm706, %v602, 0
      %v720 = vsel %vm706, %v603, 0
      %v723 = vsel %vm706, %v604, 0
      %v726 = vsel %vm706, %v605, 0
      %v729 = vsel %vm706, %v606, 0
      %v732 = vsel %vm706, %v607, 0
      %v735 = vsel %vm706, %v608, 0
      %v738 = vsel %vm706, %v609, 0
      %v741 = vsel %vm706, %v610, 0
      %v744 = vsel %vm706, %v611, 0
      %v747 = vsel %vm706, %v612, 0
      %v750 = vsel %vm706, %v613, 0
      %v753 = vsel %vm706, %v614, 0
      %v756 = vsel %vm706, %v615, 0
      %v759 = vsel %vm706, %v616, 0
      %v762 = vsel %vm706, %v617, 0
      %v765 = vsel %vm706, %v618, 0
      %767 = vmatpush.bf16.msra.mxu0 0
      %768 = vmatpush.bf16.msra.mxu0 0
      %769 = vmatpush.bf16.msra.mxu0 0
      %770 = vmatpush.bf16.msra.mxu0 %v708
      %771 = vmatpush.bf16.msra.mxu0 %v579
      %772 = vmatpush.bf16.msra.mxu0 %v559
      %773 = vmatpush.bf16.msra.mxu0 %v539
      %774 = vmatpush.bf16.msra.mxu0 %v519
      %775 = vmatmul.bf16.gmra.mxu0 %v701
      %v776 = vpop.f32.mrf.mxu0
      %v777 = vadd.f32 0.0, %v776
      %v778 = vpop.f32.mrf.mxu0
      %v779 = vadd.f32 0.0, %v778
      %780 = vmatmul.bf16.gmra.mxu0 %v704
      %v781 = vpop.f32.mrf.mxu0
      %v782 = vadd.f32 0.0, %v781
      %v783 = vpop.f32.mrf.mxu0
      %v784 = vadd.f32 0.0, %v783
      %785 = vdwg.mxu0
      %786 = vmatpush.bf16.msra.mxu0 0
      %787 = vmatpush.bf16.msra.mxu0 0
      %788 = vmatpush.bf16.msra.mxu0 0
      %789 = vmatpush.bf16.msra.mxu0 %v711
      %790 = vmatpush.bf16.msra.mxu0 %v580
      %791 = vmatpush.bf16.msra.mxu0 %v560
      %792 = vmatpush.bf16.msra.mxu0 %v540
      %793 = vmatpush.bf16.msra.mxu0 %v520
      %794 = vmatmul.bf16.gmra.mxu0 %v701
      %v795 = vpop.f32.mrf.mxu0
      %v796 = vadd.f32 0.0, %v795
      %v797 = vpop.f32.mrf.mxu0
      %v798 = vadd.f32 0.0, %v797
      %799 = vmatmul.bf16.gmra.mxu0 %v704
      %v800 = vpop.f32.mrf.mxu0
      %v801 = vadd.f32 0.0, %v800
      %v802 = vpop.f32.mrf.mxu0
      %v803 = vadd.f32 0.0, %v802
      %804 = vdwg.mxu0
      %805 = vmatpush.bf16.msra.mxu0 0
      %806 = vmatpush.bf16.msra.mxu0 0
      %807 = vmatpush.bf16.msra.mxu0 0
      %808 = vmatpush.bf16.msra.mxu0 %v714
      %809 = vmatpush.bf16.msra.mxu0 %v581
      %810 = vmatpush.bf16.msra.mxu0 %v561
      %811 = vmatpush.bf16.msra.mxu0 %v541
      %812 = vmatpush.bf16.msra.mxu0 %v521
      %813 = vmatmul.bf16.gmra.mxu0 %v701
      %v814 = vpop.f32.mrf.mxu0
      %v815 = vadd.f32 0.0, %v814
      %v816 = vpop.f32.mrf.mxu0
      %v817 = vadd.f32 0.0, %v816
      %818 = vmatmul.bf16.gmra.mxu0 %v704
      %v819 = vpop.f32.mrf.mxu0
      %v820 = vadd.f32 0.0, %v819
      %v821 = vpop.f32.mrf.mxu0
      %v822 = vadd.f32 0.0, %v821
      %823 = vdwg.mxu0
      %824 = vmatpush.bf16.msra.mxu0 0
      %825 = vmatpush.bf16.msra.mxu0 0
      %826 = vmatpush.bf16.msra.mxu0 0
      %827 = vmatpush.bf16.msra.mxu0 %v717
      %828 = vmatpush.bf16.msra.mxu0 %v582
      %829 = vmatpush.bf16.msra.mxu0 %v562
      %830 = vmatpush.bf16.msra.mxu0 %v542
      %831 = vmatpush.bf16.msra.mxu0 %v522
      %832 = vmatmul.bf16.gmra.mxu0 %v701
      %v833 = vpop.f32.mrf.mxu0
      %v834 = vadd.f32 0.0, %v833
      %v835 = vpop.f32.mrf.mxu0
      %v836 = vadd.f32 0.0, %v835
      %837 = vmatmul.bf16.gmra.mxu0 %v704
      %v838 = vpop.f32.mrf.mxu0
      %v839 = vadd.f32 0.0, %v838
      %v840 = vpop.f32.mrf.mxu0
      %v841 = vadd.f32 0.0, %v840
      %842 = vdwg.mxu0
      %843 = vmatpush.bf16.msra.mxu0 0
      %844 = vmatpush.bf16.msra.mxu0 0
      %845 = vmatpush.bf16.msra.mxu0 0
      %846 = vmatpush.bf16.msra.mxu0 %v720
      %847 = vmatpush.bf16.msra.mxu0 %v583
      %848 = vmatpush.bf16.msra.mxu0 %v563
      %849 = vmatpush.bf16.msra.mxu0 %v543
      %850 = vmatpush.bf16.msra.mxu0 %v523
      %851 = vmatmul.bf16.gmra.mxu0 %v701
      %v852 = vpop.f32.mrf.mxu0
      %v853 = vadd.f32 0.0, %v852
      %v854 = vpop.f32.mrf.mxu0
      %v855 = vadd.f32 0.0, %v854
      %856 = vmatmul.bf16.gmra.mxu0 %v704
      %v857 = vpop.f32.mrf.mxu0
      %v858 = vadd.f32 0.0, %v857
      %v859 = vpop.f32.mrf.mxu0
      %v860 = vadd.f32 0.0, %v859
      %861 = vdwg.mxu0
      %862 = vmatpush.bf16.msra.mxu0 0
      %863 = vmatpush.bf16.msra.mxu0 0
      %864 = vmatpush.bf16.msra.mxu0 0
      %865 = vmatpush.bf16.msra.mxu0 %v723
      %866 = vmatpush.bf16.msra.mxu0 %v584
      %867 = vmatpush.bf16.msra.mxu0 %v564
      %868 = vmatpush.bf16.msra.mxu0 %v544
      %869 = vmatpush.bf16.msra.mxu0 %v524
      %870 = vmatmul.bf16.gmra.mxu0 %v701
      %v871 = vpop.f32.mrf.mxu0
      %v872 = vadd.f32 0.0, %v871
      %v873 = vpop.f32.mrf.mxu0
      %v874 = vadd.f32 0.0, %v873
      %875 = vmatmul.bf16.gmra.mxu0 %v704
      %v876 = vpop.f32.mrf.mxu0
      %v877 = vadd.f32 0.0, %v876
      %v878 = vpop.f32.mrf.mxu0
      %v879 = vadd.f32 0.0, %v878
      %880 = vdwg.mxu0
      %881 = vmatpush.bf16.msra.mxu0 0
      %882 = vmatpush.bf16.msra.mxu0 0
      %883 = vmatpush.bf16.msra.mxu0 0
      %884 = vmatpush.bf16.msra.mxu0 %v726
      %885 = vmatpush.bf16.msra.mxu0 %v585
      %886 = vmatpush.bf16.msra.mxu0 %v565
      %887 = vmatpush.bf16.msra.mxu0 %v545
      %888 = vmatpush.bf16.msra.mxu0 %v525
      %889 = vmatmul.bf16.gmra.mxu0 %v701
      %v890 = vpop.f32.mrf.mxu0
      %v891 = vadd.f32 0.0, %v890
      %v892 = vpop.f32.mrf.mxu0
      %v893 = vadd.f32 0.0, %v892
      %894 = vmatmul.bf16.gmra.mxu0 %v704
      %v895 = vpop.f32.mrf.mxu0
      %v896 = vadd.f32 0.0, %v895
      %v897 = vpop.f32.mrf.mxu0
      %v898 = vadd.f32 0.0, %v897
      %899 = vdwg.mxu0
      %900 = vmatpush.bf16.msra.mxu0 0
      %901 = vmatpush.bf16.msra.mxu0 0
      %902 = vmatpush.bf16.msra.mxu0 0
      %903 = vmatpush.bf16.msra.mxu0 %v729
      %904 = vmatpush.bf16.msra.mxu0 %v586
      %905 = vmatpush.bf16.msra.mxu0 %v566
      %906 = vmatpush.bf16.msra.mxu0 %v546
      %907 = vmatpush.bf16.msra.mxu0 %v526
      %908 = vmatmul.bf16.gmra.mxu0 %v701
      %v909 = vpop.f32.mrf.mxu0
      %v910 = vadd.f32 0.0, %v909
      %v911 = vpop.f32.mrf.mxu0
      %v912 = vadd.f32 0.0, %v911
      %913 = vmatmul.bf16.gmra.mxu0 %v704
      %v914 = vpop.f32.mrf.mxu0
      %v915 = vadd.f32 0.0, %v914
      %v916 = vpop.f32.mrf.mxu0
      %v917 = vadd.f32 0.0, %v916
      %918 = vdwg.mxu0
      %919 = vmatpush.bf16.msra.mxu0 0
      %920 = vmatpush.bf16.msra.mxu0 0
      %921 = vmatpush.bf16.msra.mxu0 0
      %922 = vmatpush.bf16.msra.mxu0 %v732
      %923 = vmatpush.bf16.msra.mxu0 %v587
      %924 = vmatpush.bf16.msra.mxu0 %v567
      %925 = vmatpush.bf16.msra.mxu0 %v547
      %926 = vmatpush.bf16.msra.mxu0 %v527
      %927 = vmatmul.bf16.gmra.mxu0 %v701
      %v928 = vpop.f32.mrf.mxu0
      %v929 = vadd.f32 0.0, %v928
      %v930 = vpop.f32.mrf.mxu0
      %v931 = vadd.f32 0.0, %v930
      %932 = vmatmul.bf16.gmra.mxu0 %v704
      %v933 = vpop.f32.mrf.mxu0
      %v934 = vadd.f32 0.0, %v933
      %v935 = vpop.f32.mrf.mxu0
      %v936 = vadd.f32 0.0, %v935
      %937 = vdwg.mxu0
      %938 = vmatpush.bf16.msra.mxu0 0
      %939 = vmatpush.bf16.msra.mxu0 0
      %940 = vmatpush.bf16.msra.mxu0 0
      %941 = vmatpush.bf16.msra.mxu0 %v735
      %942 = vmatpush.bf16.msra.mxu0 %v588
      %943 = vmatpush.bf16.msra.mxu0 %v568
      %944 = vmatpush.bf16.msra.mxu0 %v548
      %945 = vmatpush.bf16.msra.mxu0 %v528
      %946 = vmatmul.bf16.gmra.mxu0 %v701
      %v947 = vpop.f32.mrf.mxu0
      %v948 = vadd.f32 0.0, %v947
      %v949 = vpop.f32.mrf.mxu0
      %v950 = vadd.f32 0.0, %v949
      %951 = vmatmul.bf16.gmra.mxu0 %v704
      %v952 = vpop.f32.mrf.mxu0
      %v953 = vadd.f32 0.0, %v952
      %v954 = vpop.f32.mrf.mxu0
      %v955 = vadd.f32 0.0, %v954
      %956 = vdwg.mxu0
      %957 = vmatpush.bf16.msra.mxu0 0
      %958 = vmatpush.bf16.msra.mxu0 0
      %959 = vmatpush.bf16.msra.mxu0 0
      %960 = vmatpush.bf16.msra.mxu0 %v738
      %961 = vmatpush.bf16.msra.mxu0 %v589
      %962 = vmatpush.bf16.msra.mxu0 %v569
      %963 = vmatpush.bf16.msra.mxu0 %v549
      %964 = vmatpush.bf16.msra.mxu0 %v529
      %965 = vmatmul.bf16.gmra.mxu0 %v701
      %v966 = vpop.f32.mrf.mxu0
      %v967 = vadd.f32 0.0, %v966
      %v968 = vpop.f32.mrf.mxu0
      %v969 = vadd.f32 0.0, %v968
      %970 = vmatmul.bf16.gmra.mxu0 %v704
      %v971 = vpop.f32.mrf.mxu0
      %v972 = vadd.f32 0.0, %v971
      %v973 = vpop.f32.mrf.mxu0
      %v974 = vadd.f32 0.0, %v973
      %975 = vdwg.mxu0
      %976 = vmatpush.bf16.msra.mxu0 0
      %977 = vmatpush.bf16.msra.mxu0 0
      %978 = vmatpush.bf16.msra.mxu0 0
      %979 = vmatpush.bf16.msra.mxu0 %v741
      %980 = vmatpush.bf16.msra.mxu0 %v590
      %981 = vmatpush.bf16.msra.mxu0 %v570
      %982 = vmatpush.bf16.msra.mxu0 %v550
      %983 = vmatpush.bf16.msra.mxu0 %v530
      %984 = vmatmul.bf16.gmra.mxu0 %v701
      %v985 = vpop.f32.mrf.mxu0
      %v986 = vadd.f32 0.0, %v985
      %v987 = vpop.f32.mrf.mxu0
      %v988 = vadd.f32 0.0, %v987
      %989 = vmatmul.bf16.gmra.mxu0 %v704
      %v990 = vpop.f32.mrf.mxu0
      %v991 = vadd.f32 0.0, %v990
      %v992 = vpop.f32.mrf.mxu0
      %v993 = vadd.f32 0.0, %v992
      %994 = vdwg.mxu0
      %995 = vmatpush.bf16.msra.mxu0 0
      %996 = vmatpush.bf16.msra.mxu0 0
      %997 = vmatpush.bf16.msra.mxu0 0
      %998 = vmatpush.bf16.msra.mxu0 %v744
      %999 = vmatpush.bf16.msra.mxu0 %v591
      %1000 = vmatpush.bf16.msra.mxu0 %v571
      %1001 = vmatpush.bf16.msra.mxu0 %v551
      %1002 = vmatpush.bf16.msra.mxu0 %v531
      %1003 = vmatmul.bf16.gmra.mxu0 %v701
      %v1004 = vpop.f32.mrf.mxu0
      %v1005 = vadd.f32 0.0, %v1004
      %v1006 = vpop.f32.mrf.mxu0
      %v1007 = vadd.f32 0.0, %v1006
      %1008 = vmatmul.bf16.gmra.mxu0 %v704
      %v1009 = vpop.f32.mrf.mxu0
      %v1010 = vadd.f32 0.0, %v1009
      %v1011 = vpop.f32.mrf.mxu0
      %v1012 = vadd.f32 0.0, %v1011
      %1013 = vdwg.mxu0
      %1014 = vmatpush.bf16.msra.mxu0 0
      %1015 = vmatpush.bf16.msra.mxu0 0
      %1016 = vmatpush.bf16.msra.mxu0 0
      %1017 = vmatpush.bf16.msra.mxu0 %v747
      %1018 = vmatpush.bf16.msra.mxu0 %v592
      %1019 = vmatpush.bf16.msra.mxu0 %v572
      %1020 = vmatpush.bf16.msra.mxu0 %v552
      %1021 = vmatpush.bf16.msra.mxu0 %v532
      %1022 = vmatmul.bf16.gmra.mxu0 %v701
      %v1023 = vpop.f32.mrf.mxu0
      %v1024 = vadd.f32 0.0, %v1023
      %v1025 = vpop.f32.mrf.mxu0
      %v1026 = vadd.f32 0.0, %v1025
      %1027 = vmatmul.bf16.gmra.mxu0 %v704
      %v1028 = vpop.f32.mrf.mxu0
      %v1029 = vadd.f32 0.0, %v1028
      %v1030 = vpop.f32.mrf.mxu0
      %v1031 = vadd.f32 0.0, %v1030
      %1032 = vdwg.mxu0
      %1033 = vmatpush.bf16.msra.mxu0 0
      %1034 = vmatpush.bf16.msra.mxu0 0
      %1035 = vmatpush.bf16.msra.mxu0 0
      %1036 = vmatpush.bf16.msra.mxu0 %v750
      %1037 = vmatpush.bf16.msra.mxu0 %v593
      %1038 = vmatpush.bf16.msra.mxu0 %v573
      %1039 = vmatpush.bf16.msra.mxu0 %v553
      %1040 = vmatpush.bf16.msra.mxu0 %v533
      %1041 = vmatmul.bf16.gmra.mxu0 %v701
      %v1042 = vpop.f32.mrf.mxu0
      %v1043 = vadd.f32 0.0, %v1042
      %v1044 = vpop.f32.mrf.mxu0
      %v1045 = vadd.f32 0.0, %v1044
      %1046 = vmatmul.bf16.gmra.mxu0 %v704
      %v1047 = vpop.f32.mrf.mxu0
      %v1048 = vadd.f32 0.0, %v1047
      %v1049 = vpop.f32.mrf.mxu0
      %v1050 = vadd.f32 0.0, %v1049
      %1051 = vdwg.mxu0
      %1052 = vmatpush.bf16.msra.mxu0 0
      %1053 = vmatpush.bf16.msra.mxu0 0
      %1054 = vmatpush.bf16.msra.mxu0 0
      %1055 = vmatpush.bf16.msra.mxu0 %v753
      %1056 = vmatpush.bf16.msra.mxu0 %v594
      %1057 = vmatpush.bf16.msra.mxu0 %v574
      %1058 = vmatpush.bf16.msra.mxu0 %v554
      %1059 = vmatpush.bf16.msra.mxu0 %v534
      %1060 = vmatmul.bf16.gmra.mxu0 %v701
      %v1061 = vpop.f32.mrf.mxu0
      %v1062 = vadd.f32 0.0, %v1061
      %v1063 = vpop.f32.mrf.mxu0
      %v1064 = vadd.f32 0.0, %v1063
      %1065 = vmatmul.bf16.gmra.mxu0 %v704
      %v1066 = vpop.f32.mrf.mxu0
      %v1067 = vadd.f32 0.0, %v1066
      %v1068 = vpop.f32.mrf.mxu0
      %v1069 = vadd.f32 0.0, %v1068
      %1070 = vdwg.mxu0
      %1071 = vmatpush.bf16.msra.mxu0 0
      %1072 = vmatpush.bf16.msra.mxu0 0
      %1073 = vmatpush.bf16.msra.mxu0 0
      %1074 = vmatpush.bf16.msra.mxu0 %v756
      %1075 = vmatpush.bf16.msra.mxu0 %v595
      %1076 = vmatpush.bf16.msra.mxu0 %v575
      %1077 = vmatpush.bf16.msra.mxu0 %v555
      %1078 = vmatpush.bf16.msra.mxu0 %v535
      %1079 = vmatmul.bf16.gmra.mxu0 %v701
      %v1080 = vpop.f32.mrf.mxu0
      %v1081 = vadd.f32 0.0, %v1080
      %v1082 = vpop.f32.mrf.mxu0
      %v1083 = vadd.f32 0.0, %v1082
      %1084 = vmatmul.bf16.gmra.mxu0 %v704
      %v1085 = vpop.f32.mrf.mxu0
      %v1086 = vadd.f32 0.0, %v1085
      %v1087 = vpop.f32.mrf.mxu0
      %v1088 = vadd.f32 0.0, %v1087
      %1089 = vdwg.mxu0
      %1090 = vmatpush.bf16.msra.mxu0 0
      %1091 = vmatpush.bf16.msra.mxu0 0
      %1092 = vmatpush.bf16.msra.mxu0 0
      %1093 = vmatpush.bf16.msra.mxu0 %v759
      %1094 = vmatpush.bf16.msra.mxu0 %v596
      %1095 = vmatpush.bf16.msra.mxu0 %v576
      %1096 = vmatpush.bf16.msra.mxu0 %v556
      %1097 = vmatpush.bf16.msra.mxu0 %v536
      %1098 = vmatmul.bf16.gmra.mxu0 %v701
      %v1099 = vpop.f32.mrf.mxu0
      %v1100 = vadd.f32 0.0, %v1099
      %v1101 = vpop.f32.mrf.mxu0
      %v1102 = vadd.f32 0.0, %v1101
      %1103 = vmatmul.bf16.gmra.mxu0 %v704
      %v1104 = vpop.f32.mrf.mxu0
      %v1105 = vadd.f32 0.0, %v1104
      %v1106 = vpop.f32.mrf.mxu0
      %v1107 = vadd.f32 0.0, %v1106
      %1108 = vdwg.mxu0
      %1109 = vmatpush.bf16.msra.mxu0 0
      %1110 = vmatpush.bf16.msra.mxu0 0
      %1111 = vmatpush.bf16.msra.mxu0 0
      %1112 = vmatpush.bf16.msra.mxu0 %v762
      %1113 = vmatpush.bf16.msra.mxu0 %v597
      %1114 = vmatpush.bf16.msra.mxu0 %v577
      %1115 = vmatpush.bf16.msra.mxu0 %v557
      %1116 = vmatpush.bf16.msra.mxu0 %v537
      %1117 = vmatmul.bf16.gmra.mxu0 %v701
      %v1118 = vpop.f32.mrf.mxu0
      %v1119 = vadd.f32 0.0, %v1118
      %v1120 = vpop.f32.mrf.mxu0
      %v1121 = vadd.f32 0.0, %v1120
      %1122 = vmatmul.bf16.gmra.mxu0 %v704
      %v1123 = vpop.f32.mrf.mxu0
      %v1124 = vadd.f32 0.0, %v1123
      %v1125 = vpop.f32.mrf.mxu0
      %v1126 = vadd.f32 0.0, %v1125
      %1127 = vdwg.mxu0
      %1128 = vmatpush.bf16.msra.mxu0 0
      %1129 = vmatpush.bf16.msra.mxu0 0
      %1130 = vmatpush.bf16.msra.mxu0 0
      %1131 = vmatpush.bf16.msra.mxu0 %v765
      %1132 = vmatpush.bf16.msra.mxu0 %v598
      %1133 = vmatpush.bf16.msra.mxu0 %v578
      %1134 = vmatpush.bf16.msra.mxu0 %v558
      %1135 = vmatpush.bf16.msra.mxu0 %v538
      %1136 = vmatmul.bf16.gmra.mxu0 %v701
      %v1137 = vpop.f32.mrf.mxu0
      %v1138 = vadd.f32 0.0, %v1137
      %v1139 = vpop.f32.mrf.mxu0
      %v1140 = vadd.f32 0.0, %v1139
      %1141 = vmatmul.bf16.gmra.mxu0 %v704
      %v1142 = vpop.f32.mrf.mxu0
      %v1143 = vadd.f32 0.0, %v1142
      %v1144 = vpop.f32.mrf.mxu0
      %v1145 = vadd.f32 0.0, %v1144
      %1146 = vdwg.mxu0
      %v1147 = vtanh.pop %v777
      %v1148 = vtanh.pop %v796
      %v1149 = vtanh.pop %v815
      %v1150 = vtanh.pop %v834
      %v1151 = vtanh.pop %v853
      %v1152 = vtanh.pop %v872
      %v1153 = vtanh.pop %v891
      %v1154 = vtanh.pop %v910
      %v1155 = vtanh.pop %v929
      %v1156 = vtanh.pop %v948
      %v1157 = vtanh.pop %v967
      %v1158 = vtanh.pop %v986
      %v1159 = vtanh.pop %v1005
      %v1160 = vtanh.pop %v1024
      %v1161 = vtanh.pop %v1043
      %v1162 = vtanh.pop %v1062
      %v1163 = vtanh.pop %v1081
      %v1164 = vtanh.pop %v1100
      %v1165 = vtanh.pop %v1119
      %v1166 = vtanh.pop %v1138
      %v1167 = vtanh.pop %v779
      %v1168 = vtanh.pop %v798
      %v1169 = vtanh.pop %v817
      %v1170 = vtanh.pop %v836
      %v1171 = vtanh.pop %v855
      %v1172 = vtanh.pop %v874
      %v1173 = vtanh.pop %v893
      %v1174 = vtanh.pop %v912
      %v1175 = vtanh.pop %v931
      %v1176 = vtanh.pop %v950
      %v1177 = vtanh.pop %v969
      %v1178 = vtanh.pop %v988
      %v1179 = vtanh.pop %v1007
      %v1180 = vtanh.pop %v1026
      %v1181 = vtanh.pop %v1045
      %v1182 = vtanh.pop %v1064
      %v1183 = vtanh.pop %v1083
      %v1184 = vtanh.pop %v1102
      %v1185 = vtanh.pop %v1121
      %v1186 = vtanh.pop %v1140
      %v1187 = vtanh.pop %v782
      %v1188 = vtanh.pop %v801
      %v1189 = vtanh.pop %v820
      %v1190 = vtanh.pop %v839
      %v1191 = vtanh.pop %v858
      %v1192 = vtanh.pop %v877
      %v1193 = vtanh.pop %v896
      %v1194 = vtanh.pop %v915
      %v1195 = vtanh.pop %v934
      %v1196 = vtanh.pop %v953
      %v1197 = vtanh.pop %v972
      %v1198 = vtanh.pop %v991
      %v1199 = vtanh.pop %v1010
      %v1200 = vtanh.pop %v1029
      %v1201 = vtanh.pop %v1048
      %v1202 = vtanh.pop %v1067
      %v1203 = vtanh.pop %v1086
      %v1204 = vtanh.pop %v1105
      %v1205 = vtanh.pop %v1124
      %v1206 = vtanh.pop %v1143
      %v1207 = vtanh.pop %v784
      %v1208 = vtanh.pop %v803
      %v1209 = vtanh.pop %v822
      %v1210 = vtanh.pop %v841
      %v1211 = vtanh.pop %v860
      %v1212 = vtanh.pop %v879
      %v1213 = vtanh.pop %v898
      %v1214 = vtanh.pop %v917
      %v1215 = vtanh.pop %v936
      %v1216 = vtanh.pop %v955
      %v1217 = vtanh.pop %v974
      %v1218 = vtanh.pop %v993
      %v1219 = vtanh.pop %v1012
      %v1220 = vtanh.pop %v1031
      %v1221 = vtanh.pop %v1050
      %v1222 = vtanh.pop %v1069
      %v1223 = vtanh.pop %v1088
      %v1224 = vtanh.pop %v1107
      %v1225 = vtanh.pop %v1126
      %v1226 = vtanh.pop %v1145
      %1227 = vst [vmem:[%s143] sm:$0xff] %v1147
      %1228 = vst [vmem:[%s143 + $0x8] sm:$0xff] %v1148
      %1229 = vst [vmem:[%s143 + $0x10] sm:$0xff] %v1149
      %1230 = vst [vmem:[%s143 + $0x18] sm:$0xff] %v1150
      %1231 = vst [vmem:[%s143 + $0x20] sm:$0xff] %v1151
      %1232 = vst [vmem:[%s143 + $0x28] sm:$0xff] %v1152
      %1233 = vst [vmem:[%s143 + $0x30] sm:$0xff] %v1153
      %1234 = vst [vmem:[%s143 + $0x38] sm:$0xff] %v1154
      %1235 = vst [vmem:[%s143 + $0x40] sm:$0xff] %v1155
      %1236 = vst [vmem:[%s143 + $0x48] sm:$0xff] %v1156
      %1237 = vst [vmem:[%s143 + $0x50] sm:$0xff] %v1157
      %1238 = vst [vmem:[%s143 + $0x58] sm:$0xff] %v1158
      %1239 = vst [vmem:[%s143 + $0x60] sm:$0xff] %v1159
      %1240 = vst [vmem:[%s143 + $0x68] sm:$0xff] %v1160
      %1241 = vst [vmem:[%s143 + $0x70] sm:$0xff] %v1161
      %1242 = vst [vmem:[%s143 + $0x78] sm:$0xff] %v1162
      %1243 = vst [vmem:[%s143 + $0x80] sm:$0xff] %v1163
      %1244 = vst [vmem:[%s143 + $0x88] sm:$0xff] %v1164
      %1245 = vst [vmem:[%s143 + $0x90] sm:$0xff] %v1165
      %vm1246 = vcmask 556032
      %1247 = vst.msk [vmem:[%s143 + $0x98] sm:$0xff] %vm1246, %v1166
      %1248 = vst [vmem:[%s143 + $0xa0] sm:$0xff] %v1167
      %1249 = vst [vmem:[%s143 + $0xa8] sm:$0xff] %v1168
      %1250 = vst [vmem:[%s143 + $0xb0] sm:$0xff] %v1169
      %1251 = vst [vmem:[%s143 + $0xb8] sm:$0xff] %v1170
      %1252 = vst [vmem:[%s143 + $0xc0] sm:$0xff] %v1171
      %1253 = vst [vmem:[%s143 + $0xc8] sm:$0xff] %v1172
      %1254 = vst [vmem:[%s143 + $0xd0] sm:$0xff] %v1173
      %1255 = vst [vmem:[%s143 + $0xd8] sm:$0xff] %v1174
      %1256 = vst [vmem:[%s143 + $0xe0] sm:$0xff] %v1175
      %1257 = vst [vmem:[%s143 + $0xe8] sm:$0xff] %v1176
      %1258 = vst [vmem:[%s143 + $0xf0] sm:$0xff] %v1177
      %1259 = vst [vmem:[%s143 + $0xf8] sm:$0xff] %v1178
      %1260 = vst [vmem:[%s143 + $0x100] sm:$0xff] %v1179
      %1261 = vst [vmem:[%s143 + $0x108] sm:$0xff] %v1180
      %1262 = vst [vmem:[%s143 + $0x110] sm:$0xff] %v1181
      %1263 = vst [vmem:[%s143 + $0x118] sm:$0xff] %v1182
      %1264 = vst [vmem:[%s143 + $0x120] sm:$0xff] %v1183
      %1265 = vst [vmem:[%s143 + $0x128] sm:$0xff] %v1184
      %1266 = vst [vmem:[%s143 + $0x130] sm:$0xff] %v1185
      %1267 = vst.msk [vmem:[%s143 + $0x138] sm:$0xff] %vm1246, %v1186
      %1268 = vst [vmem:[%s143 + $0x140] sm:$0xff] %v1187
      %1269 = vst [vmem:[%s143 + $0x148] sm:$0xff] %v1188
      %1270 = vst [vmem:[%s143 + $0x150] sm:$0xff] %v1189
      %1271 = vst [vmem:[%s143 + $0x158] sm:$0xff] %v1190
      %1272 = vst [vmem:[%s143 + $0x160] sm:$0xff] %v1191
      %1273 = vst [vmem:[%s143 + $0x168] sm:$0xff] %v1192
      %1274 = vst [vmem:[%s143 + $0x170] sm:$0xff] %v1193
      %1275 = vst [vmem:[%s143 + $0x178] sm:$0xff] %v1194
      %1276 = vst [vmem:[%s143 + $0x180] sm:$0xff] %v1195
      %1277 = vst [vmem:[%s143 + $0x188] sm:$0xff] %v1196
      %1278 = vst [vmem:[%s143 + $0x190] sm:$0xff] %v1197
      %1279 = vst [vmem:[%s143 + $0x198] sm:$0xff] %v1198
      %1280 = vst [vmem:[%s143 + $0x1a0] sm:$0xff] %v1199
      %1281 = vst [vmem:[%s143 + $0x1a8] sm:$0xff] %v1200
      %1282 = vst [vmem:[%s143 + $0x1b0] sm:$0xff] %v1201
      %1283 = vst [vmem:[%s143 + $0x1b8] sm:$0xff] %v1202
      %1284 = vst [vmem:[%s143 + $0x1c0] sm:$0xff] %v1203
      %1285 = vst [vmem:[%s143 + $0x1c8] sm:$0xff] %v1204
      %1286 = vst [vmem:[%s143 + $0x1d0] sm:$0xff] %v1205
      %1287 = vst.msk [vmem:[%s143 + $0x1d8] sm:$0xff] %vm1246, %v1206
      %1288 = vst [vmem:[%s143 + $0x1e0] sm:$0x7] %v1207
      %1289 = vst [vmem:[%s143 + $0x1e8] sm:$0x7] %v1208
      %1290 = vst [vmem:[%s143 + $0x1f0] sm:$0x7] %v1209
      %1291 = vst [vmem:[%s143 + $0x1f8] sm:$0x7] %v1210
      %1292 = vst [vmem:[%s143 + $0x200] sm:$0x7] %v1211
      %1293 = vst [vmem:[%s143 + $0x208] sm:$0x7] %v1212
      %1294 = vst [vmem:[%s143 + $0x210] sm:$0x7] %v1213
      %1295 = vst [vmem:[%s143 + $0x218] sm:$0x7] %v1214
      %1296 = vst [vmem:[%s143 + $0x220] sm:$0x7] %v1215
      %1297 = vst [vmem:[%s143 + $0x228] sm:$0x7] %v1216
      %1298 = vst [vmem:[%s143 + $0x230] sm:$0x7] %v1217
      %1299 = vst [vmem:[%s143 + $0x238] sm:$0x7] %v1218
      %1300 = vst [vmem:[%s143 + $0x240] sm:$0x7] %v1219
      %1301 = vst [vmem:[%s143 + $0x248] sm:$0x7] %v1220
      %1302 = vst [vmem:[%s143 + $0x250] sm:$0x7] %v1221
      %1303 = vst [vmem:[%s143 + $0x258] sm:$0x7] %v1222
      %1304 = vst [vmem:[%s143 + $0x260] sm:$0x7] %v1223
      %1305 = vst [vmem:[%s143 + $0x268] sm:$0x7] %v1224
      %1306 = vst [vmem:[%s143 + $0x270] sm:$0x7] %v1225
      %vm1307 = vcmask 550912
      %1308 = vst.msk [vmem:[%s143 + $0x278] sm:$0x7] %vm1307, %v1226
      %p1309 = scmp.lt.s32.totalorder %s13, 1
      %s1310 = scalar_select %p1309, %s13, 1
      %s1311 = smul.addr %s1310, 80
      %s1312 = smul.addr %s1311, 8
      %s1313 = scalar_lea.vmem %s2, %s1312
      // Predicated region
      $region29: #{netg_forward.9} parent=27 // pred_check
        %p1314 = pneg %p78
      $region30: #{netg_forward.9} parent=27 // pred_check_branch
        %1316 = sbr.rel (%p1314) target = $region32
      $region31: #{netg_forward.9} parent=27 // pred_region
        _
      $region32: #{netg_forward.9} parent=27 // pred_fallthru
        _
    $region28: #{netg_forward.9} parent=5 // pred_fallthru
      _
    %p1317 = scmp.le.s32.totalorder 2, %s8
    // Predicated region
    $region33: #{netg_forward.9} parent=5 // pred_check
      %p1318 = pneg %p1317
    $region34: #{netg_forward.9} parent=5 // pred_check_branch
      %1320 = sbr.rel (%p1318) target = $region36
    $region35: #{netg_forward.9} parent=5 // pred_region
      %s1321 = ssub.s32 %s8, 2
      // Predicated region
      $region37: #{netg_forward.9} parent=35 // pred_check
        %p1322 = pneg %p84
      $region38: #{netg_forward.9} parent=35 // pred_check_branch
        %1324 = sbr.rel (%p1322) target = $region40
      $region39: #{netg_forward.9} parent=35 // pred_region
        %p1325 = scmp.lt.s32.totalorder %s14, 1
        %s1326 = scalar_select %p1325, %s14, 1
        %s1327 = smul.addr %s1326, 80
        %s1328 = smul.addr %s1327, 8
        %s1329 = scalar_lea.vmem %s2, %s1328
      $region40: #{netg_forward.9} parent=35 // pred_fallthru
        _
    $region36: #{netg_forward.9} parent=5 // pred_fallthru
      _
  $region6: #{netg_forward.9} parent=0 // loop_footer
    %s12 = sadd.s32 1, %s8
  $region7: #{netg_forward.9} parent=0 // loop_footer_branch
    %7 = sbr.rel target = $region3
  $region8: #{netg_forward.9} parent=0 // loop_exit
    _

</llo_original>
